<compile_context>
chip_gen: v7x
topology: tpu7x:2x2x1
jax: 0.10.0
libtpu: 0.0.40
codegen_flags: <defaults>
</compile_context>

<pallas_src>
import jax
import jax.numpy as jnp
from jax.experimental import pallas as pl
from jax.experimental.pallas import tpu as pltpu


# --------------------------------------------------------------------------- #
# Kernel (one batch tile per grid step; whole reduction in-block)
# --------------------------------------------------------------------------- #
def _attention_head_kernel(
    x_ref, wbr_ref, bshift_ref, wc_ref, cshift_ref,
    wg_ref, wv_ref, wd_ref, bg_ref, bv_ref, bd_ref,
    gr_ref, vd_ref, cd_ref,
    l_buf, v_buf,
):
    m = wc_ref.shape[1]

    # Fused branch matmul: one MXU pass covers all three Linear layers.
    x = x_ref[...].astype(jnp.bfloat16)                                   # f32 DMA, VPU cast
    acc = jnp.dot(x, wbr_ref[...], preferred_element_type=jnp.float32)    # (TB, 3M)

    # BN scale is folded into wbr, so the branch epilogue is shift + ReLU.  Park the
    # activations in VMEM as bf16 (the MXU operand dtype) so downstream dots stream
    # from scratch instead of holding (TB, 3M) f32 live in vregs.
    l_buf[...] = jnp.maximum(acc + bshift_ref[...], 0.0).astype(jnp.bfloat16)

    # Conv1d(kernel_size=3) over the length-3 [l1,l2,l3] axis == one (TB,3M)@(3M,M) dot.
    v = jnp.dot(l_buf[...], wc_ref[...], preferred_element_type=jnp.float32)
    v_buf[...] = jnp.maximum(v + cshift_ref[...], 0.0)

    # Output heads: (v + l_i) @ W^T + b, one MXU pass each, slicing l_i out of scratch.
    for i, (w_ref, b_ref, o_ref) in enumerate(
        ((wg_ref, bg_ref, gr_ref), (wv_ref, bv_ref, vd_ref), (wd_ref, bd_ref, cd_ref))
    ):
        h = (v_buf[...] + l_buf[:, pl.ds(i * m, m)]).astype(jnp.bfloat16)
        o_ref[...] = (jnp.dot(h, w_ref[...], preferred_element_type=jnp.float32)
                      + b_ref[...]).astype(o_ref.dtype)


# --------------------------------------------------------------------------- #
# Parameter preparation (done ONCE, not per forward call)
# --------------------------------------------------------------------------- #
def fold_params(raw, eps=1e-5):
    """Fold eval-mode BatchNorm into the weights, merge the three branches into one
    (D_in, 3M) weight, merge the conv kernel into a (3M, M) weight, cast to bf16."""

    def fold_lin_bn(p):
        scale = p["gamma"] * jax.lax.rsqrt(p["var"] + eps)                # [M]
        w_f = (p["w"] * scale[:, None]).T                                 # [D_in, M] f32
        shift = (p["b"] - p["mean"]) * scale + p["beta"]                  # [M]
        return w_f, shift

    w1, s1 = fold_lin_bn(raw["l1"])
    w2, s2 = fold_lin_bn(raw["l2"])
    w3, s3 = fold_lin_bn(raw["l3"])

    wbr = jnp.concatenate([w1, w2, w3], axis=1)                           # [D_in, 3M]
    bshift = jnp.concatenate([s1, s2, s3])[None, :].astype(jnp.float32)   # [1, 3M]

    # Pad the reduction axis to a multiple of 128 (zero rows contribute nothing).
    d_in = wbr.shape[0]
    d_pad = -(-d_in // 128) * 128
    if d_pad != d_in:
        wbr = jnp.pad(wbr, ((0, d_pad - d_in), (0, 0)))
    wbr = wbr.astype(jnp.bfloat16)

    c = raw["cv"]
    out_c, in_c, kk = c["w"].shape
    assert kk == 3
    scale_c = c["gamma"] * jax.lax.rsqrt(c["var"] + eps)                  # [M]
    # conv weight [out, in, 3] -> [3*in, out] so that cat([l1,l2,l3]) @ wc == Conv1d.
    wc = jnp.transpose(c["w"] * scale_c[:, None, None], (2, 1, 0)).reshape(3 * in_c, out_c)
    wc = wc.astype(jnp.bfloat16)
    cshift = ((c["b"] - c["mean"]) * scale_c + c["beta"])[None, :].astype(jnp.float32)

    return dict(
        wbr=wbr, bshift=bshift, wc=wc, cshift=cshift,
        wg=raw["gr"]["w"].T.astype(jnp.bfloat16),
        wv=raw["vd"]["w"].T.astype(jnp.bfloat16),
        wd=raw["cd"]["w"].T.astype(jnp.bfloat16),
        bg=raw["gr"]["b"][None, :].astype(jnp.float32),
        bv=raw["vd"]["b"][None, :].astype(jnp.float32),
        bd=raw["cd"]["b"][None, :].astype(jnp.float32),
    )


# --------------------------------------------------------------------------- #
# Forward wrapper
# --------------------------------------------------------------------------- #
def attention_head_forward(x, fp, *, out_dtype=jnp.float32,
                           vmem_limit_bytes=48 * 1024 * 1024):
    """x: [B, D_in] float32; fp: output of fold_params(). Returns (gr, vd, cd)."""
    B, D_in = x.shape
    Dp, M3 = fp["wbr"].shape
    M = M3 // 3
    Ng, Nv, Nd = fp["wg"].shape[1], fp["wv"].shape[1], fp["wd"].shape[1]

    assert D_in <= Dp, "x feature dim larger than folded weights"
    if D_in < Dp:                                       # zero-padded K columns
        x = jnp.pad(x, ((0, 0), (0, Dp - D_in)))

    # Batch tiling: pad B to at least one full MXU-height tile (128/256 rows) so the
    # systolic array is not fill/drain dominated; keep the tile count even when >1 so
    # the "parallel" batch axis splits evenly across v7x's two TensorCores.
    TB = 256 if B > 256 else 128
    n_tiles = -(-B // TB)
    if TB == 256 and n_tiles > 1 and n_tiles % 2 == 1:
        TB = 128
        n_tiles = -(-B // TB)
    Bp = n_tiles * TB
    if Bp != B:
        x = jnp.pad(x, ((0, Bp - B), (0, 0)))

    def const(*shape):                                  # grid-constant (resident) block
        return pl.BlockSpec(shape, lambda b: (0,) * len(shape))

    gr, vd, cd = pl.pallas_call(
        _attention_head_kernel,
        out_shape=(
            jax.ShapeDtypeStruct((Bp, Ng), out_dtype),
            jax.ShapeDtypeStruct((Bp, Nv), out_dtype),
            jax.ShapeDtypeStruct((Bp, Nd), out_dtype),
        ),
        grid_spec=pltpu.PrefetchScalarGridSpec(
            num_scalar_prefetch=0,
            grid=(Bp // TB,),                           # 1-D grid over batch tiles only
            in_specs=[
                pl.BlockSpec((TB, Dp), lambda b: (b, 0)),   # x tile (f32; cast in kernel)
                const(Dp, M3),                              # merged branch weight
                const(1, M3),                               # merged branch shift
                const(M3, M),                               # merged conv weight
                const(1, M),                                # conv shift
                const(M, Ng), const(M, Nv), const(M, Nd),   # head weights
                const(1, Ng), const(1, Nv), const(1, Nd),   # head biases
            ],
            out_specs=[
                pl.BlockSpec((TB, Ng), lambda b: (b, 0)),
                pl.BlockSpec((TB, Nv), lambda b: (b, 0)),
                pl.BlockSpec((TB, Nd), lambda b: (b, 0)),
            ],
            scratch_shapes=[
                pltpu.VMEM((TB, M3), jnp.bfloat16),     # ReLU'd branch activations
                pltpu.VMEM((TB, M), jnp.float32),       # conv output v
            ],
        ),
        compiler_params=pltpu.CompilerParams(
            dimension_semantics=("parallel",),
            vmem_limit_bytes=vmem_limit_bytes,
        ),
    )(x, fp["wbr"], fp["bshift"], fp["wc"], fp["cshift"],
      fp["wg"], fp["wv"], fp["wd"], fp["bg"], fp["bv"], fp["bd"])

    if Bp != B:                                         # drop zero-padded batch rows
        gr, vd, cd = gr[:B], vd[:B], cd[:B]
    return gr, vd, cd


# --------------------------------------------------------------------------- #
# Pure-JAX reference (f32, mirrors the PyTorch forward in eval mode)
# --------------------------------------------------------------------------- #
def _reference(x, raw, eps=1e-5):
    def lin_bn_relu(x, p):
        z = x @ p["w"].T + p["b"]
        y = p["gamma"] * (z - p["mean"]) / jnp.sqrt(p["var"] + eps) + p["beta"]
        return jnp.maximum(y, 0.0)

    l1 = lin_bn_relu(x, raw["l1"])
    l2 = lin_bn_relu(x, raw["l2"])
    l3 = lin_bn_relu(x, raw["l3"])
    stacked = jnp.stack([l1, l2, l3], axis=2)                               # [B, M, 3]
    c = raw["cv"]
    vpre = jnp.einsum("bik,oik->bo", stacked, c["w"]) + c["b"]              # Conv1d, len 3 -> 1
    y = c["gamma"] * (vpre - c["mean"]) / jnp.sqrt(c["var"] + eps) + c["beta"]
    v = jnp.maximum(y, 0.0)
    gr = (v + l1) @ raw["gr"]["w"].T + raw["gr"]["b"]
    vd = (v + l2) @ raw["vd"]["w"].T + raw["vd"]["b"]
    cd = (v + l3) @ raw["cd"]["w"].T + raw["cd"]["b"]
    return jnp.stack([gr, vd, cd], axis=0)


# --------------------------------------------------------------------------- #
# Demo / self-test
# --------------------------------------------------------------------------- #
if __name__ == "__main__":
    key = jax.random.PRNGKey(0)
    ks = jax.random.split(key, 8)

    # middle_size must be 256 (the module hardcodes Conv1d(256, 256, 3)); head sizes
    # chosen lane-dense (multiples of 128) per the perf review.
    B, D_IN, M = 48, 384, 256
    GR = VD = CD = 128   # conf.gr_size == conf.vd_size == conf.cd_size

    def branch_params(k, d_in, m):
        kw, kb, kg, kbe, km, kv = jax.random.split(k, 6)
        return dict(
            w=jax.random.normal(kw, (m, d_in), jnp.float32) * 0.1,
            b=jax.random.normal(kb, (m,), jnp.float32) * 0.1,
            gamma=1.0 + 0.1 * jax.random.normal(kg, (m,), jnp.float32),
            beta=0.1 * jax.random.normal(kbe, (m,), jnp.float32),
            mean=0.1 * jax.random.normal(km, (m,), jnp.float32),
            var=jnp.abs(jax.random.normal(kv, (m,), jnp.float32)) + 0.5,
        )

    def conv_params(k, m):
        kw, kb, kg, kbe, km, kv = jax.random.split(k, 6)
        return dict(
            w=jax.random.normal(kw, (m, m, 3), jnp.float32) * 0.05,
            b=jax.random.normal(kb, (m,), jnp.float32) * 0.1,
            gamma=1.0 + 0.1 * jax.random.normal(kg, (m,), jnp.float32),
            beta=0.1 * jax.random.normal(kbe, (m,), jnp.float32),
            mean=0.1 * jax.random.normal(km, (m,), jnp.float32),
            var=jnp.abs(jax.random.normal(kv, (m,), jnp.float32)) + 0.5,
        )

    def out_params(k, n, m):
        kw, kb = jax.random.split(k, 2)
        return dict(w=jax.random.normal(kw, (n, m), jnp.float32) * 0.05,
                    b=jax.random.normal(kb, (n,), jnp.float32) * 0.1)

    raw = dict(
        l1=branch_params(ks[0], D_IN, M),
        l2=branch_params(ks[1], D_IN, M),
        l3=branch_params(ks[2], D_IN, M),
        cv=conv_params(ks[3], M),
        gr=out_params(ks[4], GR, M),
        vd=out_params(ks[5], VD, M),
        cd=out_params(ks[6], CD, M),
    )
    x = jax.random.normal(ks[7], (B, D_IN), jnp.float32)

    folded = fold_params(raw)                       # BN folding + weight merging, once.
    fwd = jax.jit(attention_head_forward)

    gr, vd, cd = jax.block_until_ready(fwd(x, folded))

    # TODO(synk): torch returns np.array([gr, vd, cd]) (host); we return a device-side stack.
    result = jnp.stack([gr, vd, cd], axis=0)
    ref = _reference(x, raw)

    assert result.shape == (3, B, GR)
    max_err = float(jnp.max(jnp.abs(result - ref)))
    assert jnp.allclose(result, ref, atol=5e-2, rtol=5e-2), \
        f"mismatch vs reference (max abs err {max_err:.4f})"

    print("KERNEL_OK")
</pallas_src>

<mosaic_0001>
module attributes {stable_mosaic.version = 11 : i64} {
  func.func @_attention_head_kernel(%arg0: i32, %arg1: memref<128x384xf32, #tpu.memory_space<vmem>>, %arg2: memref<384x768xbf16, #tpu.memory_space<vmem>>, %arg3: memref<1x768xf32, #tpu.memory_space<vmem>>, %arg4: memref<768x256xbf16, #tpu.memory_space<vmem>>, %arg5: memref<1x256xf32, #tpu.memory_space<vmem>>, %arg6: memref<256x128xbf16, #tpu.memory_space<vmem>>, %arg7: memref<256x128xbf16, #tpu.memory_space<vmem>>, %arg8: memref<256x128xbf16, #tpu.memory_space<vmem>>, %arg9: memref<1x128xf32, #tpu.memory_space<vmem>>, %arg10: memref<1x128xf32, #tpu.memory_space<vmem>>, %arg11: memref<1x128xf32, #tpu.memory_space<vmem>>, %arg12: memref<128x128xf32, #tpu.memory_space<vmem>>, %arg13: memref<128x128xf32, #tpu.memory_space<vmem>>, %arg14: memref<128x128xf32, #tpu.memory_space<vmem>>, %arg15: memref<128x768xbf16, #tpu.memory_space<vmem>>, %arg16: memref<128x256xf32, #tpu.memory_space<vmem>>) attributes {dimension_semantics = [#tpu.dimension_semantics<parallel>], iteration_bounds = array<i64: 1>, scalar_prefetch = 0 : i64, scratch_operands = 2 : i64, tpu.core_type = #tpu.core_type<tc>, window_params = [{transform_indices = @transform_0, window_bounds = array<i64: 128, 384>}, {pipeline_mode = #tpu.pipeline_mode<synchronous>, transform_indices = @transform_1, window_bounds = array<i64: 384, 768>}, {pipeline_mode = #tpu.pipeline_mode<synchronous>, transform_indices = @transform_2, window_bounds = array<i64: 1, 768>}, {pipeline_mode = #tpu.pipeline_mode<synchronous>, transform_indices = @transform_3, window_bounds = array<i64: 768, 256>}, {pipeline_mode = #tpu.pipeline_mode<synchronous>, transform_indices = @transform_4, window_bounds = array<i64: 1, 256>}, {pipeline_mode = #tpu.pipeline_mode<synchronous>, transform_indices = @transform_5, window_bounds = array<i64: 256, 128>}, {pipeline_mode = #tpu.pipeline_mode<synchronous>, transform_indices = @transform_6, window_bounds = array<i64: 256, 128>}, {pipeline_mode = #tpu.pipeline_mode<synchronous>, transform_indices = @transform_7, window_bounds = array<i64: 256, 128>}, {pipeline_mode = #tpu.pipeline_mode<synchronous>, transform_indices = @transform_8, window_bounds = array<i64: 1, 128>}, {pipeline_mode = #tpu.pipeline_mode<synchronous>, transform_indices = @transform_9, window_bounds = array<i64: 1, 128>}, {pipeline_mode = #tpu.pipeline_mode<synchronous>, transform_indices = @transform_10, window_bounds = array<i64: 1, 128>}, {transform_indices = @transform_11, window_bounds = array<i64: 128, 128>}, {transform_indices = @transform_12, window_bounds = array<i64: 128, 128>}, {transform_indices = @transform_13, window_bounds = array<i64: 128, 128>}]} {
    %c0 = arith.constant 0 : index
    %c0_0 = arith.constant 0 : index
    %0 = vector.load %arg1[%c0, %c0_0] : memref<128x384xf32, #tpu.memory_space<vmem>>, vector<128x384xf32>
    %1 = arith.truncf %0 : vector<128x384xf32> to vector<128x384xbf16>
    %c0_1 = arith.constant 0 : index
    %c0_2 = arith.constant 0 : index
    %2 = vector.load %arg2[%c0_1, %c0_2] : memref<384x768xbf16, #tpu.memory_space<vmem>>, vector<384x768xbf16>
    %cst = arith.constant dense<0.000000e+00> : vector<128x768xf32>
    %3 = tpu.matmul %1, %2, %cst {dimension_numbers = #tpu.dot_dimension_numbers<[1], [0], [0], [1], [0, 0, 1, 1], [], []>} : vector<128x384xbf16>, vector<384x768xbf16>, vector<128x768xf32> -> vector<128x768xf32>
    %c0_3 = arith.constant 0 : index
    %c0_4 = arith.constant 0 : index
    %4 = vector.load %arg3[%c0_3, %c0_4] : memref<1x768xf32, #tpu.memory_space<vmem>>, vector<1x768xf32>
    %5 = vector.broadcast %4 : vector<1x768xf32> to vector<128x768xf32>
    %6 = arith.addf %3, %5 : vector<128x768xf32>
    %cst_5 = arith.constant 0.000000e+00 : f32
    %7 = vector.broadcast %cst_5 : f32 to vector<128x768xf32>
    %8 = arith.maximumf %6, %7 : vector<128x768xf32>
    %9 = arith.truncf %8 : vector<128x768xf32> to vector<128x768xbf16>
    %c0_6 = arith.constant 0 : index
    %c0_7 = arith.constant 0 : index
    %10 = vector.load %arg15[%c0_6, %c0_7] : memref<128x768xbf16, #tpu.memory_space<vmem>>, vector<128x768xbf16>
    tpu.vector_store %arg15[%c0_6, %c0_7], %9 {strides = array<i32>} : memref<128x768xbf16, #tpu.memory_space<vmem>>, vector<128x768xbf16>,
    %c0_8 = arith.constant 0 : index
    %c0_9 = arith.constant 0 : index
    %11 = vector.load %arg15[%c0_8, %c0_9] : memref<128x768xbf16, #tpu.memory_space<vmem>>, vector<128x768xbf16>
    %c0_10 = arith.constant 0 : index
    %c0_11 = arith.constant 0 : index
    %12 = vector.load %arg4[%c0_10, %c0_11] : memref<768x256xbf16, #tpu.memory_space<vmem>>, vector<768x256xbf16>
    %cst_12 = arith.constant dense<0.000000e+00> : vector<128x256xf32>
    %13 = tpu.matmul %11, %12, %cst_12 {dimension_numbers = #tpu.dot_dimension_numbers<[1], [0], [0], [1], [0, 0, 1, 1], [], []>} : vector<128x768xbf16>, vector<768x256xbf16>, vector<128x256xf32> -> vector<128x256xf32>
    %c0_13 = arith.constant 0 : index
    %c0_14 = arith.constant 0 : index
    %14 = vector.load %arg5[%c0_13, %c0_14] : memref<1x256xf32, #tpu.memory_space<vmem>>, vector<1x256xf32>
    %15 = vector.broadcast %14 : vector<1x256xf32> to vector<128x256xf32>
    %16 = arith.addf %13, %15 : vector<128x256xf32>
    %cst_15 = arith.constant 0.000000e+00 : f32
    %17 = vector.broadcast %cst_15 : f32 to vector<128x256xf32>
    %18 = arith.maximumf %16, %17 : vector<128x256xf32>
    %c0_16 = arith.constant 0 : index
    %c0_17 = arith.constant 0 : index
    %19 = vector.load %arg16[%c0_16, %c0_17] : memref<128x256xf32, #tpu.memory_space<vmem>>, vector<128x256xf32>
    tpu.vector_store %arg16[%c0_16, %c0_17], %18 {strides = array<i32>} : memref<128x256xf32, #tpu.memory_space<vmem>>, vector<128x256xf32>,
    %c0_18 = arith.constant 0 : index
    %c0_19 = arith.constant 0 : index
    %20 = vector.load %arg16[%c0_18, %c0_19] : memref<128x256xf32, #tpu.memory_space<vmem>>, vector<128x256xf32>
    %c0_20 = arith.constant 0 : index
    %c0_21 = arith.constant 0 : index
    %21 = vector.load %arg15[%c0_20, %c0_21] : memref<128x768xbf16, #tpu.memory_space<vmem>>, vector<128x256xbf16>
    %22 = arith.extf %21 : vector<128x256xbf16> to vector<128x256xf32>
    %23 = arith.addf %20, %22 : vector<128x256xf32>
    %24 = arith.truncf %23 : vector<128x256xf32> to vector<128x256xbf16>
    %c0_22 = arith.constant 0 : index
    %c0_23 = arith.constant 0 : index
    %25 = vector.load %arg6[%c0_22, %c0_23] : memref<256x128xbf16, #tpu.memory_space<vmem>>, vector<256x128xbf16>
    %cst_24 = arith.constant dense<0.000000e+00> : vector<128x128xf32>
    %26 = tpu.matmul %24, %25, %cst_24 {dimension_numbers = #tpu.dot_dimension_numbers<[1], [0], [0], [1], [0, 0, 1, 1], [], []>} : vector<128x256xbf16>, vector<256x128xbf16>, vector<128x128xf32> -> vector<128x128xf32>
    %c0_25 = arith.constant 0 : index
    %c0_26 = arith.constant 0 : index
    %27 = vector.load %arg9[%c0_25, %c0_26] : memref<1x128xf32, #tpu.memory_space<vmem>>, vector<1x128xf32>
    %28 = vector.broadcast %27 : vector<1x128xf32> to vector<128x128xf32>
    %29 = arith.addf %26, %28 : vector<128x128xf32>
    %c0_27 = arith.constant 0 : index
    %c0_28 = arith.constant 0 : index
    %30 = vector.load %arg12[%c0_27, %c0_28] : memref<128x128xf32, #tpu.memory_space<vmem>>, vector<128x128xf32>
    tpu.vector_store %arg12[%c0_27, %c0_28], %29 {strides = array<i32>} : memref<128x128xf32, #tpu.memory_space<vmem>>, vector<128x128xf32>,
    %c0_29 = arith.constant 0 : index
    %c0_30 = arith.constant 0 : index
    %31 = vector.load %arg16[%c0_29, %c0_30] : memref<128x256xf32, #tpu.memory_space<vmem>>, vector<128x256xf32>
    %c0_31 = arith.constant 0 : index
    %c256 = arith.constant 256 : index
    %32 = vector.load %arg15[%c0_31, %c256] : memref<128x768xbf16, #tpu.memory_space<vmem>>, vector<128x256xbf16>
    %33 = arith.extf %32 : vector<128x256xbf16> to vector<128x256xf32>
    %34 = arith.addf %31, %33 : vector<128x256xf32>
    %35 = arith.truncf %34 : vector<128x256xf32> to vector<128x256xbf16>
    %c0_32 = arith.constant 0 : index
    %c0_33 = arith.constant 0 : index
    %36 = vector.load %arg7[%c0_32, %c0_33] : memref<256x128xbf16, #tpu.memory_space<vmem>>, vector<256x128xbf16>
    %cst_34 = arith.constant dense<0.000000e+00> : vector<128x128xf32>
    %37 = tpu.matmul %35, %36, %cst_34 {dimension_numbers = #tpu.dot_dimension_numbers<[1], [0], [0], [1], [0, 0, 1, 1], [], []>} : vector<128x256xbf16>, vector<256x128xbf16>, vector<128x128xf32> -> vector<128x128xf32>
    %c0_35 = arith.constant 0 : index
    %c0_36 = arith.constant 0 : index
    %38 = vector.load %arg10[%c0_35, %c0_36] : memref<1x128xf32, #tpu.memory_space<vmem>>, vector<1x128xf32>
    %39 = vector.broadcast %38 : vector<1x128xf32> to vector<128x128xf32>
    %40 = arith.addf %37, %39 : vector<128x128xf32>
    %c0_37 = arith.constant 0 : index
    %c0_38 = arith.constant 0 : index
    %41 = vector.load %arg13[%c0_37, %c0_38] : memref<128x128xf32, #tpu.memory_space<vmem>>, vector<128x128xf32>
    tpu.vector_store %arg13[%c0_37, %c0_38], %40 {strides = array<i32>} : memref<128x128xf32, #tpu.memory_space<vmem>>, vector<128x128xf32>,
    %c0_39 = arith.constant 0 : index
    %c0_40 = arith.constant 0 : index
    %42 = vector.load %arg16[%c0_39, %c0_40] : memref<128x256xf32, #tpu.memory_space<vmem>>, vector<128x256xf32>
    %c0_41 = arith.constant 0 : index
    %c512 = arith.constant 512 : index
    %43 = vector.load %arg15[%c0_41, %c512] : memref<128x768xbf16, #tpu.memory_space<vmem>>, vector<128x256xbf16>
    %44 = arith.extf %43 : vector<128x256xbf16> to vector<128x256xf32>
    %45 = arith.addf %42, %44 : vector<128x256xf32>
    %46 = arith.truncf %45 : vector<128x256xf32> to vector<128x256xbf16>
    %c0_42 = arith.constant 0 : index
    %c0_43 = arith.constant 0 : index
    %47 = vector.load %arg8[%c0_42, %c0_43] : memref<256x128xbf16, #tpu.memory_space<vmem>>, vector<256x128xbf16>
    %cst_44 = arith.constant dense<0.000000e+00> : vector<128x128xf32>
    %48 = tpu.matmul %46, %47, %cst_44 {dimension_numbers = #tpu.dot_dimension_numbers<[1], [0], [0], [1], [0, 0, 1, 1], [], []>} : vector<128x256xbf16>, vector<256x128xbf16>, vector<128x128xf32> -> vector<128x128xf32>
    %c0_45 = arith.constant 0 : index
    %c0_46 = arith.constant 0 : index
    %49 = vector.load %arg11[%c0_45, %c0_46] : memref<1x128xf32, #tpu.memory_space<vmem>>, vector<1x128xf32>
    %50 = vector.broadcast %49 : vector<1x128xf32> to vector<128x128xf32>
    %51 = arith.addf %48, %50 : vector<128x128xf32>
    %c0_47 = arith.constant 0 : index
    %c0_48 = arith.constant 0 : index
    %52 = vector.load %arg14[%c0_47, %c0_48] : memref<128x128xf32, #tpu.memory_space<vmem>>, vector<128x128xf32>
    tpu.vector_store %arg14[%c0_47, %c0_48], %51 {strides = array<i32>} : memref<128x128xf32, #tpu.memory_space<vmem>>, vector<128x128xf32>,
    return
  }
  func.func @transform_0(%arg0: i32) -> (i32, i32) {
    %c0_i32 = arith.constant 0 : i32
    %c0_i32_0 = arith.constant 0 : i32
    return %arg0, %c0_i32 : i32, i32
  }
  func.func @transform_1(%arg0: i32) -> (i32, i32) {
    %c0_i32 = arith.constant 0 : i32
    %c0_i32_0 = arith.constant 0 : i32
    %c0_i32_1 = arith.constant 0 : i32
    return %c0_i32, %c0_i32_0 : i32, i32
  }
  func.func @transform_2(%arg0: i32) -> (i32, i32) {
    %c0_i32 = arith.constant 0 : i32
    %c0_i32_0 = arith.constant 0 : i32
    %c0_i32_1 = arith.constant 0 : i32
    return %c0_i32, %c0_i32_0 : i32, i32
  }
  func.func @transform_3(%arg0: i32) -> (i32, i32) {
    %c0_i32 = arith.constant 0 : i32
    %c0_i32_0 = arith.constant 0 : i32
    %c0_i32_1 = arith.constant 0 : i32
    return %c0_i32, %c0_i32_0 : i32, i32
  }
  func.func @transform_4(%arg0: i32) -> (i32, i32) {
    %c0_i32 = arith.constant 0 : i32
    %c0_i32_0 = arith.constant 0 : i32
    %c0_i32_1 = arith.constant 0 : i32
    return %c0_i32, %c0_i32_0 : i32, i32
  }
  func.func @transform_5(%arg0: i32) -> (i32, i32) {
    %c0_i32 = arith.constant 0 : i32
    %c0_i32_0 = arith.constant 0 : i32
    %c0_i32_1 = arith.constant 0 : i32
    return %c0_i32, %c0_i32_0 : i32, i32
  }
  func.func @transform_6(%arg0: i32) -> (i32, i32) {
    %c0_i32 = arith.constant 0 : i32
    %c0_i32_0 = arith.constant 0 : i32
    %c0_i32_1 = arith.constant 0 : i32
    return %c0_i32, %c0_i32_0 : i32, i32
  }
  func.func @transform_7(%arg0: i32) -> (i32, i32) {
    %c0_i32 = arith.constant 0 : i32
    %c0_i32_0 = arith.constant 0 : i32
    %c0_i32_1 = arith.constant 0 : i32
    return %c0_i32, %c0_i32_0 : i32, i32
  }
  func.func @transform_8(%arg0: i32) -> (i32, i32) {
    %c0_i32 = arith.constant 0 : i32
    %c0_i32_0 = arith.constant 0 : i32
    %c0_i32_1 = arith.constant 0 : i32
    return %c0_i32, %c0_i32_0 : i32, i32
  }
  func.func @transform_9(%arg0: i32) -> (i32, i32) {
    %c0_i32 = arith.constant 0 : i32
    %c0_i32_0 = arith.constant 0 : i32
    %c0_i32_1 = arith.constant 0 : i32
    return %c0_i32, %c0_i32_0 : i32, i32
  }
  func.func @transform_10(%arg0: i32) -> (i32, i32) {
    %c0_i32 = arith.constant 0 : i32
    %c0_i32_0 = arith.constant 0 : i32
    %c0_i32_1 = arith.constant 0 : i32
    return %c0_i32, %c0_i32_0 : i32, i32
  }
  func.func @transform_11(%arg0: i32) -> (i32, i32) {
    %c0_i32 = arith.constant 0 : i32
    %c0_i32_0 = arith.constant 0 : i32
    return %arg0, %c0_i32 : i32, i32
  }
  func.func @transform_12(%arg0: i32) -> (i32, i32) {
    %c0_i32 = arith.constant 0 : i32
    %c0_i32_0 = arith.constant 0 : i32
    return %arg0, %c0_i32 : i32, i32
  }
  func.func @transform_13(%arg0: i32) -> (i32, i32) {
    %c0_i32 = arith.constant 0 : i32
    %c0_i32_0 = arith.constant 0 : i32
    return %arg0, %c0_i32 : i32, i32
  }
}

</mosaic_0001>

<llo_original>
// kernel: attention_head_forward.1
$region0: #{attention_head_forward.1}
  #allocation0 [shape = 'u32[]', space=smem, size = 0x4, offset = 0x4, fixed_abs, tag = 'smem constant byte address 0x4 - core index']
  #allocation1 [shape = 'u32[144,128]{1,0:T(1,128)}', space=vmem, size = 0x12000, scoped, tag = 'internal scratch']
  #allocation2 [shape = 'bf16[128,768]{1,0:T(16,128)(2,1)}', space=vmem, size = 0x30000, scoped, tag = 'scratch operand']
  #allocation3 [shape = 'f32[128,256]{1,0:T(8,128)}', space=vmem, size = 0x20000, scoped, tag = 'scratch operand']
  %s0 = inlined_call_operand.vmem [shape: f32[128,384], index: 0, kind: input, shape index: {}]
  %s1 = inlined_call_operand.hbm [shape: bf16[384,768], index: 1, kind: input, shape index: {}]
  %s2 = inlined_call_operand.vmem [shape: f32[1,768], index: 2, kind: input, shape index: {}]
  %s3 = inlined_call_operand.hbm [shape: bf16[768,256], index: 3, kind: input, shape index: {}]
  %s4 = inlined_call_operand.vmem [shape: f32[1,256], index: 4, kind: input, shape index: {}]
  %s5 = inlined_call_operand.vmem [shape: bf16[256,128], index: 5, kind: input, shape index: {}]
  %s6 = inlined_call_operand.vmem [shape: bf16[256,128], index: 6, kind: input, shape index: {}]
  %s7 = inlined_call_operand.vmem [shape: bf16[256,128], index: 7, kind: input, shape index: {}]
  %s8 = inlined_call_operand.vmem [shape: f32[1,128], index: 8, kind: input, shape index: {}]
  %s9 = inlined_call_operand.vmem [shape: f32[1,128], index: 9, kind: input, shape index: {}]
  %s10 = inlined_call_operand.vmem [shape: f32[1,128], index: 10, kind: input, shape index: {}]
  %s11 = inlined_call_operand.vmem [shape: f32[128,128], index: 11, kind: output, shape index: {0}]
  %s12 = inlined_call_operand.vmem [shape: f32[128,128], index: 12, kind: output, shape index: {1}]
  %s13 = inlined_call_operand.vmem [shape: f32[128,128], index: 13, kind: output, shape index: {2}]
  %14 = xla_tuple %s11, %s12, %s13
  %s15 = sld [smem:[#allocation0]]
  $region78: #{attention_head_forward.1} parent=0
    _
  %s17 = ssub.s32 1, %s15
  %s18 = scalar_select 0, %s17, %s15
  $region1: #{attention_head_forward.1} parent=0
    #allocation4 [shape = 'u8[589824]{0}', space=vmem, size = 0x90000, scoped, tag = 'input window, operand 1, single buffered']
    #allocation5 [shape = 's32[1]{0}', space=sflag, size = 0x4, scoped, tag = 'scoped memory for attention_head_forward.1']
    #allocation6 [shape = 'u8[393216]{0}', space=vmem, size = 0x60000, scoped, tag = 'input window, operand 3, single buffered']
    #allocation7 [shape = 's32[1]{0}', space=sflag, size = 0x4, scoped, tag = 'scoped memory for attention_head_forward.1']
    %19 = vsyncpa [#allocation5], 0
    %20 = vsyncpa [#allocation7], 0
    // Predicated region
    $region2: #{attention_head_forward.1} parent=1 // pred_check
      _
    $region3: #{attention_head_forward.1} parent=1 // pred_check_branch
      %22 = sbr.rel (0) target = $region5
    $region4: #{attention_head_forward.1} parent=1 // pred_region
      _
    $region5: #{attention_head_forward.1} parent=1 // pred_fallthru
      _
    // Predicated region
    $region6: #{attention_head_forward.1} parent=1 // pred_check
      _
    $region7: #{attention_head_forward.1} parent=1 // pred_check_branch
      %24 = sbr.rel (0) target = $region9
    $region8: #{attention_head_forward.1} parent=1 // pred_region
      %s26 = ssub.s32 18432, 18432
      %27 = vsyncadd [#allocation5], %s26
      %s28 = sshll.u32 [#allocation4], 4
      %s29 = int_to_ptr.vmem [resolvable:$true] %s28
      %34 = dma.hbm_to_vmem [thread:$0]  %s1, 18432, %s29, [#allocation5], 384, 384, 24
    $region9: #{attention_head_forward.1} parent=1 // pred_fallthru
      _
    // Predicated region
    $region10: #{attention_head_forward.1} parent=1 // pred_check
      _
    $region11: #{attention_head_forward.1} parent=1 // pred_check_branch
      %36 = sbr.rel (0) target = $region13
    $region12: #{attention_head_forward.1} parent=1 // pred_region
      _
    $region13: #{attention_head_forward.1} parent=1 // pred_fallthru
      _
    // Predicated region
    $region14: #{attention_head_forward.1} parent=1 // pred_check
      _
    $region15: #{attention_head_forward.1} parent=1 // pred_check_branch
      %38 = sbr.rel (0) target = $region17
    $region16: #{attention_head_forward.1} parent=1 // pred_region
      %s40 = ssub.s32 12288, 12288
      %41 = vsyncadd [#allocation7], %s40
      %s42 = sshll.u32 [#allocation6], 4
      %s43 = int_to_ptr.vmem [resolvable:$true] %s42
      %48 = dma.hbm_to_vmem [thread:$0]  %s3, 12288, %s43, [#allocation7], 128, 128, 8
    $region17: #{attention_head_forward.1} parent=1 // pred_fallthru
      _
    // Predicated region
    $region18: #{attention_head_forward.1} parent=1 // pred_check
      _
    $region19: #{attention_head_forward.1} parent=1 // pred_check_branch
      %50 = sbr.rel (0) target = $region21
    $region20: #{attention_head_forward.1} parent=1 // pred_region
      _
    $region21: #{attention_head_forward.1} parent=1 // pred_fallthru
      _
    // Predicated region
    $region22: #{attention_head_forward.1} parent=1 // pred_check
      _
    $region23: #{attention_head_forward.1} parent=1 // pred_check_branch
      %52 = sbr.rel (0) target = $region25
    $region24: #{attention_head_forward.1} parent=1 // pred_region
      _
    $region25: #{attention_head_forward.1} parent=1 // pred_fallthru
      _
    // Predicated region
    $region26: #{attention_head_forward.1} parent=1 // pred_check
      _
    $region27: #{attention_head_forward.1} parent=1 // pred_check_branch
      %54 = sbr.rel (0) target = $region29
    $region28: #{attention_head_forward.1} parent=1 // pred_region
      _
    $region29: #{attention_head_forward.1} parent=1 // pred_fallthru
      _
    // Predicated region
    $region30: #{attention_head_forward.1} parent=1 // pred_check
      _
    $region31: #{attention_head_forward.1} parent=1 // pred_check_branch
      %56 = sbr.rel (0) target = $region33
    $region32: #{attention_head_forward.1} parent=1 // pred_region
      _
    $region33: #{attention_head_forward.1} parent=1 // pred_fallthru
      _
    // Predicated region
    $region34: #{attention_head_forward.1} parent=1 // pred_check
      _
    $region35: #{attention_head_forward.1} parent=1 // pred_check_branch
      %58 = sbr.rel (0) target = $region37
    $region36: #{attention_head_forward.1} parent=1 // pred_region
      _
    $region37: #{attention_head_forward.1} parent=1 // pred_fallthru
      _
    // Predicated region
    $region38: #{attention_head_forward.1} parent=1 // pred_check
      _
    $region39: #{attention_head_forward.1} parent=1 // pred_check_branch
      %60 = sbr.rel (0) target = $region41
    $region40: #{attention_head_forward.1} parent=1 // pred_region
      _
    $region41: #{attention_head_forward.1} parent=1 // pred_fallthru
      _
    // Predicated region
    $region42: #{attention_head_forward.1} parent=1 // pred_check
      _
    $region43: #{attention_head_forward.1} parent=1 // pred_check_branch
      %62 = sbr.rel (0) target = $region45
    $region44: #{attention_head_forward.1} parent=1 // pred_region
      _
    $region45: #{attention_head_forward.1} parent=1 // pred_fallthru
      _
    // Predicated region
    $region46: #{attention_head_forward.1} parent=1 // pred_check
      _
    $region47: #{attention_head_forward.1} parent=1 // pred_check_branch
      %64 = sbr.rel (0) target = $region49
    $region48: #{attention_head_forward.1} parent=1 // pred_region
      %65 = dma.done [#allocation5], 18432
    $region49: #{attention_head_forward.1} parent=1 // pred_fallthru
      _
    // Predicated region
    $region50: #{attention_head_forward.1} parent=1 // pred_check
      _
    $region51: #{attention_head_forward.1} parent=1 // pred_check_branch
      %67 = sbr.rel (0) target = $region53
    $region52: #{attention_head_forward.1} parent=1 // pred_region
      %68 = dma.done [#allocation7], 12288
    $region53: #{attention_head_forward.1} parent=1 // pred_fallthru
      _
    %v70 = vld [vmem:[%s0] sm:$0xff]
    %v71 = vld [vmem:[%s0 + $0x8] sm:$0xff]
    %v72 = vld [vmem:[%s0 + $0x10] sm:$0xff]
    %v73 = vld [vmem:[%s0 + $0x18] sm:$0xff]
    %v74 = vld [vmem:[%s0 + $0x20] sm:$0xff]
    %v75 = vld [vmem:[%s0 + $0x28] sm:$0xff]
    %v76 = vld [vmem:[%s0 + $0x30] sm:$0xff]
    %v77 = vld [vmem:[%s0 + $0x38] sm:$0xff]
    %v78 = vld [vmem:[%s0 + $0x40] sm:$0xff]
    %v79 = vld [vmem:[%s0 + $0x48] sm:$0xff]
    %v80 = vld [vmem:[%s0 + $0x50] sm:$0xff]
    %v81 = vld [vmem:[%s0 + $0x58] sm:$0xff]
    %v82 = vld [vmem:[%s0 + $0x60] sm:$0xff]
    %v83 = vld [vmem:[%s0 + $0x68] sm:$0xff]
    %v84 = vld [vmem:[%s0 + $0x70] sm:$0xff]
    %v85 = vld [vmem:[%s0 + $0x78] sm:$0xff]
    %v86 = vld [vmem:[%s0 + $0x80] sm:$0xff]
    %v87 = vld [vmem:[%s0 + $0x88] sm:$0xff]
    %v88 = vld [vmem:[%s0 + $0x90] sm:$0xff]
    %v89 = vld [vmem:[%s0 + $0x98] sm:$0xff]
    %v90 = vld [vmem:[%s0 + $0xa0] sm:$0xff]
    %v91 = vld [vmem:[%s0 + $0xa8] sm:$0xff]
    %v92 = vld [vmem:[%s0 + $0xb0] sm:$0xff]
    %v93 = vld [vmem:[%s0 + $0xb8] sm:$0xff]
    %v94 = vld [vmem:[%s0 + $0xc0] sm:$0xff]
    %v95 = vld [vmem:[%s0 + $0xc8] sm:$0xff]
    %v96 = vld [vmem:[%s0 + $0xd0] sm:$0xff]
    %v97 = vld [vmem:[%s0 + $0xd8] sm:$0xff]
    %v98 = vld [vmem:[%s0 + $0xe0] sm:$0xff]
    %v99 = vld [vmem:[%s0 + $0xe8] sm:$0xff]
    %v100 = vld [vmem:[%s0 + $0xf0] sm:$0xff]
    %v101 = vld [vmem:[%s0 + $0xf8] sm:$0xff]
    %v102 = vld [vmem:[%s0 + $0x100] sm:$0xff]
    %v103 = vld [vmem:[%s0 + $0x108] sm:$0xff]
    %v104 = vld [vmem:[%s0 + $0x110] sm:$0xff]
    %v105 = vld [vmem:[%s0 + $0x118] sm:$0xff]
    %v106 = vld [vmem:[%s0 + $0x120] sm:$0xff]
    %v107 = vld [vmem:[%s0 + $0x128] sm:$0xff]
    %v108 = vld [vmem:[%s0 + $0x130] sm:$0xff]
    %v109 = vld [vmem:[%s0 + $0x138] sm:$0xff]
    %v110 = vld [vmem:[%s0 + $0x140] sm:$0xff]
    %v111 = vld [vmem:[%s0 + $0x148] sm:$0xff]
    %v112 = vld [vmem:[%s0 + $0x150] sm:$0xff]
    %v113 = vld [vmem:[%s0 + $0x158] sm:$0xff]
    %v114 = vld [vmem:[%s0 + $0x160] sm:$0xff]
    %v115 = vld [vmem:[%s0 + $0x168] sm:$0xff]
    %v116 = vld [vmem:[%s0 + $0x170] sm:$0xff]
    %v117 = vld [vmem:[%s0 + $0x178] sm:$0xff]
    %v118 = vpack.c.bf16 %v73, %v70
    %v119 = vpack.c.bf16 %v74, %v71
    %v120 = vpack.c.bf16 %v75, %v72
    %v121 = vpack.c.bf16 %v79, %v76
    %v122 = vpack.c.bf16 %v80, %v77
    %v123 = vpack.c.bf16 %v81, %v78
    %v124 = vpack.c.bf16 %v85, %v82
    %v125 = vpack.c.bf16 %v86, %v83
    %v126 = vpack.c.bf16 %v87, %v84
    %v127 = vpack.c.bf16 %v91, %v88
    %v128 = vpack.c.bf16 %v92, %v89
    %v129 = vpack.c.bf16 %v93, %v90
    %v130 = vpack.c.bf16 %v97, %v94
    %v131 = vpack.c.bf16 %v98, %v95
    %v132 = vpack.c.bf16 %v99, %v96
    %v133 = vpack.c.bf16 %v103, %v100
    %v134 = vpack.c.bf16 %v104, %v101
    %v135 = vpack.c.bf16 %v105, %v102
    %v136 = vpack.c.bf16 %v109, %v106
    %v137 = vpack.c.bf16 %v110, %v107
    %v138 = vpack.c.bf16 %v111, %v108
    %v139 = vpack.c.bf16 %v115, %v112
    %v140 = vpack.c.bf16 %v116, %v113
    %v141 = vpack.c.bf16 %v117, %v114
    %v142 = vld [vmem:[#allocation4] sm:$0xff]
    %v143 = vld [vmem:[#allocation4 + $0x8] sm:$0xff]
    %v144 = vld [vmem:[#allocation4 + $0x10] sm:$0xff]
    %v145 = vld [vmem:[#allocation4 + $0x18] sm:$0xff]
    %v146 = vld [vmem:[#allocation4 + $0x20] sm:$0xff]
    %v147 = vld [vmem:[#allocation4 + $0x28] sm:$0xff]
    %v148 = vld [vmem:[#allocation4 + $0x30] sm:$0xff]
    %v149 = vld [vmem:[#allocation4 + $0x38] sm:$0xff]
    %v150 = vld [vmem:[#allocation4 + $0x40] sm:$0xff]
    %v151 = vld [vmem:[#allocation4 + $0x48] sm:$0xff]
    %v152 = vld [vmem:[#allocation4 + $0x50] sm:$0xff]
    %v153 = vld [vmem:[#allocation4 + $0x58] sm:$0xff]
    %v154 = vld [vmem:[#allocation4 + $0x60] sm:$0xff]
    %v155 = vld [vmem:[#allocation4 + $0x68] sm:$0xff]
    %v156 = vld [vmem:[#allocation4 + $0x70] sm:$0xff]
    %v157 = vld [vmem:[#allocation4 + $0x78] sm:$0xff]
    %v158 = vld [vmem:[#allocation4 + $0x80] sm:$0xff]
    %v159 = vld [vmem:[#allocation4 + $0x88] sm:$0xff]
    %v160 = vld [vmem:[#allocation4 + $0x90] sm:$0xff]
    %v161 = vld [vmem:[#allocation4 + $0x98] sm:$0xff]
    %v162 = vld [vmem:[#allocation4 + $0xa0] sm:$0xff]
    %v163 = vld [vmem:[#allocation4 + $0xa8] sm:$0xff]
    %v164 = vld [vmem:[#allocation4 + $0xb0] sm:$0xff]
    %v165 = vld [vmem:[#allocation4 + $0xb8] sm:$0xff]
    %v166 = vld [vmem:[#allocation4 + $0xc0] sm:$0xff]
    %v167 = vld [vmem:[#allocation4 + $0xc8] sm:$0xff]
    %v168 = vld [vmem:[#allocation4 + $0xd0] sm:$0xff]
    %v169 = vld [vmem:[#allocation4 + $0xd8] sm:$0xff]
    %v170 = vld [vmem:[#allocation4 + $0xe0] sm:$0xff]
    %v171 = vld [vmem:[#allocation4 + $0xe8] sm:$0xff]
    %v172 = vld [vmem:[#allocation4 + $0xf0] sm:$0xff]
    %v173 = vld [vmem:[#allocation4 + $0xf8] sm:$0xff]
    %v174 = vld [vmem:[#allocation4 + $0x100] sm:$0xff]
    %v175 = vld [vmem:[#allocation4 + $0x108] sm:$0xff]
    %v176 = vld [vmem:[#allocation4 + $0x110] sm:$0xff]
    %v177 = vld [vmem:[#allocation4 + $0x118] sm:$0xff]
    %v178 = vld [vmem:[#allocation4 + $0x120] sm:$0xff]
    %v179 = vld [vmem:[#allocation4 + $0x128] sm:$0xff]
    %v180 = vld [vmem:[#allocation4 + $0x130] sm:$0xff]
    %v181 = vld [vmem:[#allocation4 + $0x138] sm:$0xff]
    %v182 = vld [vmem:[#allocation4 + $0x140] sm:$0xff]
    %v183 = vld [vmem:[#allocation4 + $0x148] sm:$0xff]
    %v184 = vld [vmem:[#allocation4 + $0x150] sm:$0xff]
    %v185 = vld [vmem:[#allocation4 + $0x158] sm:$0xff]
    %v186 = vld [vmem:[#allocation4 + $0x160] sm:$0xff]
    %v187 = vld [vmem:[#allocation4 + $0x168] sm:$0xff]
    %v188 = vld [vmem:[#allocation4 + $0x170] sm:$0xff]
    %v189 = vld [vmem:[#allocation4 + $0x178] sm:$0xff]
    %v190 = vld [vmem:[#allocation4 + $0x180] sm:$0xff]
    %v191 = vld [vmem:[#allocation4 + $0x188] sm:$0xff]
    %v192 = vld [vmem:[#allocation4 + $0x190] sm:$0xff]
    %v193 = vld [vmem:[#allocation4 + $0x198] sm:$0xff]
    %v194 = vld [vmem:[#allocation4 + $0x1a0] sm:$0xff]
    %v195 = vld [vmem:[#allocation4 + $0x1a8] sm:$0xff]
    %v196 = vld [vmem:[#allocation4 + $0x1b0] sm:$0xff]
    %v197 = vld [vmem:[#allocation4 + $0x1b8] sm:$0xff]
    %v198 = vld [vmem:[#allocation4 + $0x1c0] sm:$0xff]
    %v199 = vld [vmem:[#allocation4 + $0x1c8] sm:$0xff]
    %v200 = vld [vmem:[#allocation4 + $0x1d0] sm:$0xff]
    %v201 = vld [vmem:[#allocation4 + $0x1d8] sm:$0xff]
    %v202 = vld [vmem:[#allocation4 + $0x1e0] sm:$0xff]
    %v203 = vld [vmem:[#allocation4 + $0x1e8] sm:$0xff]
    %v204 = vld [vmem:[#allocation4 + $0x1f0] sm:$0xff]
    %v205 = vld [vmem:[#allocation4 + $0x1f8] sm:$0xff]
    %v206 = vld [vmem:[#allocation4 + $0x200] sm:$0xff]
    %v207 = vld [vmem:[#allocation4 + $0x208] sm:$0xff]
    %v208 = vld [vmem:[#allocation4 + $0x210] sm:$0xff]
    %v209 = vld [vmem:[#allocation4 + $0x218] sm:$0xff]
    %v210 = vld [vmem:[#allocation4 + $0x220] sm:$0xff]
    %v211 = vld [vmem:[#allocation4 + $0x228] sm:$0xff]
    %v212 = vld [vmem:[#allocation4 + $0x230] sm:$0xff]
    %v213 = vld [vmem:[#allocation4 + $0x238] sm:$0xff]
    %v214 = vld [vmem:[#allocation4 + $0x240] sm:$0xff]
    %v215 = vld [vmem:[#allocation4 + $0x248] sm:$0xff]
    %v216 = vld [vmem:[#allocation4 + $0x250] sm:$0xff]
    %v217 = vld [vmem:[#allocation4 + $0x258] sm:$0xff]
    %v218 = vld [vmem:[#allocation4 + $0x260] sm:$0xff]
    %v219 = vld [vmem:[#allocation4 + $0x268] sm:$0xff]
    %v220 = vld [vmem:[#allocation4 + $0x270] sm:$0xff]
    %v221 = vld [vmem:[#allocation4 + $0x278] sm:$0xff]
    %v222 = vld [vmem:[#allocation4 + $0x280] sm:$0xff]
    %v223 = vld [vmem:[#allocation4 + $0x288] sm:$0xff]
    %v224 = vld [vmem:[#allocation4 + $0x290] sm:$0xff]
    %v225 = vld [vmem:[#allocation4 + $0x298] sm:$0xff]
    %v226 = vld [vmem:[#allocation4 + $0x2a0] sm:$0xff]
    %v227 = vld [vmem:[#allocation4 + $0x2a8] sm:$0xff]
    %v228 = vld [vmem:[#allocation4 + $0x2b0] sm:$0xff]
    %v229 = vld [vmem:[#allocation4 + $0x2b8] sm:$0xff]
    %v230 = vld [vmem:[#allocation4 + $0x2c0] sm:$0xff]
    %v231 = vld [vmem:[#allocation4 + $0x2c8] sm:$0xff]
    %v232 = vld [vmem:[#allocation4 + $0x2d0] sm:$0xff]
    %v233 = vld [vmem:[#allocation4 + $0x2d8] sm:$0xff]
    %v234 = vld [vmem:[#allocation4 + $0x2e0] sm:$0xff]
    %v235 = vld [vmem:[#allocation4 + $0x2e8] sm:$0xff]
    %v236 = vld [vmem:[#allocation4 + $0x2f0] sm:$0xff]
    %v237 = vld [vmem:[#allocation4 + $0x2f8] sm:$0xff]
    %v238 = vld [vmem:[#allocation4 + $0x300] sm:$0xff]
    %v239 = vld [vmem:[#allocation4 + $0x308] sm:$0xff]
    %v240 = vld [vmem:[#allocation4 + $0x310] sm:$0xff]
    %v241 = vld [vmem:[#allocation4 + $0x318] sm:$0xff]
    %v242 = vld [vmem:[#allocation4 + $0x320] sm:$0xff]
    %v243 = vld [vmem:[#allocation4 + $0x328] sm:$0xff]
    %v244 = vld [vmem:[#allocation4 + $0x330] sm:$0xff]
    %v245 = vld [vmem:[#allocation4 + $0x338] sm:$0xff]
    %v246 = vld [vmem:[#allocation4 + $0x340] sm:$0xff]
    %v247 = vld [vmem:[#allocation4 + $0x348] sm:$0xff]
    %v248 = vld [vmem:[#allocation4 + $0x350] sm:$0xff]
    %v249 = vld [vmem:[#allocation4 + $0x358] sm:$0xff]
    %v250 = vld [vmem:[#allocation4 + $0x360] sm:$0xff]
    %v251 = vld [vmem:[#allocation4 + $0x368] sm:$0xff]
    %v252 = vld [vmem:[#allocation4 + $0x370] sm:$0xff]
    %v253 = vld [vmem:[#allocation4 + $0x378] sm:$0xff]
    %v254 = vld [vmem:[#allocation4 + $0x380] sm:$0xff]
    %v255 = vld [vmem:[#allocation4 + $0x388] sm:$0xff]
    %v256 = vld [vmem:[#allocation4 + $0x390] sm:$0xff]
    %v257 = vld [vmem:[#allocation4 + $0x398] sm:$0xff]
    %v258 = vld [vmem:[#allocation4 + $0x3a0] sm:$0xff]
    %v259 = vld [vmem:[#allocation4 + $0x3a8] sm:$0xff]
    %v260 = vld [vmem:[#allocation4 + $0x3b0] sm:$0xff]
    %v261 = vld [vmem:[#allocation4 + $0x3b8] sm:$0xff]
    %v262 = vld [vmem:[#allocation4 + $0x3c0] sm:$0xff]
    %v263 = vld [vmem:[#allocation4 + $0x3c8] sm:$0xff]
    %v264 = vld [vmem:[#allocation4 + $0x3d0] sm:$0xff]
    %v265 = vld [vmem:[#allocation4 + $0x3d8] sm:$0xff]
    %v266 = vld [vmem:[#allocation4 + $0x3e0] sm:$0xff]
    %v267 = vld [vmem:[#allocation4 + $0x3e8] sm:$0xff]
    %v268 = vld [vmem:[#allocation4 + $0x3f0] sm:$0xff]
    %v269 = vld [vmem:[#allocation4 + $0x3f8] sm:$0xff]
    %v270 = vld [vmem:[#allocation4 + $0x400] sm:$0xff]
    %v271 = vld [vmem:[#allocation4 + $0x408] sm:$0xff]
    %v272 = vld [vmem:[#allocation4 + $0x410] sm:$0xff]
    %v273 = vld [vmem:[#allocation4 + $0x418] sm:$0xff]
    %v274 = vld [vmem:[#allocation4 + $0x420] sm:$0xff]
    %v275 = vld [vmem:[#allocation4 + $0x428] sm:$0xff]
    %v276 = vld [vmem:[#allocation4 + $0x430] sm:$0xff]
    %v277 = vld [vmem:[#allocation4 + $0x438] sm:$0xff]
    %v278 = vld [vmem:[#allocation4 + $0x440] sm:$0xff]
    %v279 = vld [vmem:[#allocation4 + $0x448] sm:$0xff]
    %v280 = vld [vmem:[#allocation4 + $0x450] sm:$0xff]
    %v281 = vld [vmem:[#allocation4 + $0x458] sm:$0xff]
    %v282 = vld [vmem:[#allocation4 + $0x460] sm:$0xff]
    %v283 = vld [vmem:[#allocation4 + $0x468] sm:$0xff]
    %v284 = vld [vmem:[#allocation4 + $0x470] sm:$0xff]
    %v285 = vld [vmem:[#allocation4 + $0x478] sm:$0xff]
    %v286 = vld [vmem:[%s2] sm:$0x3f]
    %v288 = vlaneseq
    %v289 = vshrl.u32 %v288, 7
    %v290 = vsub.s32 0, %v289
    %v291 = vrot.slane %v286, %v290
    %v292 = vlaneseq
    %v293 = vshrl.u32 %v292, 7
    %v294 = vsub.s32 1, %v293
    %v295 = vrot.slane %v286, %v294
    %v296 = vlaneseq
    %v297 = vshrl.u32 %v296, 7
    %v298 = vsub.s32 2, %v297
    %v299 = vrot.slane %v286, %v298
    %v300 = vlaneseq
    %v301 = vshrl.u32 %v300, 7
    %v302 = vsub.s32 3, %v301
    %v303 = vrot.slane %v286, %v302
    %v304 = vlaneseq
    %v305 = vshrl.u32 %v304, 7
    %v306 = vsub.s32 4, %v305
    %v307 = vrot.slane %v286, %v306
    %v308 = vlaneseq
    %v309 = vshrl.u32 %v308, 7
    %v310 = vsub.s32 5, %v309
    %v311 = vrot.slane %v286, %v310
    %v462 = vunpack.c.l.b16 %v142
    %v463 = vunpack.c.h.b16 %v142
    %v464 = vunpack.c.l.b16 %v143
    %v465 = vunpack.c.h.b16 %v143
    %v466 = vunpack.c.l.b16 %v144
    %v467 = vunpack.c.h.b16 %v144
    %v468 = vunpack.c.l.b16 %v145
    %v469 = vunpack.c.h.b16 %v145
    %v470 = vunpack.c.l.b16 %v146
    %v471 = vunpack.c.h.b16 %v146
    %v472 = vunpack.c.l.b16 %v147
    %v473 = vunpack.c.h.b16 %v147
    %v474 = vunpack.c.l.b16 %v148
    %v475 = vunpack.c.h.b16 %v148
    %v476 = vunpack.c.l.b16 %v149
    %v477 = vunpack.c.h.b16 %v149
    %v478 = vunpack.c.l.b16 %v150
    %v479 = vunpack.c.h.b16 %v150
    %v480 = vunpack.c.l.b16 %v151
    %v481 = vunpack.c.h.b16 %v151
    %v482 = vunpack.c.l.b16 %v152
    %v483 = vunpack.c.h.b16 %v152
    %v484 = vunpack.c.l.b16 %v153
    %v485 = vunpack.c.h.b16 %v153
    %v486 = vunpack.c.l.b16 %v154
    %v487 = vunpack.c.h.b16 %v154
    %v488 = vunpack.c.l.b16 %v155
    %v489 = vunpack.c.h.b16 %v155
    %v490 = vunpack.c.l.b16 %v156
    %v491 = vunpack.c.h.b16 %v156
    %v492 = vunpack.c.l.b16 %v157
    %v493 = vunpack.c.h.b16 %v157
    %v494 = vunpack.c.l.b16 %v158
    %v495 = vunpack.c.h.b16 %v158
    %v496 = vunpack.c.l.b16 %v159
    %v497 = vunpack.c.h.b16 %v159
    %v498 = vunpack.c.l.b16 %v160
    %v499 = vunpack.c.h.b16 %v160
    %v500 = vunpack.c.l.b16 %v161
    %v501 = vunpack.c.h.b16 %v161
    %v502 = vunpack.c.l.b16 %v162
    %v503 = vunpack.c.h.b16 %v162
    %v504 = vunpack.c.l.b16 %v163
    %v505 = vunpack.c.h.b16 %v163
    %v506 = vunpack.c.l.b16 %v164
    %v507 = vunpack.c.h.b16 %v164
    %v508 = vunpack.c.l.b16 %v165
    %v509 = vunpack.c.h.b16 %v165
    %v510 = vunpack.c.l.b16 %v166
    %v511 = vunpack.c.h.b16 %v166
    %v512 = vunpack.c.l.b16 %v167
    %v513 = vunpack.c.h.b16 %v167
    %v514 = vunpack.c.l.b16 %v168
    %v515 = vunpack.c.h.b16 %v168
    %v516 = vunpack.c.l.b16 %v169
    %v517 = vunpack.c.h.b16 %v169
    %v518 = vunpack.c.l.b16 %v170
    %v519 = vunpack.c.h.b16 %v170
    %v520 = vunpack.c.l.b16 %v171
    %v521 = vunpack.c.h.b16 %v171
    %v522 = vunpack.c.l.b16 %v172
    %v523 = vunpack.c.h.b16 %v172
    %v524 = vunpack.c.l.b16 %v173
    %v525 = vunpack.c.h.b16 %v173
    %v526 = vunpack.c.l.b16 %v174
    %v527 = vunpack.c.h.b16 %v174
    %v528 = vunpack.c.l.b16 %v175
    %v529 = vunpack.c.h.b16 %v175
    %v530 = vunpack.c.l.b16 %v176
    %v531 = vunpack.c.h.b16 %v176
    %v532 = vunpack.c.l.b16 %v177
    %v533 = vunpack.c.h.b16 %v177
    %v534 = vunpack.c.l.b16 %v178
    %v535 = vunpack.c.h.b16 %v178
    %v536 = vunpack.c.l.b16 %v179
    %v537 = vunpack.c.h.b16 %v179
    %v538 = vunpack.c.l.b16 %v180
    %v539 = vunpack.c.h.b16 %v180
    %v540 = vunpack.c.l.b16 %v181
    %v541 = vunpack.c.h.b16 %v181
    %v542 = vunpack.c.l.b16 %v182
    %v543 = vunpack.c.h.b16 %v182
    %v544 = vunpack.c.l.b16 %v183
    %v545 = vunpack.c.h.b16 %v183
    %v546 = vunpack.c.l.b16 %v184
    %v547 = vunpack.c.h.b16 %v184
    %v548 = vunpack.c.l.b16 %v185
    %v549 = vunpack.c.h.b16 %v185
    %v550 = vunpack.c.l.b16 %v186
    %v551 = vunpack.c.h.b16 %v186
    %v552 = vunpack.c.l.b16 %v187
    %v553 = vunpack.c.h.b16 %v187
    %v554 = vunpack.c.l.b16 %v188
    %v555 = vunpack.c.h.b16 %v188
    %v556 = vunpack.c.l.b16 %v189
    %v557 = vunpack.c.h.b16 %v189
    %v558 = vunpack.c.l.b16 %v190
    %v559 = vunpack.c.h.b16 %v190
    %v560 = vunpack.c.l.b16 %v191
    %v561 = vunpack.c.h.b16 %v191
    %v562 = vunpack.c.l.b16 %v192
    %v563 = vunpack.c.h.b16 %v192
    %v564 = vunpack.c.l.b16 %v193
    %v565 = vunpack.c.h.b16 %v193
    %v566 = vunpack.c.l.b16 %v194
    %v567 = vunpack.c.h.b16 %v194
    %v568 = vunpack.c.l.b16 %v195
    %v569 = vunpack.c.h.b16 %v195
    %v570 = vunpack.c.l.b16 %v196
    %v571 = vunpack.c.h.b16 %v196
    %v572 = vunpack.c.l.b16 %v197
    %v573 = vunpack.c.h.b16 %v197
    %v574 = vunpack.c.l.b16 %v198
    %v575 = vunpack.c.h.b16 %v198
    %v576 = vunpack.c.l.b16 %v199
    %v577 = vunpack.c.h.b16 %v199
    %v578 = vunpack.c.l.b16 %v200
    %v579 = vunpack.c.h.b16 %v200
    %v580 = vunpack.c.l.b16 %v201
    %v581 = vunpack.c.h.b16 %v201
    %v582 = vunpack.c.l.b16 %v202
    %v583 = vunpack.c.h.b16 %v202
    %v584 = vunpack.c.l.b16 %v203
    %v585 = vunpack.c.h.b16 %v203
    %v586 = vunpack.c.l.b16 %v204
    %v587 = vunpack.c.h.b16 %v204
    %v588 = vunpack.c.l.b16 %v205
    %v589 = vunpack.c.h.b16 %v205
    %v590 = vunpack.c.l.b16 %v206
    %v591 = vunpack.c.h.b16 %v206
    %v592 = vunpack.c.l.b16 %v207
    %v593 = vunpack.c.h.b16 %v207
    %v594 = vunpack.c.l.b16 %v208
    %v595 = vunpack.c.h.b16 %v208
    %v596 = vunpack.c.l.b16 %v209
    %v597 = vunpack.c.h.b16 %v209
    %v598 = vunpack.c.l.b16 %v210
    %v599 = vunpack.c.h.b16 %v210
    %v600 = vunpack.c.l.b16 %v211
    %v601 = vunpack.c.h.b16 %v211
    %v602 = vunpack.c.l.b16 %v212
    %v603 = vunpack.c.h.b16 %v212
    %v604 = vunpack.c.l.b16 %v213
    %v605 = vunpack.c.h.b16 %v213
    %v606 = vunpack.c.l.b16 %v214
    %v607 = vunpack.c.h.b16 %v214
    %v608 = vunpack.c.l.b16 %v215
    %v609 = vunpack.c.h.b16 %v215
    %v610 = vunpack.c.l.b16 %v216
    %v611 = vunpack.c.h.b16 %v216
    %v612 = vunpack.c.l.b16 %v217
    %v613 = vunpack.c.h.b16 %v217
    %v614 = vunpack.c.l.b16 %v218
    %v615 = vunpack.c.h.b16 %v218
    %v616 = vunpack.c.l.b16 %v219
    %v617 = vunpack.c.h.b16 %v219
    %v618 = vunpack.c.l.b16 %v220
    %v619 = vunpack.c.h.b16 %v220
    %v620 = vunpack.c.l.b16 %v221
    %v621 = vunpack.c.h.b16 %v221
    %v622 = vunpack.c.l.b16 %v222
    %v623 = vunpack.c.h.b16 %v222
    %v624 = vunpack.c.l.b16 %v223
    %v625 = vunpack.c.h.b16 %v223
    %v626 = vunpack.c.l.b16 %v224
    %v627 = vunpack.c.h.b16 %v224
    %v628 = vunpack.c.l.b16 %v225
    %v629 = vunpack.c.h.b16 %v225
    %v630 = vunpack.c.l.b16 %v226
    %v631 = vunpack.c.h.b16 %v226
    %v632 = vunpack.c.l.b16 %v227
    %v633 = vunpack.c.h.b16 %v227
    %v634 = vunpack.c.l.b16 %v228
    %v635 = vunpack.c.h.b16 %v228
    %v636 = vunpack.c.l.b16 %v229
    %v637 = vunpack.c.h.b16 %v229
    %v638 = vunpack.c.l.b16 %v230
    %v639 = vunpack.c.h.b16 %v230
    %v640 = vunpack.c.l.b16 %v231
    %v641 = vunpack.c.h.b16 %v231
    %v642 = vunpack.c.l.b16 %v232
    %v643 = vunpack.c.h.b16 %v232
    %v644 = vunpack.c.l.b16 %v233
    %v645 = vunpack.c.h.b16 %v233
    %v646 = vunpack.c.l.b16 %v234
    %v647 = vunpack.c.h.b16 %v234
    %v648 = vunpack.c.l.b16 %v235
    %v649 = vunpack.c.h.b16 %v235
    %v650 = vunpack.c.l.b16 %v236
    %v651 = vunpack.c.h.b16 %v236
    %v652 = vunpack.c.l.b16 %v237
    %v653 = vunpack.c.h.b16 %v237
    %v654 = vunpack.c.l.b16 %v238
    %v655 = vunpack.c.h.b16 %v238
    %v656 = vunpack.c.l.b16 %v239
    %v657 = vunpack.c.h.b16 %v239
    %v658 = vunpack.c.l.b16 %v240
    %v659 = vunpack.c.h.b16 %v240
    %v660 = vunpack.c.l.b16 %v241
    %v661 = vunpack.c.h.b16 %v241
    %v662 = vunpack.c.l.b16 %v242
    %v663 = vunpack.c.h.b16 %v242
    %v664 = vunpack.c.l.b16 %v243
    %v665 = vunpack.c.h.b16 %v243
    %v666 = vunpack.c.l.b16 %v244
    %v667 = vunpack.c.h.b16 %v244
    %v668 = vunpack.c.l.b16 %v245
    %v669 = vunpack.c.h.b16 %v245
    %v670 = vunpack.c.l.b16 %v246
    %v671 = vunpack.c.h.b16 %v246
    %v672 = vunpack.c.l.b16 %v247
    %v673 = vunpack.c.h.b16 %v247
    %v674 = vunpack.c.l.b16 %v248
    %v675 = vunpack.c.h.b16 %v248
    %v676 = vunpack.c.l.b16 %v249
    %v677 = vunpack.c.h.b16 %v249
    %v678 = vunpack.c.l.b16 %v250
    %v679 = vunpack.c.h.b16 %v250
    %v680 = vunpack.c.l.b16 %v251
    %v681 = vunpack.c.h.b16 %v251
    %v682 = vunpack.c.l.b16 %v252
    %v683 = vunpack.c.h.b16 %v252
    %v684 = vunpack.c.l.b16 %v253
    %v685 = vunpack.c.h.b16 %v253
    %v686 = vunpack.c.l.b16 %v254
    %v687 = vunpack.c.h.b16 %v254
    %v688 = vunpack.c.l.b16 %v255
    %v689 = vunpack.c.h.b16 %v255
    %v690 = vunpack.c.l.b16 %v256
    %v691 = vunpack.c.h.b16 %v256
    %v692 = vunpack.c.l.b16 %v257
    %v693 = vunpack.c.h.b16 %v257
    %v694 = vunpack.c.l.b16 %v258
    %v695 = vunpack.c.h.b16 %v258
    %v696 = vunpack.c.l.b16 %v259
    %v697 = vunpack.c.h.b16 %v259
    %v698 = vunpack.c.l.b16 %v260
    %v699 = vunpack.c.h.b16 %v260
    %v700 = vunpack.c.l.b16 %v261
    %v701 = vunpack.c.h.b16 %v261
    %v702 = vunpack.c.l.b16 %v262
    %v703 = vunpack.c.h.b16 %v262
    %v704 = vunpack.c.l.b16 %v263
    %v705 = vunpack.c.h.b16 %v263
    %v706 = vunpack.c.l.b16 %v264
    %v707 = vunpack.c.h.b16 %v264
    %v708 = vunpack.c.l.b16 %v265
    %v709 = vunpack.c.h.b16 %v265
    %v710 = vunpack.c.l.b16 %v266
    %v711 = vunpack.c.h.b16 %v266
    %v712 = vunpack.c.l.b16 %v267
    %v713 = vunpack.c.h.b16 %v267
    %v714 = vunpack.c.l.b16 %v268
    %v715 = vunpack.c.h.b16 %v268
    %v716 = vunpack.c.l.b16 %v269
    %v717 = vunpack.c.h.b16 %v269
    %v718 = vunpack.c.l.b16 %v270
    %v719 = vunpack.c.h.b16 %v270
    %v720 = vunpack.c.l.b16 %v271
    %v721 = vunpack.c.h.b16 %v271
    %v722 = vunpack.c.l.b16 %v272
    %v723 = vunpack.c.h.b16 %v272
    %v724 = vunpack.c.l.b16 %v273
    %v725 = vunpack.c.h.b16 %v273
    %v726 = vunpack.c.l.b16 %v274
    %v727 = vunpack.c.h.b16 %v274
    %v728 = vunpack.c.l.b16 %v275
    %v729 = vunpack.c.h.b16 %v275
    %v730 = vunpack.c.l.b16 %v276
    %v731 = vunpack.c.h.b16 %v276
    %v732 = vunpack.c.l.b16 %v277
    %v733 = vunpack.c.h.b16 %v277
    %v734 = vunpack.c.l.b16 %v278
    %v735 = vunpack.c.h.b16 %v278
    %v736 = vunpack.c.l.b16 %v279
    %v737 = vunpack.c.h.b16 %v279
    %v738 = vunpack.c.l.b16 %v280
    %v739 = vunpack.c.h.b16 %v280
    %v740 = vunpack.c.l.b16 %v281
    %v741 = vunpack.c.h.b16 %v281
    %v742 = vunpack.c.l.b16 %v282
    %v743 = vunpack.c.h.b16 %v282
    %v744 = vunpack.c.l.b16 %v283
    %v745 = vunpack.c.h.b16 %v283
    %v746 = vunpack.c.l.b16 %v284
    %v747 = vunpack.c.h.b16 %v284
    %v748 = vunpack.c.l.b16 %v285
    %v749 = vunpack.c.h.b16 %v285
    %v750 = vpack.c.b16 %v468, %v462
    %v751 = vpack.c.b16 %v469, %v463
    %v752 = vpack.c.b16 %v470, %v464
    %v753 = vpack.c.b16 %v471, %v465
    %v754 = vpack.c.b16 %v472, %v466
    %v755 = vpack.c.b16 %v473, %v467
    %v756 = vpack.c.b16 %v480, %v474
    %v757 = vpack.c.b16 %v481, %v475
    %v758 = vpack.c.b16 %v482, %v476
    %v759 = vpack.c.b16 %v483, %v477
    %v760 = vpack.c.b16 %v484, %v478
    %v761 = vpack.c.b16 %v485, %v479
    %v762 = vpack.c.b16 %v492, %v486
    %v763 = vpack.c.b16 %v493, %v487
    %v764 = vpack.c.b16 %v494, %v488
    %v765 = vpack.c.b16 %v495, %v489
    %v766 = vpack.c.b16 %v496, %v490
    %v767 = vpack.c.b16 %v497, %v491
    %v768 = vpack.c.b16 %v504, %v498
    %v769 = vpack.c.b16 %v505, %v499
    %v770 = vpack.c.b16 %v506, %v500
    %v771 = vpack.c.b16 %v507, %v501
    %v772 = vpack.c.b16 %v508, %v502
    %v773 = vpack.c.b16 %v509, %v503
    %v774 = vpack.c.b16 %v516, %v510
    %v775 = vpack.c.b16 %v517, %v511
    %v776 = vpack.c.b16 %v518, %v512
    %v777 = vpack.c.b16 %v519, %v513
    %v778 = vpack.c.b16 %v520, %v514
    %v779 = vpack.c.b16 %v521, %v515
    %v780 = vpack.c.b16 %v528, %v522
    %v781 = vpack.c.b16 %v529, %v523
    %v782 = vpack.c.b16 %v530, %v524
    %v783 = vpack.c.b16 %v531, %v525
    %v784 = vpack.c.b16 %v532, %v526
    %v785 = vpack.c.b16 %v533, %v527
    %v786 = vpack.c.b16 %v540, %v534
    %v787 = vpack.c.b16 %v541, %v535
    %v788 = vpack.c.b16 %v542, %v536
    %v789 = vpack.c.b16 %v543, %v537
    %v790 = vpack.c.b16 %v544, %v538
    %v791 = vpack.c.b16 %v545, %v539
    %v792 = vpack.c.b16 %v552, %v546
    %v793 = vpack.c.b16 %v553, %v547
    %v794 = vpack.c.b16 %v554, %v548
    %v795 = vpack.c.b16 %v555, %v549
    %v796 = vpack.c.b16 %v556, %v550
    %v797 = vpack.c.b16 %v557, %v551
    %v798 = vpack.c.b16 %v564, %v558
    %v799 = vpack.c.b16 %v565, %v559
    %v800 = vpack.c.b16 %v566, %v560
    %v801 = vpack.c.b16 %v567, %v561
    %v802 = vpack.c.b16 %v568, %v562
    %v803 = vpack.c.b16 %v569, %v563
    %v804 = vpack.c.b16 %v576, %v570
    %v805 = vpack.c.b16 %v577, %v571
    %v806 = vpack.c.b16 %v578, %v572
    %v807 = vpack.c.b16 %v579, %v573
    %v808 = vpack.c.b16 %v580, %v574
    %v809 = vpack.c.b16 %v581, %v575
    %v810 = vpack.c.b16 %v588, %v582
    %v811 = vpack.c.b16 %v589, %v583
    %v812 = vpack.c.b16 %v590, %v584
    %v813 = vpack.c.b16 %v591, %v585
    %v814 = vpack.c.b16 %v592, %v586
    %v815 = vpack.c.b16 %v593, %v587
    %v816 = vpack.c.b16 %v600, %v594
    %v817 = vpack.c.b16 %v601, %v595
    %v818 = vpack.c.b16 %v602, %v596
    %v819 = vpack.c.b16 %v603, %v597
    %v820 = vpack.c.b16 %v604, %v598
    %v821 = vpack.c.b16 %v605, %v599
    %v822 = vpack.c.b16 %v612, %v606
    %v823 = vpack.c.b16 %v613, %v607
    %v824 = vpack.c.b16 %v614, %v608
    %v825 = vpack.c.b16 %v615, %v609
    %v826 = vpack.c.b16 %v616, %v610
    %v827 = vpack.c.b16 %v617, %v611
    %v828 = vpack.c.b16 %v624, %v618
    %v829 = vpack.c.b16 %v625, %v619
    %v830 = vpack.c.b16 %v626, %v620
    %v831 = vpack.c.b16 %v627, %v621
    %v832 = vpack.c.b16 %v628, %v622
    %v833 = vpack.c.b16 %v629, %v623
    %v834 = vpack.c.b16 %v636, %v630
    %v835 = vpack.c.b16 %v637, %v631
    %v836 = vpack.c.b16 %v638, %v632
    %v837 = vpack.c.b16 %v639, %v633
    %v838 = vpack.c.b16 %v640, %v634
    %v839 = vpack.c.b16 %v641, %v635
    %v840 = vpack.c.b16 %v648, %v642
    %v841 = vpack.c.b16 %v649, %v643
    %v842 = vpack.c.b16 %v650, %v644
    %v843 = vpack.c.b16 %v651, %v645
    %v844 = vpack.c.b16 %v652, %v646
    %v845 = vpack.c.b16 %v653, %v647
    %v846 = vpack.c.b16 %v660, %v654
    %v847 = vpack.c.b16 %v661, %v655
    %v848 = vpack.c.b16 %v662, %v656
    %v849 = vpack.c.b16 %v663, %v657
    %v850 = vpack.c.b16 %v664, %v658
    %v851 = vpack.c.b16 %v665, %v659
    %v852 = vpack.c.b16 %v672, %v666
    %v853 = vpack.c.b16 %v673, %v667
    %v854 = vpack.c.b16 %v674, %v668
    %v855 = vpack.c.b16 %v675, %v669
    %v856 = vpack.c.b16 %v676, %v670
    %v857 = vpack.c.b16 %v677, %v671
    %v858 = vpack.c.b16 %v684, %v678
    %v859 = vpack.c.b16 %v685, %v679
    %v860 = vpack.c.b16 %v686, %v680
    %v861 = vpack.c.b16 %v687, %v681
    %v862 = vpack.c.b16 %v688, %v682
    %v863 = vpack.c.b16 %v689, %v683
    %v864 = vpack.c.b16 %v696, %v690
    %v865 = vpack.c.b16 %v697, %v691
    %v866 = vpack.c.b16 %v698, %v692
    %v867 = vpack.c.b16 %v699, %v693
    %v868 = vpack.c.b16 %v700, %v694
    %v869 = vpack.c.b16 %v701, %v695
    %v870 = vpack.c.b16 %v708, %v702
    %v871 = vpack.c.b16 %v709, %v703
    %v872 = vpack.c.b16 %v710, %v704
    %v873 = vpack.c.b16 %v711, %v705
    %v874 = vpack.c.b16 %v712, %v706
    %v875 = vpack.c.b16 %v713, %v707
    %v876 = vpack.c.b16 %v720, %v714
    %v877 = vpack.c.b16 %v721, %v715
    %v878 = vpack.c.b16 %v722, %v716
    %v879 = vpack.c.b16 %v723, %v717
    %v880 = vpack.c.b16 %v724, %v718
    %v881 = vpack.c.b16 %v725, %v719
    %v882 = vpack.c.b16 %v732, %v726
    %v883 = vpack.c.b16 %v733, %v727
    %v884 = vpack.c.b16 %v734, %v728
    %v885 = vpack.c.b16 %v735, %v729
    %v886 = vpack.c.b16 %v736, %v730
    %v887 = vpack.c.b16 %v737, %v731
    %v888 = vpack.c.b16 %v744, %v738
    %v889 = vpack.c.b16 %v745, %v739
    %v890 = vpack.c.b16 %v746, %v740
    %v891 = vpack.c.b16 %v747, %v741
    %v892 = vpack.c.b16 %v748, %v742
    %v893 = vpack.c.b16 %v749, %v743
    %1038 = vmatprep.subr.bf16.mxu0 %v751
    %1039 = vmatpush1.bf16.msra.mxu0 %v750
    %1040 = vmatprep.subr.bf16.mxu0 %v757
    %1041 = vmatpush1.bf16.msra.mxu0 %v756
    %1042 = vmatprep.subr.bf16.mxu0 %v763
    %1043 = vmatpush1.bf16.msra.mxu0 %v762
    %1044 = vmatprep.subr.bf16.mxu0 %v769
    %1045 = vmatpush1.bf16.msra.mxu0 %v768
    %1046 = vmatprep.subr.bf16.mxu0 %v775
    %1047 = vmatpush1.bf16.msra.mxu0 %v774
    %1048 = vmatprep.subr.bf16.mxu0 %v781
    %1049 = vmatpush1.bf16.msra.mxu0 %v780
    %1050 = vmatprep.subr.bf16.mxu0 %v787
    %1051 = vmatpush1.bf16.msra.mxu0 %v786
    %1052 = vmatprep.subr.bf16.mxu0 %v793
    %1053 = vmatpush1.bf16.msra.mxu0 %v792
    %1054 = vmatprep.subr.bf16.mxu0 %v799
    %1055 = vmatpush1.bf16.msra.mxu0 %v798
    %1056 = vmatprep.subr.bf16.mxu0 %v805
    %1057 = vmatpush1.bf16.msra.mxu0 %v804
    %1058 = vmatprep.subr.bf16.mxu0 %v811
    %1059 = vmatpush1.bf16.msra.mxu0 %v810
    %1060 = vmatprep.subr.bf16.mxu0 %v817
    %1061 = vmatpush1.bf16.msra.mxu0 %v816
    %1062 = vmatprep.subr.bf16.mxu0 %v823
    %1063 = vmatpush1.bf16.msra.mxu0 %v822
    %1064 = vmatprep.subr.bf16.mxu0 %v829
    %1065 = vmatpush1.bf16.msra.mxu0 %v828
    %1066 = vmatprep.subr.bf16.mxu0 %v835
    %1067 = vmatpush1.bf16.msra.mxu0 %v834
    %1068 = vmatprep.subr.bf16.mxu0 %v841
    %1069 = vmatpush1.bf16.msra.mxu0 %v840
    %1070 = vmatprep.mubr.bf16.mxu0 %v119
    %1071 = vmatmul.mubr.bf16.gmra.mrb[0].mxu0 %v118
    %v1072 = vpop.f32.mrb[0].mxu0
    %v1073 = vadd.f32 %v291, %v1072
    %v1074 = vpop.f32.mrb[0].mxu0
    %v1075 = vadd.f32 %v295, %v1074
    %v1076 = vpop.f32.mrb[0].mxu0
    %v1077 = vadd.f32 %v291, %v1076
    %v1078 = vpop.f32.mrb[0].mxu0
    %v1079 = vadd.f32 %v295, %v1078
    %1080 = vmatprep.mubr.bf16.mxu0 %v122
    %1081 = vmatmul.mubr.bf16.gmra.mrb[0].mxu0 %v121
    %v1082 = vpop.f32.mrb[0].mxu0
    %v1083 = vadd.f32 %v291, %v1082
    %v1084 = vpop.f32.mrb[0].mxu0
    %v1085 = vadd.f32 %v295, %v1084
    %v1086 = vpop.f32.mrb[0].mxu0
    %v1087 = vadd.f32 %v291, %v1086
    %v1088 = vpop.f32.mrb[0].mxu0
    %v1089 = vadd.f32 %v295, %v1088
    %1090 = vmatprep.mubr.bf16.mxu0 %v125
    %1091 = vmatmul.mubr.bf16.gmra.mrb[0].mxu0 %v124
    %v1092 = vpop.f32.mrb[0].mxu0
    %v1093 = vadd.f32 %v291, %v1092
    %v1094 = vpop.f32.mrb[0].mxu0
    %v1095 = vadd.f32 %v295, %v1094
    %v1096 = vpop.f32.mrb[0].mxu0
    %v1097 = vadd.f32 %v291, %v1096
    %v1098 = vpop.f32.mrb[0].mxu0
    %v1099 = vadd.f32 %v295, %v1098
    %1100 = vmatprep.mubr.bf16.mxu0 %v128
    %1101 = vmatmul.mubr.bf16.gmra.mrb[0].mxu0 %v127
    %v1102 = vpop.f32.mrb[0].mxu0
    %v1103 = vadd.f32 %v291, %v1102
    %v1104 = vpop.f32.mrb[0].mxu0
    %v1105 = vadd.f32 %v295, %v1104
    %v1106 = vpop.f32.mrb[0].mxu0
    %v1107 = vadd.f32 %v291, %v1106
    %v1108 = vpop.f32.mrb[0].mxu0
    %v1109 = vadd.f32 %v295, %v1108
    %1110 = vmatprep.mubr.bf16.mxu0 %v131
    %1111 = vmatmul.mubr.bf16.gmra.mrb[0].mxu0 %v130
    %v1112 = vpop.f32.mrb[0].mxu0
    %v1113 = vadd.f32 %v291, %v1112
    %v1114 = vpop.f32.mrb[0].mxu0
    %v1115 = vadd.f32 %v295, %v1114
    %v1116 = vpop.f32.mrb[0].mxu0
    %v1117 = vadd.f32 %v291, %v1116
    %v1118 = vpop.f32.mrb[0].mxu0
    %v1119 = vadd.f32 %v295, %v1118
    %1120 = vmatprep.mubr.bf16.mxu0 %v134
    %1121 = vmatmul.mubr.bf16.gmra.mrb[0].mxu0 %v133
    %v1122 = vpop.f32.mrb[0].mxu0
    %v1123 = vadd.f32 %v291, %v1122
    %v1124 = vpop.f32.mrb[0].mxu0
    %v1125 = vadd.f32 %v295, %v1124
    %v1126 = vpop.f32.mrb[0].mxu0
    %v1127 = vadd.f32 %v291, %v1126
    %v1128 = vpop.f32.mrb[0].mxu0
    %v1129 = vadd.f32 %v295, %v1128
    %1130 = vmatprep.mubr.bf16.mxu0 %v137
    %1131 = vmatmul.mubr.bf16.gmra.mrb[0].mxu0 %v136
    %v1132 = vpop.f32.mrb[0].mxu0
    %v1133 = vadd.f32 %v291, %v1132
    %v1134 = vpop.f32.mrb[0].mxu0
    %v1135 = vadd.f32 %v295, %v1134
    %v1136 = vpop.f32.mrb[0].mxu0
    %v1137 = vadd.f32 %v291, %v1136
    %v1138 = vpop.f32.mrb[0].mxu0
    %v1139 = vadd.f32 %v295, %v1138
    %1140 = vmatprep.mubr.bf16.mxu0 %v140
    %1141 = vmatmul.mubr.bf16.gmra.mrb[0].mxu0 %v139
    %v1142 = vpop.f32.mrb[0].mxu0
    %v1143 = vadd.f32 %v291, %v1142
    %v1144 = vpop.f32.mrb[0].mxu0
    %v1145 = vadd.f32 %v295, %v1144
    %v1146 = vpop.f32.mrb[0].mxu0
    %v1147 = vadd.f32 %v291, %v1146
    %v1148 = vpop.f32.mrb[0].mxu0
    %v1149 = vadd.f32 %v295, %v1148
    %1150 = vdwg.mxu0
    %1151 = vmatprep.subr.bf16.mxu0 %v847
    %1152 = vmatpush1.bf16.msra.mxu0 %v846
    %1153 = vmatprep.subr.bf16.mxu0 %v853
    %1154 = vmatpush1.bf16.msra.mxu0 %v852
    %1155 = vmatprep.subr.bf16.mxu0 %v859
    %1156 = vmatpush1.bf16.msra.mxu0 %v858
    %1157 = vmatprep.subr.bf16.mxu0 %v865
    %1158 = vmatpush1.bf16.msra.mxu0 %v864
    %1159 = vmatprep.subr.bf16.mxu0 %v871
    %1160 = vmatpush1.bf16.msra.mxu0 %v870
    %1161 = vmatprep.subr.bf16.mxu0 %v877
    %1162 = vmatpush1.bf16.msra.mxu0 %v876
    %1163 = vmatprep.subr.bf16.mxu0 %v883
    %1164 = vmatpush1.bf16.msra.mxu0 %v882
    %1165 = vmatprep.subr.bf16.mxu0 %v889
    %1166 = vmatpush1.bf16.msra.mxu0 %v888
    %1167 = vmatprep.subr.bf16.mxu0 0
    %1168 = vmatpush1.bf16.msra.mxu0 0
    %1169 = vmatprep.subr.bf16.mxu0 0
    %1170 = vmatpush1.bf16.msra.mxu0 0
    %1171 = vmatprep.subr.bf16.mxu0 0
    %1172 = vmatpush1.bf16.msra.mxu0 0
    %1173 = vmatprep.subr.bf16.mxu0 0
    %1174 = vmatpush1.bf16.msra.mxu0 0
    %1175 = vmatprep.subr.bf16.mxu0 0
    %1176 = vmatpush1.bf16.msra.mxu0 0
    %1177 = vmatprep.subr.bf16.mxu0 0
    %1178 = vmatpush1.bf16.msra.mxu0 0
    %1179 = vmatprep.subr.bf16.mxu0 0
    %1180 = vmatpush1.bf16.msra.mxu0 0
    %1181 = vmatprep.subr.bf16.mxu0 0
    %1182 = vmatpush1.bf16.msra.mxu0 0
    %1183 = vmatprep.mubr.bf16.mxu0 0
    %1184 = vmatmul.mubr.bf16.gmra.mrb[0].mxu0 %v120
    %v1185 = vpop.f32.mrb[0].mxu0
    %v1186 = vadd.f32 %v1073, %v1185
    %v1187 = vpop.f32.mrb[0].mxu0
    %v1188 = vadd.f32 %v1075, %v1187
    %v1189 = vpop.f32.mrb[0].mxu0
    %v1190 = vadd.f32 %v1077, %v1189
    %v1191 = vpop.f32.mrb[0].mxu0
    %v1192 = vadd.f32 %v1079, %v1191
    %1193 = vmatprep.mubr.bf16.mxu0 0
    %1194 = vmatmul.mubr.bf16.gmra.mrb[0].mxu0 %v123
    %v1195 = vpop.f32.mrb[0].mxu0
    %v1196 = vadd.f32 %v1083, %v1195
    %v1197 = vpop.f32.mrb[0].mxu0
    %v1198 = vadd.f32 %v1085, %v1197
    %v1199 = vpop.f32.mrb[0].mxu0
    %v1200 = vadd.f32 %v1087, %v1199
    %v1201 = vpop.f32.mrb[0].mxu0
    %v1202 = vadd.f32 %v1089, %v1201
    %1203 = vmatprep.mubr.bf16.mxu0 0
    %1204 = vmatmul.mubr.bf16.gmra.mrb[0].mxu0 %v126
    %v1205 = vpop.f32.mrb[0].mxu0
    %v1206 = vadd.f32 %v1093, %v1205
    %v1207 = vpop.f32.mrb[0].mxu0
    %v1208 = vadd.f32 %v1095, %v1207
    %v1209 = vpop.f32.mrb[0].mxu0
    %v1210 = vadd.f32 %v1097, %v1209
    %v1211 = vpop.f32.mrb[0].mxu0
    %v1212 = vadd.f32 %v1099, %v1211
    %1213 = vmatprep.mubr.bf16.mxu0 0
    %1214 = vmatmul.mubr.bf16.gmra.mrb[0].mxu0 %v129
    %v1215 = vpop.f32.mrb[0].mxu0
    %v1216 = vadd.f32 %v1103, %v1215
    %v1217 = vpop.f32.mrb[0].mxu0
    %v1218 = vadd.f32 %v1105, %v1217
    %v1219 = vpop.f32.mrb[0].mxu0
    %v1220 = vadd.f32 %v1107, %v1219
    %v1221 = vpop.f32.mrb[0].mxu0
    %v1222 = vadd.f32 %v1109, %v1221
    %1223 = vmatprep.mubr.bf16.mxu0 0
    %1224 = vmatmul.mubr.bf16.gmra.mrb[0].mxu0 %v132
    %v1225 = vpop.f32.mrb[0].mxu0
    %v1226 = vadd.f32 %v1113, %v1225
    %v1227 = vpop.f32.mrb[0].mxu0
    %v1228 = vadd.f32 %v1115, %v1227
    %v1229 = vpop.f32.mrb[0].mxu0
    %v1230 = vadd.f32 %v1117, %v1229
    %v1231 = vpop.f32.mrb[0].mxu0
    %v1232 = vadd.f32 %v1119, %v1231
    %1233 = vmatprep.mubr.bf16.mxu0 0
    %1234 = vmatmul.mubr.bf16.gmra.mrb[0].mxu0 %v135
    %v1235 = vpop.f32.mrb[0].mxu0
    %v1236 = vadd.f32 %v1123, %v1235
    %v1237 = vpop.f32.mrb[0].mxu0
    %v1238 = vadd.f32 %v1125, %v1237
    %v1239 = vpop.f32.mrb[0].mxu0
    %v1240 = vadd.f32 %v1127, %v1239
    %v1241 = vpop.f32.mrb[0].mxu0
    %v1242 = vadd.f32 %v1129, %v1241
    %1243 = vmatprep.mubr.bf16.mxu0 0
    %1244 = vmatmul.mubr.bf16.gmra.mrb[0].mxu0 %v138
    %v1245 = vpop.f32.mrb[0].mxu0
    %v1246 = vadd.f32 %v1133, %v1245
    %v1247 = vpop.f32.mrb[0].mxu0
    %v1248 = vadd.f32 %v1135, %v1247
    %v1249 = vpop.f32.mrb[0].mxu0
    %v1250 = vadd.f32 %v1137, %v1249
    %v1251 = vpop.f32.mrb[0].mxu0
    %v1252 = vadd.f32 %v1139, %v1251
    %1253 = vmatprep.mubr.bf16.mxu0 0
    %1254 = vmatmul.mubr.bf16.gmra.mrb[0].mxu0 %v141
    %v1255 = vpop.f32.mrb[0].mxu0
    %v1256 = vadd.f32 %v1143, %v1255
    %v1257 = vpop.f32.mrb[0].mxu0
    %v1258 = vadd.f32 %v1145, %v1257
    %v1259 = vpop.f32.mrb[0].mxu0
    %v1260 = vadd.f32 %v1147, %v1259
    %v1261 = vpop.f32.mrb[0].mxu0
    %v1262 = vadd.f32 %v1149, %v1261
    %1263 = vdwg.mxu0
    %1264 = vmatprep.subr.bf16.mxu0 %v753
    %1265 = vmatpush1.bf16.msra.mxu0 %v752
    %1266 = vmatprep.subr.bf16.mxu0 %v759
    %1267 = vmatpush1.bf16.msra.mxu0 %v758
    %1268 = vmatprep.subr.bf16.mxu0 %v765
    %1269 = vmatpush1.bf16.msra.mxu0 %v764
    %1270 = vmatprep.subr.bf16.mxu0 %v771
    %1271 = vmatpush1.bf16.msra.mxu0 %v770
    %1272 = vmatprep.subr.bf16.mxu0 %v777
    %1273 = vmatpush1.bf16.msra.mxu0 %v776
    %1274 = vmatprep.subr.bf16.mxu0 %v783
    %1275 = vmatpush1.bf16.msra.mxu0 %v782
    %1276 = vmatprep.subr.bf16.mxu0 %v789
    %1277 = vmatpush1.bf16.msra.mxu0 %v788
    %1278 = vmatprep.subr.bf16.mxu0 %v795
    %1279 = vmatpush1.bf16.msra.mxu0 %v794
    %1280 = vmatprep.subr.bf16.mxu0 %v801
    %1281 = vmatpush1.bf16.msra.mxu0 %v800
    %1282 = vmatprep.subr.bf16.mxu0 %v807
    %1283 = vmatpush1.bf16.msra.mxu0 %v806
    %1284 = vmatprep.subr.bf16.mxu0 %v813
    %1285 = vmatpush1.bf16.msra.mxu0 %v812
    %1286 = vmatprep.subr.bf16.mxu0 %v819
    %1287 = vmatpush1.bf16.msra.mxu0 %v818
    %1288 = vmatprep.subr.bf16.mxu0 %v825
    %1289 = vmatpush1.bf16.msra.mxu0 %v824
    %1290 = vmatprep.subr.bf16.mxu0 %v831
    %1291 = vmatpush1.bf16.msra.mxu0 %v830
    %1292 = vmatprep.subr.bf16.mxu0 %v837
    %1293 = vmatpush1.bf16.msra.mxu0 %v836
    %1294 = vmatprep.subr.bf16.mxu0 %v843
    %1295 = vmatpush1.bf16.msra.mxu0 %v842
    %1296 = vmatprep.mubr.bf16.mxu0 %v119
    %1297 = vmatmul.mubr.bf16.gmra.mrb[0].mxu0 %v118
    %v1298 = vpop.f32.mrb[0].mxu0
    %v1299 = vadd.f32 %v299, %v1298
    %v1300 = vpop.f32.mrb[0].mxu0
    %v1301 = vadd.f32 %v303, %v1300
    %v1302 = vpop.f32.mrb[0].mxu0
    %v1303 = vadd.f32 %v299, %v1302
    %v1304 = vpop.f32.mrb[0].mxu0
    %v1305 = vadd.f32 %v303, %v1304
    %1306 = vmatprep.mubr.bf16.mxu0 %v122
    %1307 = vmatmul.mubr.bf16.gmra.mrb[0].mxu0 %v121
    %v1308 = vpop.f32.mrb[0].mxu0
    %v1309 = vadd.f32 %v299, %v1308
    %v1310 = vpop.f32.mrb[0].mxu0
    %v1311 = vadd.f32 %v303, %v1310
    %v1312 = vpop.f32.mrb[0].mxu0
    %v1313 = vadd.f32 %v299, %v1312
    %v1314 = vpop.f32.mrb[0].mxu0
    %v1315 = vadd.f32 %v303, %v1314
    %1316 = vmatprep.mubr.bf16.mxu0 %v125
    %1317 = vmatmul.mubr.bf16.gmra.mrb[0].mxu0 %v124
    %v1318 = vpop.f32.mrb[0].mxu0
    %v1319 = vadd.f32 %v299, %v1318
    %v1320 = vpop.f32.mrb[0].mxu0
    %v1321 = vadd.f32 %v303, %v1320
    %v1322 = vpop.f32.mrb[0].mxu0
    %v1323 = vadd.f32 %v299, %v1322
    %v1324 = vpop.f32.mrb[0].mxu0
    %v1325 = vadd.f32 %v303, %v1324
    %1326 = vmatprep.mubr.bf16.mxu0 %v128
    %1327 = vmatmul.mubr.bf16.gmra.mrb[0].mxu0 %v127
    %v1328 = vpop.f32.mrb[0].mxu0
    %v1329 = vadd.f32 %v299, %v1328
    %v1330 = vpop.f32.mrb[0].mxu0
    %v1331 = vadd.f32 %v303, %v1330
    %v1332 = vpop.f32.mrb[0].mxu0
    %v1333 = vadd.f32 %v299, %v1332
    %v1334 = vpop.f32.mrb[0].mxu0
    %v1335 = vadd.f32 %v303, %v1334
    %1336 = vmatprep.mubr.bf16.mxu0 %v131
    %1337 = vmatmul.mubr.bf16.gmra.mrb[0].mxu0 %v130
    %v1338 = vpop.f32.mrb[0].mxu0
    %v1339 = vadd.f32 %v299, %v1338
    %v1340 = vpop.f32.mrb[0].mxu0
    %v1341 = vadd.f32 %v303, %v1340
    %v1342 = vpop.f32.mrb[0].mxu0
    %v1343 = vadd.f32 %v299, %v1342
    %v1344 = vpop.f32.mrb[0].mxu0
    %v1345 = vadd.f32 %v303, %v1344
    %1346 = vmatprep.mubr.bf16.mxu0 %v134
    %1347 = vmatmul.mubr.bf16.gmra.mrb[0].mxu0 %v133
    %v1348 = vpop.f32.mrb[0].mxu0
    %v1349 = vadd.f32 %v299, %v1348
    %v1350 = vpop.f32.mrb[0].mxu0
    %v1351 = vadd.f32 %v303, %v1350
    %v1352 = vpop.f32.mrb[0].mxu0
    %v1353 = vadd.f32 %v299, %v1352
    %v1354 = vpop.f32.mrb[0].mxu0
    %v1355 = vadd.f32 %v303, %v1354
    %1356 = vmatprep.mubr.bf16.mxu0 %v137
    %1357 = vmatmul.mubr.bf16.gmra.mrb[0].mxu0 %v136
    %v1358 = vpop.f32.mrb[0].mxu0
    %v1359 = vadd.f32 %v299, %v1358
    %v1360 = vpop.f32.mrb[0].mxu0
    %v1361 = vadd.f32 %v303, %v1360
    %v1362 = vpop.f32.mrb[0].mxu0
    %v1363 = vadd.f32 %v299, %v1362
    %v1364 = vpop.f32.mrb[0].mxu0
    %v1365 = vadd.f32 %v303, %v1364
    %1366 = vmatprep.mubr.bf16.mxu0 %v140
    %1367 = vmatmul.mubr.bf16.gmra.mrb[0].mxu0 %v139
    %v1368 = vpop.f32.mrb[0].mxu0
    %v1369 = vadd.f32 %v299, %v1368
    %v1370 = vpop.f32.mrb[0].mxu0
    %v1371 = vadd.f32 %v303, %v1370
    %v1372 = vpop.f32.mrb[0].mxu0
    %v1373 = vadd.f32 %v299, %v1372
    %v1374 = vpop.f32.mrb[0].mxu0
    %v1375 = vadd.f32 %v303, %v1374
    %1376 = vdwg.mxu0
    %1377 = vmatprep.subr.bf16.mxu0 %v849
    %1378 = vmatpush1.bf16.msra.mxu0 %v848
    %1379 = vmatprep.subr.bf16.mxu0 %v855
    %1380 = vmatpush1.bf16.msra.mxu0 %v854
    %1381 = vmatprep.subr.bf16.mxu0 %v861
    %1382 = vmatpush1.bf16.msra.mxu0 %v860
    %1383 = vmatprep.subr.bf16.mxu0 %v867
    %1384 = vmatpush1.bf16.msra.mxu0 %v866
    %1385 = vmatprep.subr.bf16.mxu0 %v873
    %1386 = vmatpush1.bf16.msra.mxu0 %v872
    %1387 = vmatprep.subr.bf16.mxu0 %v879
    %1388 = vmatpush1.bf16.msra.mxu0 %v878
    %1389 = vmatprep.subr.bf16.mxu0 %v885
    %1390 = vmatpush1.bf16.msra.mxu0 %v884
    %1391 = vmatprep.subr.bf16.mxu0 %v891
    %1392 = vmatpush1.bf16.msra.mxu0 %v890
    %1393 = vmatprep.subr.bf16.mxu0 0
    %1394 = vmatpush1.bf16.msra.mxu0 0
    %1395 = vmatprep.subr.bf16.mxu0 0
    %1396 = vmatpush1.bf16.msra.mxu0 0
    %1397 = vmatprep.subr.bf16.mxu0 0
    %1398 = vmatpush1.bf16.msra.mxu0 0
    %1399 = vmatprep.subr.bf16.mxu0 0
    %1400 = vmatpush1.bf16.msra.mxu0 0
    %1401 = vmatprep.subr.bf16.mxu0 0
    %1402 = vmatpush1.bf16.msra.mxu0 0
    %1403 = vmatprep.subr.bf16.mxu0 0
    %1404 = vmatpush1.bf16.msra.mxu0 0
    %1405 = vmatprep.subr.bf16.mxu0 0
    %1406 = vmatpush1.bf16.msra.mxu0 0
    %1407 = vmatprep.subr.bf16.mxu0 0
    %1408 = vmatpush1.bf16.msra.mxu0 0
    %1409 = vmatprep.mubr.bf16.mxu0 0
    %1410 = vmatmul.mubr.bf16.gmra.mrb[0].mxu0 %v120
    %v1411 = vpop.f32.mrb[0].mxu0
    %v1412 = vadd.f32 %v1299, %v1411
    %v1413 = vpop.f32.mrb[0].mxu0
    %v1414 = vadd.f32 %v1301, %v1413
    %v1415 = vpop.f32.mrb[0].mxu0
    %v1416 = vadd.f32 %v1303, %v1415
    %v1417 = vpop.f32.mrb[0].mxu0
    %v1418 = vadd.f32 %v1305, %v1417
    %1419 = vmatprep.mubr.bf16.mxu0 0
    %1420 = vmatmul.mubr.bf16.gmra.mrb[0].mxu0 %v123
    %v1421 = vpop.f32.mrb[0].mxu0
    %v1422 = vadd.f32 %v1309, %v1421
    %v1423 = vpop.f32.mrb[0].mxu0
    %v1424 = vadd.f32 %v1311, %v1423
    %v1425 = vpop.f32.mrb[0].mxu0
    %v1426 = vadd.f32 %v1313, %v1425
    %v1427 = vpop.f32.mrb[0].mxu0
    %v1428 = vadd.f32 %v1315, %v1427
    %1429 = vmatprep.mubr.bf16.mxu0 0
    %1430 = vmatmul.mubr.bf16.gmra.mrb[0].mxu0 %v126
    %v1431 = vpop.f32.mrb[0].mxu0
    %v1432 = vadd.f32 %v1319, %v1431
    %v1433 = vpop.f32.mrb[0].mxu0
    %v1434 = vadd.f32 %v1321, %v1433
    %v1435 = vpop.f32.mrb[0].mxu0
    %v1436 = vadd.f32 %v1323, %v1435
    %v1437 = vpop.f32.mrb[0].mxu0
    %v1438 = vadd.f32 %v1325, %v1437
    %1439 = vmatprep.mubr.bf16.mxu0 0
    %1440 = vmatmul.mubr.bf16.gmra.mrb[0].mxu0 %v129
    %v1441 = vpop.f32.mrb[0].mxu0
    %v1442 = vadd.f32 %v1329, %v1441
    %v1443 = vpop.f32.mrb[0].mxu0
    %v1444 = vadd.f32 %v1331, %v1443
    %v1445 = vpop.f32.mrb[0].mxu0
    %v1446 = vadd.f32 %v1333, %v1445
    %v1447 = vpop.f32.mrb[0].mxu0
    %v1448 = vadd.f32 %v1335, %v1447
    %1449 = vmatprep.mubr.bf16.mxu0 0
    %1450 = vmatmul.mubr.bf16.gmra.mrb[0].mxu0 %v132
    %v1451 = vpop.f32.mrb[0].mxu0
    %v1452 = vadd.f32 %v1339, %v1451
    %v1453 = vpop.f32.mrb[0].mxu0
    %v1454 = vadd.f32 %v1341, %v1453
    %v1455 = vpop.f32.mrb[0].mxu0
    %v1456 = vadd.f32 %v1343, %v1455
    %v1457 = vpop.f32.mrb[0].mxu0
    %v1458 = vadd.f32 %v1345, %v1457
    %1459 = vmatprep.mubr.bf16.mxu0 0
    %1460 = vmatmul.mubr.bf16.gmra.mrb[0].mxu0 %v135
    %v1461 = vpop.f32.mrb[0].mxu0
    %v1462 = vadd.f32 %v1349, %v1461
    %v1463 = vpop.f32.mrb[0].mxu0
    %v1464 = vadd.f32 %v1351, %v1463
    %v1465 = vpop.f32.mrb[0].mxu0
    %v1466 = vadd.f32 %v1353, %v1465
    %v1467 = vpop.f32.mrb[0].mxu0
    %v1468 = vadd.f32 %v1355, %v1467
    %1469 = vmatprep.mubr.bf16.mxu0 0
    %1470 = vmatmul.mubr.bf16.gmra.mrb[0].mxu0 %v138
    %v1471 = vpop.f32.mrb[0].mxu0
    %v1472 = vadd.f32 %v1359, %v1471
    %v1473 = vpop.f32.mrb[0].mxu0
    %v1474 = vadd.f32 %v1361, %v1473
    %v1475 = vpop.f32.mrb[0].mxu0
    %v1476 = vadd.f32 %v1363, %v1475
    %v1477 = vpop.f32.mrb[0].mxu0
    %v1478 = vadd.f32 %v1365, %v1477
    %1479 = vmatprep.mubr.bf16.mxu0 0
    %1480 = vmatmul.mubr.bf16.gmra.mrb[0].mxu0 %v141
    %v1481 = vpop.f32.mrb[0].mxu0
    %v1482 = vadd.f32 %v1369, %v1481
    %v1483 = vpop.f32.mrb[0].mxu0
    %v1484 = vadd.f32 %v1371, %v1483
    %v1485 = vpop.f32.mrb[0].mxu0
    %v1486 = vadd.f32 %v1373, %v1485
    %v1487 = vpop.f32.mrb[0].mxu0
    %v1488 = vadd.f32 %v1375, %v1487
    %1489 = vdwg.mxu0
    %1490 = vmatprep.subr.bf16.mxu0 %v755
    %1491 = vmatpush1.bf16.msra.mxu0 %v754
    %1492 = vmatprep.subr.bf16.mxu0 %v761
    %1493 = vmatpush1.bf16.msra.mxu0 %v760
    %1494 = vmatprep.subr.bf16.mxu0 %v767
    %1495 = vmatpush1.bf16.msra.mxu0 %v766
    %1496 = vmatprep.subr.bf16.mxu0 %v773
    %1497 = vmatpush1.bf16.msra.mxu0 %v772
    %1498 = vmatprep.subr.bf16.mxu0 %v779
    %1499 = vmatpush1.bf16.msra.mxu0 %v778
    %1500 = vmatprep.subr.bf16.mxu0 %v785
    %1501 = vmatpush1.bf16.msra.mxu0 %v784
    %1502 = vmatprep.subr.bf16.mxu0 %v791
    %1503 = vmatpush1.bf16.msra.mxu0 %v790
    %1504 = vmatprep.subr.bf16.mxu0 %v797
    %1505 = vmatpush1.bf16.msra.mxu0 %v796
    %1506 = vmatprep.subr.bf16.mxu0 %v803
    %1507 = vmatpush1.bf16.msra.mxu0 %v802
    %1508 = vmatprep.subr.bf16.mxu0 %v809
    %1509 = vmatpush1.bf16.msra.mxu0 %v808
    %1510 = vmatprep.subr.bf16.mxu0 %v815
    %1511 = vmatpush1.bf16.msra.mxu0 %v814
    %1512 = vmatprep.subr.bf16.mxu0 %v821
    %1513 = vmatpush1.bf16.msra.mxu0 %v820
    %1514 = vmatprep.subr.bf16.mxu0 %v827
    %1515 = vmatpush1.bf16.msra.mxu0 %v826
    %1516 = vmatprep.subr.bf16.mxu0 %v833
    %1517 = vmatpush1.bf16.msra.mxu0 %v832
    %1518 = vmatprep.subr.bf16.mxu0 %v839
    %1519 = vmatpush1.bf16.msra.mxu0 %v838
    %1520 = vmatprep.subr.bf16.mxu0 %v845
    %1521 = vmatpush1.bf16.msra.mxu0 %v844
    %1522 = vmatprep.mubr.bf16.mxu0 %v119
    %1523 = vmatmul.mubr.bf16.gmra.mrb[0].mxu0 %v118
    %v1524 = vpop.f32.mrb[0].mxu0
    %v1525 = vadd.f32 %v307, %v1524
    %v1526 = vpop.f32.mrb[0].mxu0
    %v1527 = vadd.f32 %v311, %v1526
    %v1528 = vpop.f32.mrb[0].mxu0
    %v1529 = vadd.f32 %v307, %v1528
    %v1530 = vpop.f32.mrb[0].mxu0
    %v1531 = vadd.f32 %v311, %v1530
    %1532 = vmatprep.mubr.bf16.mxu0 %v122
    %1533 = vmatmul.mubr.bf16.gmra.mrb[0].mxu0 %v121
    %v1534 = vpop.f32.mrb[0].mxu0
    %v1535 = vadd.f32 %v307, %v1534
    %v1536 = vpop.f32.mrb[0].mxu0
    %v1537 = vadd.f32 %v311, %v1536
    %v1538 = vpop.f32.mrb[0].mxu0
    %v1539 = vadd.f32 %v307, %v1538
    %v1540 = vpop.f32.mrb[0].mxu0
    %v1541 = vadd.f32 %v311, %v1540
    %1542 = vmatprep.mubr.bf16.mxu0 %v125
    %1543 = vmatmul.mubr.bf16.gmra.mrb[0].mxu0 %v124
    %v1544 = vpop.f32.mrb[0].mxu0
    %v1545 = vadd.f32 %v307, %v1544
    %v1546 = vpop.f32.mrb[0].mxu0
    %v1547 = vadd.f32 %v311, %v1546
    %v1548 = vpop.f32.mrb[0].mxu0
    %v1549 = vadd.f32 %v307, %v1548
    %v1550 = vpop.f32.mrb[0].mxu0
    %v1551 = vadd.f32 %v311, %v1550
    %1552 = vmatprep.mubr.bf16.mxu0 %v128
    %1553 = vmatmul.mubr.bf16.gmra.mrb[0].mxu0 %v127
    %v1554 = vpop.f32.mrb[0].mxu0
    %v1555 = vadd.f32 %v307, %v1554
    %v1556 = vpop.f32.mrb[0].mxu0
    %v1557 = vadd.f32 %v311, %v1556
    %v1558 = vpop.f32.mrb[0].mxu0
    %v1559 = vadd.f32 %v307, %v1558
    %v1560 = vpop.f32.mrb[0].mxu0
    %v1561 = vadd.f32 %v311, %v1560
    %1562 = vmatprep.mubr.bf16.mxu0 %v131
    %1563 = vmatmul.mubr.bf16.gmra.mrb[0].mxu0 %v130
    %v1564 = vpop.f32.mrb[0].mxu0
    %v1565 = vadd.f32 %v307, %v1564
    %v1566 = vpop.f32.mrb[0].mxu0
    %v1567 = vadd.f32 %v311, %v1566
    %v1568 = vpop.f32.mrb[0].mxu0
    %v1569 = vadd.f32 %v307, %v1568
    %v1570 = vpop.f32.mrb[0].mxu0
    %v1571 = vadd.f32 %v311, %v1570
    %1572 = vmatprep.mubr.bf16.mxu0 %v134
    %1573 = vmatmul.mubr.bf16.gmra.mrb[0].mxu0 %v133
    %v1574 = vpop.f32.mrb[0].mxu0
    %v1575 = vadd.f32 %v307, %v1574
    %v1576 = vpop.f32.mrb[0].mxu0
    %v1577 = vadd.f32 %v311, %v1576
    %v1578 = vpop.f32.mrb[0].mxu0
    %v1579 = vadd.f32 %v307, %v1578
    %v1580 = vpop.f32.mrb[0].mxu0
    %v1581 = vadd.f32 %v311, %v1580
    %1582 = vmatprep.mubr.bf16.mxu0 %v137
    %1583 = vmatmul.mubr.bf16.gmra.mrb[0].mxu0 %v136
    %v1584 = vpop.f32.mrb[0].mxu0
    %v1585 = vadd.f32 %v307, %v1584
    %v1586 = vpop.f32.mrb[0].mxu0
    %v1587 = vadd.f32 %v311, %v1586
    %v1588 = vpop.f32.mrb[0].mxu0
    %v1589 = vadd.f32 %v307, %v1588
    %v1590 = vpop.f32.mrb[0].mxu0
    %v1591 = vadd.f32 %v311, %v1590
    %1592 = vmatprep.mubr.bf16.mxu0 %v140
    %1593 = vmatmul.mubr.bf16.gmra.mrb[0].mxu0 %v139
    %v1594 = vpop.f32.mrb[0].mxu0
    %v1595 = vadd.f32 %v307, %v1594
    %v1596 = vpop.f32.mrb[0].mxu0
    %v1597 = vadd.f32 %v311, %v1596
    %v1598 = vpop.f32.mrb[0].mxu0
    %v1599 = vadd.f32 %v307, %v1598
    %v1600 = vpop.f32.mrb[0].mxu0
    %v1601 = vadd.f32 %v311, %v1600
    %1602 = vdwg.mxu0
    %1603 = vmatprep.subr.bf16.mxu0 %v851
    %1604 = vmatpush1.bf16.msra.mxu0 %v850
    %1605 = vmatprep.subr.bf16.mxu0 %v857
    %1606 = vmatpush1.bf16.msra.mxu0 %v856
    %1607 = vmatprep.subr.bf16.mxu0 %v863
    %1608 = vmatpush1.bf16.msra.mxu0 %v862
    %1609 = vmatprep.subr.bf16.mxu0 %v869
    %1610 = vmatpush1.bf16.msra.mxu0 %v868
    %1611 = vmatprep.subr.bf16.mxu0 %v875
    %1612 = vmatpush1.bf16.msra.mxu0 %v874
    %1613 = vmatprep.subr.bf16.mxu0 %v881
    %1614 = vmatpush1.bf16.msra.mxu0 %v880
    %1615 = vmatprep.subr.bf16.mxu0 %v887
    %1616 = vmatpush1.bf16.msra.mxu0 %v886
    %1617 = vmatprep.subr.bf16.mxu0 %v893
    %1618 = vmatpush1.bf16.msra.mxu0 %v892
    %1619 = vmatprep.subr.bf16.mxu0 0
    %1620 = vmatpush1.bf16.msra.mxu0 0
    %1621 = vmatprep.subr.bf16.mxu0 0
    %1622 = vmatpush1.bf16.msra.mxu0 0
    %1623 = vmatprep.subr.bf16.mxu0 0
    %1624 = vmatpush1.bf16.msra.mxu0 0
    %1625 = vmatprep.subr.bf16.mxu0 0
    %1626 = vmatpush1.bf16.msra.mxu0 0
    %1627 = vmatprep.subr.bf16.mxu0 0
    %1628 = vmatpush1.bf16.msra.mxu0 0
    %1629 = vmatprep.subr.bf16.mxu0 0
    %1630 = vmatpush1.bf16.msra.mxu0 0
    %1631 = vmatprep.subr.bf16.mxu0 0
    %1632 = vmatpush1.bf16.msra.mxu0 0
    %1633 = vmatprep.subr.bf16.mxu0 0
    %1634 = vmatpush1.bf16.msra.mxu0 0
    %1635 = vmatprep.mubr.bf16.mxu0 0
    %1636 = vmatmul.mubr.bf16.gmra.mrb[0].mxu0 %v120
    %v1637 = vpop.f32.mrb[0].mxu0
    %v1638 = vadd.f32 %v1525, %v1637
    %v1639 = vpop.f32.mrb[0].mxu0
    %v1640 = vadd.f32 %v1527, %v1639
    %v1641 = vpop.f32.mrb[0].mxu0
    %v1642 = vadd.f32 %v1529, %v1641
    %v1643 = vpop.f32.mrb[0].mxu0
    %v1644 = vadd.f32 %v1531, %v1643
    %1645 = vmatprep.mubr.bf16.mxu0 0
    %1646 = vmatmul.mubr.bf16.gmra.mrb[0].mxu0 %v123
    %v1647 = vpop.f32.mrb[0].mxu0
    %v1648 = vadd.f32 %v1535, %v1647
    %v1649 = vpop.f32.mrb[0].mxu0
    %v1650 = vadd.f32 %v1537, %v1649
    %v1651 = vpop.f32.mrb[0].mxu0
    %v1652 = vadd.f32 %v1539, %v1651
    %v1653 = vpop.f32.mrb[0].mxu0
    %v1654 = vadd.f32 %v1541, %v1653
    %1655 = vmatprep.mubr.bf16.mxu0 0
    %1656 = vmatmul.mubr.bf16.gmra.mrb[0].mxu0 %v126
    %v1657 = vpop.f32.mrb[0].mxu0
    %v1658 = vadd.f32 %v1545, %v1657
    %v1659 = vpop.f32.mrb[0].mxu0
    %v1660 = vadd.f32 %v1547, %v1659
    %v1661 = vpop.f32.mrb[0].mxu0
    %v1662 = vadd.f32 %v1549, %v1661
    %v1663 = vpop.f32.mrb[0].mxu0
    %v1664 = vadd.f32 %v1551, %v1663
    %1665 = vmatprep.mubr.bf16.mxu0 0
    %1666 = vmatmul.mubr.bf16.gmra.mrb[0].mxu0 %v129
    %v1667 = vpop.f32.mrb[0].mxu0
    %v1668 = vadd.f32 %v1555, %v1667
    %v1669 = vpop.f32.mrb[0].mxu0
    %v1670 = vadd.f32 %v1557, %v1669
    %v1671 = vpop.f32.mrb[0].mxu0
    %v1672 = vadd.f32 %v1559, %v1671
    %v1673 = vpop.f32.mrb[0].mxu0
    %v1674 = vadd.f32 %v1561, %v1673
    %1675 = vmatprep.mubr.bf16.mxu0 0
    %1676 = vmatmul.mubr.bf16.gmra.mrb[0].mxu0 %v132
    %v1677 = vpop.f32.mrb[0].mxu0
    %v1678 = vadd.f32 %v1565, %v1677
    %v1679 = vpop.f32.mrb[0].mxu0
    %v1680 = vadd.f32 %v1567, %v1679
    %v1681 = vpop.f32.mrb[0].mxu0
    %v1682 = vadd.f32 %v1569, %v1681
    %v1683 = vpop.f32.mrb[0].mxu0
    %v1684 = vadd.f32 %v1571, %v1683
    %1685 = vmatprep.mubr.bf16.mxu0 0
    %1686 = vmatmul.mubr.bf16.gmra.mrb[0].mxu0 %v135
    %v1687 = vpop.f32.mrb[0].mxu0
    %v1688 = vadd.f32 %v1575, %v1687
    %v1689 = vpop.f32.mrb[0].mxu0
    %v1690 = vadd.f32 %v1577, %v1689
    %v1691 = vpop.f32.mrb[0].mxu0
    %v1692 = vadd.f32 %v1579, %v1691
    %v1693 = vpop.f32.mrb[0].mxu0
    %v1694 = vadd.f32 %v1581, %v1693
    %1695 = vmatprep.mubr.bf16.mxu0 0
    %1696 = vmatmul.mubr.bf16.gmra.mrb[0].mxu0 %v138
    %v1697 = vpop.f32.mrb[0].mxu0
    %v1698 = vadd.f32 %v1585, %v1697
    %v1699 = vpop.f32.mrb[0].mxu0
    %v1700 = vadd.f32 %v1587, %v1699
    %v1701 = vpop.f32.mrb[0].mxu0
    %v1702 = vadd.f32 %v1589, %v1701
    %v1703 = vpop.f32.mrb[0].mxu0
    %v1704 = vadd.f32 %v1591, %v1703
    %1705 = vmatprep.mubr.bf16.mxu0 0
    %1706 = vmatmul.mubr.bf16.gmra.mrb[0].mxu0 %v141
    %v1707 = vpop.f32.mrb[0].mxu0
    %v1708 = vadd.f32 %v1595, %v1707
    %v1709 = vpop.f32.mrb[0].mxu0
    %v1710 = vadd.f32 %v1597, %v1709
    %v1711 = vpop.f32.mrb[0].mxu0
    %v1712 = vadd.f32 %v1599, %v1711
    %v1713 = vpop.f32.mrb[0].mxu0
    %v1714 = vadd.f32 %v1601, %v1713
    %1715 = vdwg.mxu0
    %v1716 = vmax.f32 %v1186, 0.0
    %v1717 = vmax.f32 %v1188, 0.0
    %v1718 = vmax.f32 %v1412, 0.0
    %v1719 = vmax.f32 %v1414, 0.0
    %v1720 = vmax.f32 %v1638, 0.0
    %v1721 = vmax.f32 %v1640, 0.0
    %v1722 = vmax.f32 %v1190, 0.0
    %v1723 = vmax.f32 %v1192, 0.0
    %v1724 = vmax.f32 %v1416, 0.0
    %v1725 = vmax.f32 %v1418, 0.0
    %v1726 = vmax.f32 %v1642, 0.0
    %v1727 = vmax.f32 %v1644, 0.0
    %v1728 = vmax.f32 %v1196, 0.0
    %v1729 = vmax.f32 %v1198, 0.0
    %v1730 = vmax.f32 %v1422, 0.0
    %v1731 = vmax.f32 %v1424, 0.0
    %v1732 = vmax.f32 %v1648, 0.0
    %v1733 = vmax.f32 %v1650, 0.0
    %v1734 = vmax.f32 %v1200, 0.0
    %v1735 = vmax.f32 %v1202, 0.0
    %v1736 = vmax.f32 %v1426, 0.0
    %v1737 = vmax.f32 %v1428, 0.0
    %v1738 = vmax.f32 %v1652, 0.0
    %v1739 = vmax.f32 %v1654, 0.0
    %v1740 = vmax.f32 %v1206, 0.0
    %v1741 = vmax.f32 %v1208, 0.0
    %v1742 = vmax.f32 %v1432, 0.0
    %v1743 = vmax.f32 %v1434, 0.0
    %v1744 = vmax.f32 %v1658, 0.0
    %v1745 = vmax.f32 %v1660, 0.0
    %v1746 = vmax.f32 %v1210, 0.0
    %v1747 = vmax.f32 %v1212, 0.0
    %v1748 = vmax.f32 %v1436, 0.0
    %v1749 = vmax.f32 %v1438, 0.0
    %v1750 = vmax.f32 %v1662, 0.0
    %v1751 = vmax.f32 %v1664, 0.0
    %v1752 = vmax.f32 %v1216, 0.0
    %v1753 = vmax.f32 %v1218, 0.0
    %v1754 = vmax.f32 %v1442, 0.0
    %v1755 = vmax.f32 %v1444, 0.0
    %v1756 = vmax.f32 %v1668, 0.0
    %v1757 = vmax.f32 %v1670, 0.0
    %v1758 = vmax.f32 %v1220, 0.0
    %v1759 = vmax.f32 %v1222, 0.0
    %v1760 = vmax.f32 %v1446, 0.0
    %v1761 = vmax.f32 %v1448, 0.0
    %v1762 = vmax.f32 %v1672, 0.0
    %v1763 = vmax.f32 %v1674, 0.0
    %v1764 = vmax.f32 %v1226, 0.0
    %v1765 = vmax.f32 %v1228, 0.0
    %v1766 = vmax.f32 %v1452, 0.0
    %v1767 = vmax.f32 %v1454, 0.0
    %v1768 = vmax.f32 %v1678, 0.0
    %v1769 = vmax.f32 %v1680, 0.0
    %v1770 = vmax.f32 %v1230, 0.0
    %v1771 = vmax.f32 %v1232, 0.0
    %v1772 = vmax.f32 %v1456, 0.0
    %v1773 = vmax.f32 %v1458, 0.0
    %v1774 = vmax.f32 %v1682, 0.0
    %v1775 = vmax.f32 %v1684, 0.0
    %v1776 = vmax.f32 %v1236, 0.0
    %v1777 = vmax.f32 %v1238, 0.0
    %v1778 = vmax.f32 %v1462, 0.0
    %v1779 = vmax.f32 %v1464, 0.0
    %v1780 = vmax.f32 %v1688, 0.0
    %v1781 = vmax.f32 %v1690, 0.0
    %v1782 = vmax.f32 %v1240, 0.0
    %v1783 = vmax.f32 %v1242, 0.0
    %v1784 = vmax.f32 %v1466, 0.0
    %v1785 = vmax.f32 %v1468, 0.0
    %v1786 = vmax.f32 %v1692, 0.0
    %v1787 = vmax.f32 %v1694, 0.0
    %v1788 = vmax.f32 %v1246, 0.0
    %v1789 = vmax.f32 %v1248, 0.0
    %v1790 = vmax.f32 %v1472, 0.0
    %v1791 = vmax.f32 %v1474, 0.0
    %v1792 = vmax.f32 %v1698, 0.0
    %v1793 = vmax.f32 %v1700, 0.0
    %v1794 = vmax.f32 %v1250, 0.0
    %v1795 = vmax.f32 %v1252, 0.0
    %v1796 = vmax.f32 %v1476, 0.0
    %v1797 = vmax.f32 %v1478, 0.0
    %v1798 = vmax.f32 %v1702, 0.0
    %v1799 = vmax.f32 %v1704, 0.0
    %v1800 = vmax.f32 %v1256, 0.0
    %v1801 = vmax.f32 %v1258, 0.0
    %v1802 = vmax.f32 %v1482, 0.0
    %v1803 = vmax.f32 %v1484, 0.0
    %v1804 = vmax.f32 %v1708, 0.0
    %v1805 = vmax.f32 %v1710, 0.0
    %v1806 = vmax.f32 %v1260, 0.0
    %v1807 = vmax.f32 %v1262, 0.0
    %v1808 = vmax.f32 %v1486, 0.0
    %v1809 = vmax.f32 %v1488, 0.0
    %v1810 = vmax.f32 %v1712, 0.0
    %v1811 = vmax.f32 %v1714, 0.0
    %v1812 = vpack.c.bf16 %v1722, %v1716
    %v1813 = vpack.c.bf16 %v1723, %v1717
    %v1814 = vpack.c.bf16 %v1724, %v1718
    %v1815 = vpack.c.bf16 %v1725, %v1719
    %v1816 = vpack.c.bf16 %v1726, %v1720
    %v1817 = vpack.c.bf16 %v1727, %v1721
    %v1818 = vpack.c.bf16 %v1734, %v1728
    %v1819 = vpack.c.bf16 %v1735, %v1729
    %v1820 = vpack.c.bf16 %v1736, %v1730
    %v1821 = vpack.c.bf16 %v1737, %v1731
    %v1822 = vpack.c.bf16 %v1738, %v1732
    %v1823 = vpack.c.bf16 %v1739, %v1733
    %v1824 = vpack.c.bf16 %v1746, %v1740
    %v1825 = vpack.c.bf16 %v1747, %v1741
    %v1826 = vpack.c.bf16 %v1748, %v1742
    %v1827 = vpack.c.bf16 %v1749, %v1743
    %v1828 = vpack.c.bf16 %v1750, %v1744
    %v1829 = vpack.c.bf16 %v1751, %v1745
    %v1830 = vpack.c.bf16 %v1758, %v1752
    %v1831 = vpack.c.bf16 %v1759, %v1753
    %v1832 = vpack.c.bf16 %v1760, %v1754
    %v1833 = vpack.c.bf16 %v1761, %v1755
    %v1834 = vpack.c.bf16 %v1762, %v1756
    %v1835 = vpack.c.bf16 %v1763, %v1757
    %v1836 = vpack.c.bf16 %v1770, %v1764
    %v1837 = vpack.c.bf16 %v1771, %v1765
    %v1838 = vpack.c.bf16 %v1772, %v1766
    %v1839 = vpack.c.bf16 %v1773, %v1767
    %v1840 = vpack.c.bf16 %v1774, %v1768
    %v1841 = vpack.c.bf16 %v1775, %v1769
    %v1842 = vpack.c.bf16 %v1782, %v1776
    %v1843 = vpack.c.bf16 %v1783, %v1777
    %v1844 = vpack.c.bf16 %v1784, %v1778
    %v1845 = vpack.c.bf16 %v1785, %v1779
    %v1846 = vpack.c.bf16 %v1786, %v1780
    %v1847 = vpack.c.bf16 %v1787, %v1781
    %v1848 = vpack.c.bf16 %v1794, %v1788
    %v1849 = vpack.c.bf16 %v1795, %v1789
    %v1850 = vpack.c.bf16 %v1796, %v1790
    %v1851 = vpack.c.bf16 %v1797, %v1791
    %v1852 = vpack.c.bf16 %v1798, %v1792
    %v1853 = vpack.c.bf16 %v1799, %v1793
    %v1854 = vpack.c.bf16 %v1806, %v1800
    %v1855 = vpack.c.bf16 %v1807, %v1801
    %v1856 = vpack.c.bf16 %v1808, %v1802
    %v1857 = vpack.c.bf16 %v1809, %v1803
    %v1858 = vpack.c.bf16 %v1810, %v1804
    %v1859 = vpack.c.bf16 %v1811, %v1805
    %1860 = vst [vmem:[#allocation2] sm:$0xff] %v1812
    %1861 = vst [vmem:[#allocation2 + $0x8] sm:$0xff] %v1813
    %1862 = vst [vmem:[#allocation2 + $0x10] sm:$0xff] %v1814
    %1863 = vst [vmem:[#allocation2 + $0x18] sm:$0xff] %v1815
    %1864 = vst [vmem:[#allocation2 + $0x20] sm:$0xff] %v1816
    %1865 = vst [vmem:[#allocation2 + $0x28] sm:$0xff] %v1817
    %1866 = vst [vmem:[#allocation2 + $0x30] sm:$0xff] %v1818
    %1867 = vst [vmem:[#allocation2 + $0x38] sm:$0xff] %v1819
    %1868 = vst [vmem:[#allocation2 + $0x40] sm:$0xff] %v1820
    %1869 = vst [vmem:[#allocation2 + $0x48] sm:$0xff] %v1821
    %1870 = vst [vmem:[#allocation2 + $0x50] sm:$0xff] %v1822
    %1871 = vst [vmem:[#allocation2 + $0x58] sm:$0xff] %v1823
    %1872 = vst [vmem:[#allocation2 + $0x60] sm:$0xff] %v1824
    %1873 = vst [vmem:[#allocation2 + $0x68] sm:$0xff] %v1825
    %1874 = vst [vmem:[#allocation2 + $0x70] sm:$0xff] %v1826
    %1875 = vst [vmem:[#allocation2 + $0x78] sm:$0xff] %v1827
    %1876 = vst [vmem:[#allocation2 + $0x80] sm:$0xff] %v1828
    %1877 = vst [vmem:[#allocation2 + $0x88] sm:$0xff] %v1829
    %1878 = vst [vmem:[#allocation2 + $0x90] sm:$0xff] %v1830
    %1879 = vst [vmem:[#allocation2 + $0x98] sm:$0xff] %v1831
    %1880 = vst [vmem:[#allocation2 + $0xa0] sm:$0xff] %v1832
    %1881 = vst [vmem:[#allocation2 + $0xa8] sm:$0xff] %v1833
    %1882 = vst [vmem:[#allocation2 + $0xb0] sm:$0xff] %v1834
    %1883 = vst [vmem:[#allocation2 + $0xb8] sm:$0xff] %v1835
    %1884 = vst [vmem:[#allocation2 + $0xc0] sm:$0xff] %v1836
    %1885 = vst [vmem:[#allocation2 + $0xc8] sm:$0xff] %v1837
    %1886 = vst [vmem:[#allocation2 + $0xd0] sm:$0xff] %v1838
    %1887 = vst [vmem:[#allocation2 + $0xd8] sm:$0xff] %v1839
    %1888 = vst [vmem:[#allocation2 + $0xe0] sm:$0xff] %v1840
    %1889 = vst [vmem:[#allocation2 + $0xe8] sm:$0xff] %v1841
    %1890 = vst [vmem:[#allocation2 + $0xf0] sm:$0xff] %v1842
    %1891 = vst [vmem:[#allocation2 + $0xf8] sm:$0xff] %v1843
    %1892 = vst [vmem:[#allocation2 + $0x100] sm:$0xff] %v1844
    %1893 = vst [vmem:[#allocation2 + $0x108] sm:$0xff] %v1845
    %1894 = vst [vmem:[#allocation2 + $0x110] sm:$0xff] %v1846
    %1895 = vst [vmem:[#allocation2 + $0x118] sm:$0xff] %v1847
    %1896 = vst [vmem:[#allocation2 + $0x120] sm:$0xff] %v1848
    %1897 = vst [vmem:[#allocation2 + $0x128] sm:$0xff] %v1849
    %1898 = vst [vmem:[#allocation2 + $0x130] sm:$0xff] %v1850
    %1899 = vst [vmem:[#allocation2 + $0x138] sm:$0xff] %v1851
    %1900 = vst [vmem:[#allocation2 + $0x140] sm:$0xff] %v1852
    %1901 = vst [vmem:[#allocation2 + $0x148] sm:$0xff] %v1853
    %1902 = vst [vmem:[#allocation2 + $0x150] sm:$0xff] %v1854
    %1903 = vst [vmem:[#allocation2 + $0x158] sm:$0xff] %v1855
    %1904 = vst [vmem:[#allocation2 + $0x160] sm:$0xff] %v1856
    %1905 = vst [vmem:[#allocation2 + $0x168] sm:$0xff] %v1857
    %1906 = vst [vmem:[#allocation2 + $0x170] sm:$0xff] %v1858
    %1907 = vst [vmem:[#allocation2 + $0x178] sm:$0xff] %v1859
    %v1908 = vld [vmem:[#allocation2] sm:$0xff]
    %v1909 = vld [vmem:[#allocation2 + $0x8] sm:$0xff]
    %v1910 = vld [vmem:[#allocation2 + $0x10] sm:$0xff]
    %v1911 = vld [vmem:[#allocation2 + $0x18] sm:$0xff]
    %v1912 = vld [vmem:[#allocation2 + $0x20] sm:$0xff]
    %v1913 = vld [vmem:[#allocation2 + $0x28] sm:$0xff]
    %v1914 = vld [vmem:[#allocation2 + $0x30] sm:$0xff]
    %v1915 = vld [vmem:[#allocation2 + $0x38] sm:$0xff]
    %v1916 = vld [vmem:[#allocation2 + $0x40] sm:$0xff]
    %v1917 = vld [vmem:[#allocation2 + $0x48] sm:$0xff]
    %v1918 = vld [vmem:[#allocation2 + $0x50] sm:$0xff]
    %v1919 = vld [vmem:[#allocation2 + $0x58] sm:$0xff]
    %v1920 = vld [vmem:[#allocation2 + $0x60] sm:$0xff]
    %v1921 = vld [vmem:[#allocation2 + $0x68] sm:$0xff]
    %v1922 = vld [vmem:[#allocation2 + $0x70] sm:$0xff]
    %v1923 = vld [vmem:[#allocation2 + $0x78] sm:$0xff]
    %v1924 = vld [vmem:[#allocation2 + $0x80] sm:$0xff]
    %v1925 = vld [vmem:[#allocation2 + $0x88] sm:$0xff]
    %v1926 = vld [vmem:[#allocation2 + $0x90] sm:$0xff]
    %v1927 = vld [vmem:[#allocation2 + $0x98] sm:$0xff]
    %v1928 = vld [vmem:[#allocation2 + $0xa0] sm:$0xff]
    %v1929 = vld [vmem:[#allocation2 + $0xa8] sm:$0xff]
    %v1930 = vld [vmem:[#allocation2 + $0xb0] sm:$0xff]
    %v1931 = vld [vmem:[#allocation2 + $0xb8] sm:$0xff]
    %v1932 = vld [vmem:[#allocation2 + $0xc0] sm:$0xff]
    %v1933 = vld [vmem:[#allocation2 + $0xc8] sm:$0xff]
    %v1934 = vld [vmem:[#allocation2 + $0xd0] sm:$0xff]
    %v1935 = vld [vmem:[#allocation2 + $0xd8] sm:$0xff]
    %v1936 = vld [vmem:[#allocation2 + $0xe0] sm:$0xff]
    %v1937 = vld [vmem:[#allocation2 + $0xe8] sm:$0xff]
    %v1938 = vld [vmem:[#allocation2 + $0xf0] sm:$0xff]
    %v1939 = vld [vmem:[#allocation2 + $0xf8] sm:$0xff]
    %v1940 = vld [vmem:[#allocation2 + $0x100] sm:$0xff]
    %v1941 = vld [vmem:[#allocation2 + $0x108] sm:$0xff]
    %v1942 = vld [vmem:[#allocation2 + $0x110] sm:$0xff]
    %v1943 = vld [vmem:[#allocation2 + $0x118] sm:$0xff]
    %v1944 = vld [vmem:[#allocation2 + $0x120] sm:$0xff]
    %v1945 = vld [vmem:[#allocation2 + $0x128] sm:$0xff]
    %v1946 = vld [vmem:[#allocation2 + $0x130] sm:$0xff]
    %v1947 = vld [vmem:[#allocation2 + $0x138] sm:$0xff]
    %v1948 = vld [vmem:[#allocation2 + $0x140] sm:$0xff]
    %v1949 = vld [vmem:[#allocation2 + $0x148] sm:$0xff]
    %v1950 = vld [vmem:[#allocation2 + $0x150] sm:$0xff]
    %v1951 = vld [vmem:[#allocation2 + $0x158] sm:$0xff]
    %v1952 = vld [vmem:[#allocation2 + $0x160] sm:$0xff]
    %v1953 = vld [vmem:[#allocation2 + $0x168] sm:$0xff]
    %v1954 = vld [vmem:[#allocation2 + $0x170] sm:$0xff]
    %v1955 = vld [vmem:[#allocation2 + $0x178] sm:$0xff]
    %v1956 = vld [vmem:[#allocation6] sm:$0xff]
    %v1957 = vld [vmem:[#allocation6 + $0x8] sm:$0xff]
    %v1958 = vld [vmem:[#allocation6 + $0x10] sm:$0xff]
    %v1959 = vld [vmem:[#allocation6 + $0x18] sm:$0xff]
    %v1960 = vld [vmem:[#allocation6 + $0x20] sm:$0xff]
    %v1961 = vld [vmem:[#allocation6 + $0x28] sm:$0xff]
    %v1962 = vld [vmem:[#allocation6 + $0x30] sm:$0xff]
    %v1963 = vld [vmem:[#allocation6 + $0x38] sm:$0xff]
    %v1964 = vld [vmem:[#allocation6 + $0x40] sm:$0xff]
    %v1965 = vld [vmem:[#allocation6 + $0x48] sm:$0xff]
    %v1966 = vld [vmem:[#allocation6 + $0x50] sm:$0xff]
    %v1967 = vld [vmem:[#allocation6 + $0x58] sm:$0xff]
    %v1968 = vld [vmem:[#allocation6 + $0x60] sm:$0xff]
    %v1969 = vld [vmem:[#allocation6 + $0x68] sm:$0xff]
    %v1970 = vld [vmem:[#allocation6 + $0x70] sm:$0xff]
    %v1971 = vld [vmem:[#allocation6 + $0x78] sm:$0xff]
    %v1972 = vld [vmem:[#allocation6 + $0x80] sm:$0xff]
    %v1973 = vld [vmem:[#allocation6 + $0x88] sm:$0xff]
    %v1974 = vld [vmem:[#allocation6 + $0x90] sm:$0xff]
    %v1975 = vld [vmem:[#allocation6 + $0x98] sm:$0xff]
    %v1976 = vld [vmem:[#allocation6 + $0xa0] sm:$0xff]
    %v1977 = vld [vmem:[#allocation6 + $0xa8] sm:$0xff]
    %v1978 = vld [vmem:[#allocation6 + $0xb0] sm:$0xff]
    %v1979 = vld [vmem:[#allocation6 + $0xb8] sm:$0xff]
    %v1980 = vld [vmem:[#allocation6 + $0xc0] sm:$0xff]
    %v1981 = vld [vmem:[#allocation6 + $0xc8] sm:$0xff]
    %v1982 = vld [vmem:[#allocation6 + $0xd0] sm:$0xff]
    %v1983 = vld [vmem:[#allocation6 + $0xd8] sm:$0xff]
    %v1984 = vld [vmem:[#allocation6 + $0xe0] sm:$0xff]
    %v1985 = vld [vmem:[#allocation6 + $0xe8] sm:$0xff]
    %v1986 = vld [vmem:[#allocation6 + $0xf0] sm:$0xff]
    %v1987 = vld [vmem:[#allocation6 + $0xf8] sm:$0xff]
    %v1988 = vld [vmem:[#allocation6 + $0x100] sm:$0xff]
    %v1989 = vld [vmem:[#allocation6 + $0x108] sm:$0xff]
    %v1990 = vld [vmem:[#allocation6 + $0x110] sm:$0xff]
    %v1991 = vld [vmem:[#allocation6 + $0x118] sm:$0xff]
    %v1992 = vld [vmem:[#allocation6 + $0x120] sm:$0xff]
    %v1993 = vld [vmem:[#allocation6 + $0x128] sm:$0xff]
    %v1994 = vld [vmem:[#allocation6 + $0x130] sm:$0xff]
    %v1995 = vld [vmem:[#allocation6 + $0x138] sm:$0xff]
    %v1996 = vld [vmem:[#allocation6 + $0x140] sm:$0xff]
    %v1997 = vld [vmem:[#allocation6 + $0x148] sm:$0xff]
    %v1998 = vld [vmem:[#allocation6 + $0x150] sm:$0xff]
    %v1999 = vld [vmem:[#allocation6 + $0x158] sm:$0xff]
    %v2000 = vld [vmem:[#allocation6 + $0x160] sm:$0xff]
    %v2001 = vld [vmem:[#allocation6 + $0x168] sm:$0xff]
    %v2002 = vld [vmem:[#allocation6 + $0x170] sm:$0xff]
    %v2003 = vld [vmem:[#allocation6 + $0x178] sm:$0xff]
    %v2004 = vld [vmem:[#allocation6 + $0x180] sm:$0xff]
    %v2005 = vld [vmem:[#allocation6 + $0x188] sm:$0xff]
    %v2006 = vld [vmem:[#allocation6 + $0x190] sm:$0xff]
    %v2007 = vld [vmem:[#allocation6 + $0x198] sm:$0xff]
    %v2008 = vld [vmem:[#allocation6 + $0x1a0] sm:$0xff]
    %v2009 = vld [vmem:[#allocation6 + $0x1a8] sm:$0xff]
    %v2010 = vld [vmem:[#allocation6 + $0x1b0] sm:$0xff]
    %v2011 = vld [vmem:[#allocation6 + $0x1b8] sm:$0xff]
    %v2012 = vld [vmem:[#allocation6 + $0x1c0] sm:$0xff]
    %v2013 = vld [vmem:[#allocation6 + $0x1c8] sm:$0xff]
    %v2014 = vld [vmem:[#allocation6 + $0x1d0] sm:$0xff]
    %v2015 = vld [vmem:[#allocation6 + $0x1d8] sm:$0xff]
    %v2016 = vld [vmem:[#allocation6 + $0x1e0] sm:$0xff]
    %v2017 = vld [vmem:[#allocation6 + $0x1e8] sm:$0xff]
    %v2018 = vld [vmem:[#allocation6 + $0x1f0] sm:$0xff]
    %v2019 = vld [vmem:[#allocation6 + $0x1f8] sm:$0xff]
    %v2020 = vld [vmem:[#allocation6 + $0x200] sm:$0xff]
    %v2021 = vld [vmem:[#allocation6 + $0x208] sm:$0xff]
    %v2022 = vld [vmem:[#allocation6 + $0x210] sm:$0xff]
    %v2023 = vld [vmem:[#allocation6 + $0x218] sm:$0xff]
    %v2024 = vld [vmem:[#allocation6 + $0x220] sm:$0xff]
    %v2025 = vld [vmem:[#allocation6 + $0x228] sm:$0xff]
    %v2026 = vld [vmem:[#allocation6 + $0x230] sm:$0xff]
    %v2027 = vld [vmem:[#allocation6 + $0x238] sm:$0xff]
    %v2028 = vld [vmem:[#allocation6 + $0x240] sm:$0xff]
    %v2029 = vld [vmem:[#allocation6 + $0x248] sm:$0xff]
    %v2030 = vld [vmem:[#allocation6 + $0x250] sm:$0xff]
    %v2031 = vld [vmem:[#allocation6 + $0x258] sm:$0xff]
    %v2032 = vld [vmem:[#allocation6 + $0x260] sm:$0xff]
    %v2033 = vld [vmem:[#allocation6 + $0x268] sm:$0xff]
    %v2034 = vld [vmem:[#allocation6 + $0x270] sm:$0xff]
    %v2035 = vld [vmem:[#allocation6 + $0x278] sm:$0xff]
    %v2036 = vld [vmem:[#allocation6 + $0x280] sm:$0xff]
    %v2037 = vld [vmem:[#allocation6 + $0x288] sm:$0xff]
    %v2038 = vld [vmem:[#allocation6 + $0x290] sm:$0xff]
    %v2039 = vld [vmem:[#allocation6 + $0x298] sm:$0xff]
    %v2040 = vld [vmem:[#allocation6 + $0x2a0] sm:$0xff]
    %v2041 = vld [vmem:[#allocation6 + $0x2a8] sm:$0xff]
    %v2042 = vld [vmem:[#allocation6 + $0x2b0] sm:$0xff]
    %v2043 = vld [vmem:[#allocation6 + $0x2b8] sm:$0xff]
    %v2044 = vld [vmem:[#allocation6 + $0x2c0] sm:$0xff]
    %v2045 = vld [vmem:[#allocation6 + $0x2c8] sm:$0xff]
    %v2046 = vld [vmem:[#allocation6 + $0x2d0] sm:$0xff]
    %v2047 = vld [vmem:[#allocation6 + $0x2d8] sm:$0xff]
    %v2048 = vld [vmem:[#allocation6 + $0x2e0] sm:$0xff]
    %v2049 = vld [vmem:[#allocation6 + $0x2e8] sm:$0xff]
    %v2050 = vld [vmem:[#allocation6 + $0x2f0] sm:$0xff]
    %v2051 = vld [vmem:[#allocation6 + $0x2f8] sm:$0xff]
    %v2052 = vld [vmem:[%s4] sm:$0x3]
    %v2054 = vlaneseq
    %v2055 = vshrl.u32 %v2054, 7
    %v2056 = vsub.s32 0, %v2055
    %v2057 = vrot.slane %v2052, %v2056
    %v2058 = vlaneseq
    %v2059 = vshrl.u32 %v2058, 7
    %v2060 = vsub.s32 1, %v2059
    %v2061 = vrot.slane %v2052, %v2060
    %v2160 = vunpack.c.l.b16 %v1956
    %v2161 = vunpack.c.h.b16 %v1956
    %v2162 = vunpack.c.l.b16 %v1957
    %v2163 = vunpack.c.h.b16 %v1957
    %v2164 = vunpack.c.l.b16 %v1958
    %v2165 = vunpack.c.h.b16 %v1958
    %v2166 = vunpack.c.l.b16 %v1959
    %v2167 = vunpack.c.h.b16 %v1959
    %v2168 = vunpack.c.l.b16 %v1960
    %v2169 = vunpack.c.h.b16 %v1960
    %v2170 = vunpack.c.l.b16 %v1961
    %v2171 = vunpack.c.h.b16 %v1961
    %v2172 = vunpack.c.l.b16 %v1962
    %v2173 = vunpack.c.h.b16 %v1962
    %v2174 = vunpack.c.l.b16 %v1963
    %v2175 = vunpack.c.h.b16 %v1963
    %v2176 = vunpack.c.l.b16 %v1964
    %v2177 = vunpack.c.h.b16 %v1964
    %v2178 = vunpack.c.l.b16 %v1965
    %v2179 = vunpack.c.h.b16 %v1965
    %v2180 = vunpack.c.l.b16 %v1966
    %v2181 = vunpack.c.h.b16 %v1966
    %v2182 = vunpack.c.l.b16 %v1967
    %v2183 = vunpack.c.h.b16 %v1967
    %v2184 = vunpack.c.l.b16 %v1968
    %v2185 = vunpack.c.h.b16 %v1968
    %v2186 = vunpack.c.l.b16 %v1969
    %v2187 = vunpack.c.h.b16 %v1969
    %v2188 = vunpack.c.l.b16 %v1970
    %v2189 = vunpack.c.h.b16 %v1970
    %v2190 = vunpack.c.l.b16 %v1971
    %v2191 = vunpack.c.h.b16 %v1971
    %v2192 = vunpack.c.l.b16 %v1972
    %v2193 = vunpack.c.h.b16 %v1972
    %v2194 = vunpack.c.l.b16 %v1973
    %v2195 = vunpack.c.h.b16 %v1973
    %v2196 = vunpack.c.l.b16 %v1974
    %v2197 = vunpack.c.h.b16 %v1974
    %v2198 = vunpack.c.l.b16 %v1975
    %v2199 = vunpack.c.h.b16 %v1975
    %v2200 = vunpack.c.l.b16 %v1976
    %v2201 = vunpack.c.h.b16 %v1976
    %v2202 = vunpack.c.l.b16 %v1977
    %v2203 = vunpack.c.h.b16 %v1977
    %v2204 = vunpack.c.l.b16 %v1978
    %v2205 = vunpack.c.h.b16 %v1978
    %v2206 = vunpack.c.l.b16 %v1979
    %v2207 = vunpack.c.h.b16 %v1979
    %v2208 = vunpack.c.l.b16 %v1980
    %v2209 = vunpack.c.h.b16 %v1980
    %v2210 = vunpack.c.l.b16 %v1981
    %v2211 = vunpack.c.h.b16 %v1981
    %v2212 = vunpack.c.l.b16 %v1982
    %v2213 = vunpack.c.h.b16 %v1982
    %v2214 = vunpack.c.l.b16 %v1983
    %v2215 = vunpack.c.h.b16 %v1983
    %v2216 = vunpack.c.l.b16 %v1984
    %v2217 = vunpack.c.h.b16 %v1984
    %v2218 = vunpack.c.l.b16 %v1985
    %v2219 = vunpack.c.h.b16 %v1985
    %v2220 = vunpack.c.l.b16 %v1986
    %v2221 = vunpack.c.h.b16 %v1986
    %v2222 = vunpack.c.l.b16 %v1987
    %v2223 = vunpack.c.h.b16 %v1987
    %v2224 = vunpack.c.l.b16 %v1988
    %v2225 = vunpack.c.h.b16 %v1988
    %v2226 = vunpack.c.l.b16 %v1989
    %v2227 = vunpack.c.h.b16 %v1989
    %v2228 = vunpack.c.l.b16 %v1990
    %v2229 = vunpack.c.h.b16 %v1990
    %v2230 = vunpack.c.l.b16 %v1991
    %v2231 = vunpack.c.h.b16 %v1991
    %v2232 = vunpack.c.l.b16 %v1992
    %v2233 = vunpack.c.h.b16 %v1992
    %v2234 = vunpack.c.l.b16 %v1993
    %v2235 = vunpack.c.h.b16 %v1993
    %v2236 = vunpack.c.l.b16 %v1994
    %v2237 = vunpack.c.h.b16 %v1994
    %v2238 = vunpack.c.l.b16 %v1995
    %v2239 = vunpack.c.h.b16 %v1995
    %v2240 = vunpack.c.l.b16 %v1996
    %v2241 = vunpack.c.h.b16 %v1996
    %v2242 = vunpack.c.l.b16 %v1997
    %v2243 = vunpack.c.h.b16 %v1997
    %v2244 = vunpack.c.l.b16 %v1998
    %v2245 = vunpack.c.h.b16 %v1998
    %v2246 = vunpack.c.l.b16 %v1999
    %v2247 = vunpack.c.h.b16 %v1999
    %v2248 = vunpack.c.l.b16 %v2000
    %v2249 = vunpack.c.h.b16 %v2000
    %v2250 = vunpack.c.l.b16 %v2001
    %v2251 = vunpack.c.h.b16 %v2001
    %v2252 = vunpack.c.l.b16 %v2002
    %v2253 = vunpack.c.h.b16 %v2002
    %v2254 = vunpack.c.l.b16 %v2003
    %v2255 = vunpack.c.h.b16 %v2003
    %v2256 = vunpack.c.l.b16 %v2004
    %v2257 = vunpack.c.h.b16 %v2004
    %v2258 = vunpack.c.l.b16 %v2005
    %v2259 = vunpack.c.h.b16 %v2005
    %v2260 = vunpack.c.l.b16 %v2006
    %v2261 = vunpack.c.h.b16 %v2006
    %v2262 = vunpack.c.l.b16 %v2007
    %v2263 = vunpack.c.h.b16 %v2007
    %v2264 = vunpack.c.l.b16 %v2008
    %v2265 = vunpack.c.h.b16 %v2008
    %v2266 = vunpack.c.l.b16 %v2009
    %v2267 = vunpack.c.h.b16 %v2009
    %v2268 = vunpack.c.l.b16 %v2010
    %v2269 = vunpack.c.h.b16 %v2010
    %v2270 = vunpack.c.l.b16 %v2011
    %v2271 = vunpack.c.h.b16 %v2011
    %v2272 = vunpack.c.l.b16 %v2012
    %v2273 = vunpack.c.h.b16 %v2012
    %v2274 = vunpack.c.l.b16 %v2013
    %v2275 = vunpack.c.h.b16 %v2013
    %v2276 = vunpack.c.l.b16 %v2014
    %v2277 = vunpack.c.h.b16 %v2014
    %v2278 = vunpack.c.l.b16 %v2015
    %v2279 = vunpack.c.h.b16 %v2015
    %v2280 = vunpack.c.l.b16 %v2016
    %v2281 = vunpack.c.h.b16 %v2016
    %v2282 = vunpack.c.l.b16 %v2017
    %v2283 = vunpack.c.h.b16 %v2017
    %v2284 = vunpack.c.l.b16 %v2018
    %v2285 = vunpack.c.h.b16 %v2018
    %v2286 = vunpack.c.l.b16 %v2019
    %v2287 = vunpack.c.h.b16 %v2019
    %v2288 = vunpack.c.l.b16 %v2020
    %v2289 = vunpack.c.h.b16 %v2020
    %v2290 = vunpack.c.l.b16 %v2021
    %v2291 = vunpack.c.h.b16 %v2021
    %v2292 = vunpack.c.l.b16 %v2022
    %v2293 = vunpack.c.h.b16 %v2022
    %v2294 = vunpack.c.l.b16 %v2023
    %v2295 = vunpack.c.h.b16 %v2023
    %v2296 = vunpack.c.l.b16 %v2024
    %v2297 = vunpack.c.h.b16 %v2024
    %v2298 = vunpack.c.l.b16 %v2025
    %v2299 = vunpack.c.h.b16 %v2025
    %v2300 = vunpack.c.l.b16 %v2026
    %v2301 = vunpack.c.h.b16 %v2026
    %v2302 = vunpack.c.l.b16 %v2027
    %v2303 = vunpack.c.h.b16 %v2027
    %v2304 = vunpack.c.l.b16 %v2028
    %v2305 = vunpack.c.h.b16 %v2028
    %v2306 = vunpack.c.l.b16 %v2029
    %v2307 = vunpack.c.h.b16 %v2029
    %v2308 = vunpack.c.l.b16 %v2030
    %v2309 = vunpack.c.h.b16 %v2030
    %v2310 = vunpack.c.l.b16 %v2031
    %v2311 = vunpack.c.h.b16 %v2031
    %v2312 = vunpack.c.l.b16 %v2032
    %v2313 = vunpack.c.h.b16 %v2032
    %v2314 = vunpack.c.l.b16 %v2033
    %v2315 = vunpack.c.h.b16 %v2033
    %v2316 = vunpack.c.l.b16 %v2034
    %v2317 = vunpack.c.h.b16 %v2034
    %v2318 = vunpack.c.l.b16 %v2035
    %v2319 = vunpack.c.h.b16 %v2035
    %v2320 = vunpack.c.l.b16 %v2036
    %v2321 = vunpack.c.h.b16 %v2036
    %v2322 = vunpack.c.l.b16 %v2037
    %v2323 = vunpack.c.h.b16 %v2037
    %v2324 = vunpack.c.l.b16 %v2038
    %v2325 = vunpack.c.h.b16 %v2038
    %v2326 = vunpack.c.l.b16 %v2039
    %v2327 = vunpack.c.h.b16 %v2039
    %v2328 = vunpack.c.l.b16 %v2040
    %v2329 = vunpack.c.h.b16 %v2040
    %v2330 = vunpack.c.l.b16 %v2041
    %v2331 = vunpack.c.h.b16 %v2041
    %v2332 = vunpack.c.l.b16 %v2042
    %v2333 = vunpack.c.h.b16 %v2042
    %v2334 = vunpack.c.l.b16 %v2043
    %v2335 = vunpack.c.h.b16 %v2043
    %v2336 = vunpack.c.l.b16 %v2044
    %v2337 = vunpack.c.h.b16 %v2044
    %v2338 = vunpack.c.l.b16 %v2045
    %v2339 = vunpack.c.h.b16 %v2045
    %v2340 = vunpack.c.l.b16 %v2046
    %v2341 = vunpack.c.h.b16 %v2046
    %v2342 = vunpack.c.l.b16 %v2047
    %v2343 = vunpack.c.h.b16 %v2047
    %v2344 = vunpack.c.l.b16 %v2048
    %v2345 = vunpack.c.h.b16 %v2048
    %v2346 = vunpack.c.l.b16 %v2049
    %v2347 = vunpack.c.h.b16 %v2049
    %v2348 = vunpack.c.l.b16 %v2050
    %v2349 = vunpack.c.h.b16 %v2050
    %v2350 = vunpack.c.l.b16 %v2051
    %v2351 = vunpack.c.h.b16 %v2051
    %v2352 = vpack.c.b16 %v2162, %v2160
    %v2353 = vpack.c.b16 %v2163, %v2161
    %v2354 = vpack.c.b16 %v2166, %v2164
    %v2355 = vpack.c.b16 %v2167, %v2165
    %v2356 = vpack.c.b16 %v2170, %v2168
    %v2357 = vpack.c.b16 %v2171, %v2169
    %v2358 = vpack.c.b16 %v2174, %v2172
    %v2359 = vpack.c.b16 %v2175, %v2173
    %v2360 = vpack.c.b16 %v2178, %v2176
    %v2361 = vpack.c.b16 %v2179, %v2177
    %v2362 = vpack.c.b16 %v2182, %v2180
    %v2363 = vpack.c.b16 %v2183, %v2181
    %v2364 = vpack.c.b16 %v2186, %v2184
    %v2365 = vpack.c.b16 %v2187, %v2185
    %v2366 = vpack.c.b16 %v2190, %v2188
    %v2367 = vpack.c.b16 %v2191, %v2189
    %v2368 = vpack.c.b16 %v2194, %v2192
    %v2369 = vpack.c.b16 %v2195, %v2193
    %v2370 = vpack.c.b16 %v2198, %v2196
    %v2371 = vpack.c.b16 %v2199, %v2197
    %v2372 = vpack.c.b16 %v2202, %v2200
    %v2373 = vpack.c.b16 %v2203, %v2201
    %v2374 = vpack.c.b16 %v2206, %v2204
    %v2375 = vpack.c.b16 %v2207, %v2205
    %v2376 = vpack.c.b16 %v2210, %v2208
    %v2377 = vpack.c.b16 %v2211, %v2209
    %v2378 = vpack.c.b16 %v2214, %v2212
    %v2379 = vpack.c.b16 %v2215, %v2213
    %v2380 = vpack.c.b16 %v2218, %v2216
    %v2381 = vpack.c.b16 %v2219, %v2217
    %v2382 = vpack.c.b16 %v2222, %v2220
    %v2383 = vpack.c.b16 %v2223, %v2221
    %v2384 = vpack.c.b16 %v2226, %v2224
    %v2385 = vpack.c.b16 %v2227, %v2225
    %v2386 = vpack.c.b16 %v2230, %v2228
    %v2387 = vpack.c.b16 %v2231, %v2229
    %v2388 = vpack.c.b16 %v2234, %v2232
    %v2389 = vpack.c.b16 %v2235, %v2233
    %v2390 = vpack.c.b16 %v2238, %v2236
    %v2391 = vpack.c.b16 %v2239, %v2237
    %v2392 = vpack.c.b16 %v2242, %v2240
    %v2393 = vpack.c.b16 %v2243, %v2241
    %v2394 = vpack.c.b16 %v2246, %v2244
    %v2395 = vpack.c.b16 %v2247, %v2245
    %v2396 = vpack.c.b16 %v2250, %v2248
    %v2397 = vpack.c.b16 %v2251, %v2249
    %v2398 = vpack.c.b16 %v2254, %v2252
    %v2399 = vpack.c.b16 %v2255, %v2253
    %v2400 = vpack.c.b16 %v2258, %v2256
    %v2401 = vpack.c.b16 %v2259, %v2257
    %v2402 = vpack.c.b16 %v2262, %v2260
    %v2403 = vpack.c.b16 %v2263, %v2261
    %v2404 = vpack.c.b16 %v2266, %v2264
    %v2405 = vpack.c.b16 %v2267, %v2265
    %v2406 = vpack.c.b16 %v2270, %v2268
    %v2407 = vpack.c.b16 %v2271, %v2269
    %v2408 = vpack.c.b16 %v2274, %v2272
    %v2409 = vpack.c.b16 %v2275, %v2273
    %v2410 = vpack.c.b16 %v2278, %v2276
    %v2411 = vpack.c.b16 %v2279, %v2277
    %v2412 = vpack.c.b16 %v2282, %v2280
    %v2413 = vpack.c.b16 %v2283, %v2281
    %v2414 = vpack.c.b16 %v2286, %v2284
    %v2415 = vpack.c.b16 %v2287, %v2285
    %v2416 = vpack.c.b16 %v2290, %v2288
    %v2417 = vpack.c.b16 %v2291, %v2289
    %v2418 = vpack.c.b16 %v2294, %v2292
    %v2419 = vpack.c.b16 %v2295, %v2293
    %v2420 = vpack.c.b16 %v2298, %v2296
    %v2421 = vpack.c.b16 %v2299, %v2297
    %v2422 = vpack.c.b16 %v2302, %v2300
    %v2423 = vpack.c.b16 %v2303, %v2301
    %v2424 = vpack.c.b16 %v2306, %v2304
    %v2425 = vpack.c.b16 %v2307, %v2305
    %v2426 = vpack.c.b16 %v2310, %v2308
    %v2427 = vpack.c.b16 %v2311, %v2309
    %v2428 = vpack.c.b16 %v2314, %v2312
    %v2429 = vpack.c.b16 %v2315, %v2313
    %v2430 = vpack.c.b16 %v2318, %v2316
    %v2431 = vpack.c.b16 %v2319, %v2317
    %v2432 = vpack.c.b16 %v2322, %v2320
    %v2433 = vpack.c.b16 %v2323, %v2321
    %v2434 = vpack.c.b16 %v2326, %v2324
    %v2435 = vpack.c.b16 %v2327, %v2325
    %v2436 = vpack.c.b16 %v2330, %v2328
    %v2437 = vpack.c.b16 %v2331, %v2329
    %v2438 = vpack.c.b16 %v2334, %v2332
    %v2439 = vpack.c.b16 %v2335, %v2333
    %v2440 = vpack.c.b16 %v2338, %v2336
    %v2441 = vpack.c.b16 %v2339, %v2337
    %v2442 = vpack.c.b16 %v2342, %v2340
    %v2443 = vpack.c.b16 %v2343, %v2341
    %v2444 = vpack.c.b16 %v2346, %v2344
    %v2445 = vpack.c.b16 %v2347, %v2345
    %v2446 = vpack.c.b16 %v2350, %v2348
    %v2447 = vpack.c.b16 %v2351, %v2349
    %2544 = vmatprep.subr.bf16.mxu0 %v2353
    %2545 = vmatpush1.bf16.msra.mxu0 %v2352
    %2546 = vmatprep.subr.bf16.mxu0 %v2355
    %2547 = vmatpush1.bf16.msra.mxu0 %v2354
    %2548 = vmatprep.subr.bf16.mxu0 %v2357
    %2549 = vmatpush1.bf16.msra.mxu0 %v2356
    %2550 = vmatprep.subr.bf16.mxu0 %v2359
    %2551 = vmatpush1.bf16.msra.mxu0 %v2358
    %2552 = vmatprep.subr.bf16.mxu0 %v2361
    %2553 = vmatpush1.bf16.msra.mxu0 %v2360
    %2554 = vmatprep.subr.bf16.mxu0 %v2363
    %2555 = vmatpush1.bf16.msra.mxu0 %v2362
    %2556 = vmatprep.subr.bf16.mxu0 %v2365
    %2557 = vmatpush1.bf16.msra.mxu0 %v2364
    %2558 = vmatprep.subr.bf16.mxu0 %v2367
    %2559 = vmatpush1.bf16.msra.mxu0 %v2366
    %2560 = vmatprep.subr.bf16.mxu0 %v2369
    %2561 = vmatpush1.bf16.msra.mxu0 %v2368
    %2562 = vmatprep.subr.bf16.mxu0 %v2371
    %2563 = vmatpush1.bf16.msra.mxu0 %v2370
    %2564 = vmatprep.subr.bf16.mxu0 %v2373
    %2565 = vmatpush1.bf16.msra.mxu0 %v2372
    %2566 = vmatprep.subr.bf16.mxu0 %v2375
    %2567 = vmatpush1.bf16.msra.mxu0 %v2374
    %2568 = vmatprep.subr.bf16.mxu0 %v2377
    %2569 = vmatpush1.bf16.msra.mxu0 %v2376
    %2570 = vmatprep.subr.bf16.mxu0 %v2379
    %2571 = vmatpush1.bf16.msra.mxu0 %v2378
    %2572 = vmatprep.subr.bf16.mxu0 %v2381
    %2573 = vmatpush1.bf16.msra.mxu0 %v2380
    %2574 = vmatprep.subr.bf16.mxu0 %v2383
    %2575 = vmatpush1.bf16.msra.mxu0 %v2382
    %2576 = vmatprep.mubr.bf16.mxu0 %v1909
    %2577 = vmatmul.mubr.bf16.gmra.mrb[0].mxu0 %v1908
    %v2578 = vpop.f32.mrb[0].mxu0
    %v2579 = vadd.f32 %v2057, %v2578
    %v2580 = vpop.f32.mrb[0].mxu0
    %v2581 = vadd.f32 %v2061, %v2580
    %v2582 = vpop.f32.mrb[0].mxu0
    %v2583 = vadd.f32 %v2057, %v2582
    %v2584 = vpop.f32.mrb[0].mxu0
    %v2585 = vadd.f32 %v2061, %v2584
    %2586 = vmatprep.mubr.bf16.mxu0 %v1915
    %2587 = vmatmul.mubr.bf16.gmra.mrb[0].mxu0 %v1914
    %v2588 = vpop.f32.mrb[0].mxu0
    %v2589 = vadd.f32 %v2057, %v2588
    %v2590 = vpop.f32.mrb[0].mxu0
    %v2591 = vadd.f32 %v2061, %v2590
    %v2592 = vpop.f32.mrb[0].mxu0
    %v2593 = vadd.f32 %v2057, %v2592
    %v2594 = vpop.f32.mrb[0].mxu0
    %v2595 = vadd.f32 %v2061, %v2594
    %2596 = vmatprep.mubr.bf16.mxu0 %v1921
    %2597 = vmatmul.mubr.bf16.gmra.mrb[0].mxu0 %v1920
    %v2598 = vpop.f32.mrb[0].mxu0
    %v2599 = vadd.f32 %v2057, %v2598
    %v2600 = vpop.f32.mrb[0].mxu0
    %v2601 = vadd.f32 %v2061, %v2600
    %v2602 = vpop.f32.mrb[0].mxu0
    %v2603 = vadd.f32 %v2057, %v2602
    %v2604 = vpop.f32.mrb[0].mxu0
    %v2605 = vadd.f32 %v2061, %v2604
    %2606 = vmatprep.mubr.bf16.mxu0 %v1927
    %2607 = vmatmul.mubr.bf16.gmra.mrb[0].mxu0 %v1926
    %v2608 = vpop.f32.mrb[0].mxu0
    %v2609 = vadd.f32 %v2057, %v2608
    %v2610 = vpop.f32.mrb[0].mxu0
    %v2611 = vadd.f32 %v2061, %v2610
    %v2612 = vpop.f32.mrb[0].mxu0
    %v2613 = vadd.f32 %v2057, %v2612
    %v2614 = vpop.f32.mrb[0].mxu0
    %v2615 = vadd.f32 %v2061, %v2614
    %2616 = vmatprep.mubr.bf16.mxu0 %v1933
    %2617 = vmatmul.mubr.bf16.gmra.mrb[0].mxu0 %v1932
    %v2618 = vpop.f32.mrb[0].mxu0
    %v2619 = vadd.f32 %v2057, %v2618
    %v2620 = vpop.f32.mrb[0].mxu0
    %v2621 = vadd.f32 %v2061, %v2620
    %v2622 = vpop.f32.mrb[0].mxu0
    %v2623 = vadd.f32 %v2057, %v2622
    %v2624 = vpop.f32.mrb[0].mxu0
    %v2625 = vadd.f32 %v2061, %v2624
    %2626 = vmatprep.mubr.bf16.mxu0 %v1939
    %2627 = vmatmul.mubr.bf16.gmra.mrb[0].mxu0 %v1938
    %v2628 = vpop.f32.mrb[0].mxu0
    %v2629 = vadd.f32 %v2057, %v2628
    %v2630 = vpop.f32.mrb[0].mxu0
    %v2631 = vadd.f32 %v2061, %v2630
    %v2632 = vpop.f32.mrb[0].mxu0
    %v2633 = vadd.f32 %v2057, %v2632
    %v2634 = vpop.f32.mrb[0].mxu0
    %v2635 = vadd.f32 %v2061, %v2634
    %2636 = vmatprep.mubr.bf16.mxu0 %v1945
    %2637 = vmatmul.mubr.bf16.gmra.mrb[0].mxu0 %v1944
    %v2638 = vpop.f32.mrb[0].mxu0
    %v2639 = vadd.f32 %v2057, %v2638
    %v2640 = vpop.f32.mrb[0].mxu0
    %v2641 = vadd.f32 %v2061, %v2640
    %v2642 = vpop.f32.mrb[0].mxu0
    %v2643 = vadd.f32 %v2057, %v2642
    %v2644 = vpop.f32.mrb[0].mxu0
    %v2645 = vadd.f32 %v2061, %v2644
    %2646 = vmatprep.mubr.bf16.mxu0 %v1951
    %2647 = vmatmul.mubr.bf16.gmra.mrb[0].mxu0 %v1950
    %v2648 = vpop.f32.mrb[0].mxu0
    %v2649 = vadd.f32 %v2057, %v2648
    %v2650 = vpop.f32.mrb[0].mxu0
    %v2651 = vadd.f32 %v2061, %v2650
    %v2652 = vpop.f32.mrb[0].mxu0
    %v2653 = vadd.f32 %v2057, %v2652
    %v2654 = vpop.f32.mrb[0].mxu0
    %v2655 = vadd.f32 %v2061, %v2654
    %2656 = vdwg.mxu0
    %2657 = vmatprep.subr.bf16.mxu0 %v2385
    %2658 = vmatpush1.bf16.msra.mxu0 %v2384
    %2659 = vmatprep.subr.bf16.mxu0 %v2387
    %2660 = vmatpush1.bf16.msra.mxu0 %v2386
    %2661 = vmatprep.subr.bf16.mxu0 %v2389
    %2662 = vmatpush1.bf16.msra.mxu0 %v2388
    %2663 = vmatprep.subr.bf16.mxu0 %v2391
    %2664 = vmatpush1.bf16.msra.mxu0 %v2390
    %2665 = vmatprep.subr.bf16.mxu0 %v2393
    %2666 = vmatpush1.bf16.msra.mxu0 %v2392
    %2667 = vmatprep.subr.bf16.mxu0 %v2395
    %2668 = vmatpush1.bf16.msra.mxu0 %v2394
    %2669 = vmatprep.subr.bf16.mxu0 %v2397
    %2670 = vmatpush1.bf16.msra.mxu0 %v2396
    %2671 = vmatprep.subr.bf16.mxu0 %v2399
    %2672 = vmatpush1.bf16.msra.mxu0 %v2398
    %2673 = vmatprep.subr.bf16.mxu0 %v2401
    %2674 = vmatpush1.bf16.msra.mxu0 %v2400
    %2675 = vmatprep.subr.bf16.mxu0 %v2403
    %2676 = vmatpush1.bf16.msra.mxu0 %v2402
    %2677 = vmatprep.subr.bf16.mxu0 %v2405
    %2678 = vmatpush1.bf16.msra.mxu0 %v2404
    %2679 = vmatprep.subr.bf16.mxu0 %v2407
    %2680 = vmatpush1.bf16.msra.mxu0 %v2406
    %2681 = vmatprep.subr.bf16.mxu0 %v2409
    %2682 = vmatpush1.bf16.msra.mxu0 %v2408
    %2683 = vmatprep.subr.bf16.mxu0 %v2411
    %2684 = vmatpush1.bf16.msra.mxu0 %v2410
    %2685 = vmatprep.subr.bf16.mxu0 %v2413
    %2686 = vmatpush1.bf16.msra.mxu0 %v2412
    %2687 = vmatprep.subr.bf16.mxu0 %v2415
    %2688 = vmatpush1.bf16.msra.mxu0 %v2414
    %2689 = vmatprep.mubr.bf16.mxu0 %v1911
    %2690 = vmatmul.mubr.bf16.gmra.mrb[0].mxu0 %v1910
    %v2691 = vpop.f32.mrb[0].mxu0
    %v2692 = vadd.f32 %v2579, %v2691
    %v2693 = vpop.f32.mrb[0].mxu0
    %v2694 = vadd.f32 %v2581, %v2693
    %v2695 = vpop.f32.mrb[0].mxu0
    %v2696 = vadd.f32 %v2583, %v2695
    %v2697 = vpop.f32.mrb[0].mxu0
    %v2698 = vadd.f32 %v2585, %v2697
    %2699 = vmatprep.mubr.bf16.mxu0 %v1917
    %2700 = vmatmul.mubr.bf16.gmra.mrb[0].mxu0 %v1916
    %v2701 = vpop.f32.mrb[0].mxu0
    %v2702 = vadd.f32 %v2589, %v2701
    %v2703 = vpop.f32.mrb[0].mxu0
    %v2704 = vadd.f32 %v2591, %v2703
    %v2705 = vpop.f32.mrb[0].mxu0
    %v2706 = vadd.f32 %v2593, %v2705
    %v2707 = vpop.f32.mrb[0].mxu0
    %v2708 = vadd.f32 %v2595, %v2707
    %2709 = vmatprep.mubr.bf16.mxu0 %v1923
    %2710 = vmatmul.mubr.bf16.gmra.mrb[0].mxu0 %v1922
    %v2711 = vpop.f32.mrb[0].mxu0
    %v2712 = vadd.f32 %v2599, %v2711
    %v2713 = vpop.f32.mrb[0].mxu0
    %v2714 = vadd.f32 %v2601, %v2713
    %v2715 = vpop.f32.mrb[0].mxu0
    %v2716 = vadd.f32 %v2603, %v2715
    %v2717 = vpop.f32.mrb[0].mxu0
    %v2718 = vadd.f32 %v2605, %v2717
    %2719 = vmatprep.mubr.bf16.mxu0 %v1929
    %2720 = vmatmul.mubr.bf16.gmra.mrb[0].mxu0 %v1928
    %v2721 = vpop.f32.mrb[0].mxu0
    %v2722 = vadd.f32 %v2609, %v2721
    %v2723 = vpop.f32.mrb[0].mxu0
    %v2724 = vadd.f32 %v2611, %v2723
    %v2725 = vpop.f32.mrb[0].mxu0
    %v2726 = vadd.f32 %v2613, %v2725
    %v2727 = vpop.f32.mrb[0].mxu0
    %v2728 = vadd.f32 %v2615, %v2727
    %2729 = vmatprep.mubr.bf16.mxu0 %v1935
    %2730 = vmatmul.mubr.bf16.gmra.mrb[0].mxu0 %v1934
    %v2731 = vpop.f32.mrb[0].mxu0
    %v2732 = vadd.f32 %v2619, %v2731
    %v2733 = vpop.f32.mrb[0].mxu0
    %v2734 = vadd.f32 %v2621, %v2733
    %v2735 = vpop.f32.mrb[0].mxu0
    %v2736 = vadd.f32 %v2623, %v2735
    %v2737 = vpop.f32.mrb[0].mxu0
    %v2738 = vadd.f32 %v2625, %v2737
    %2739 = vmatprep.mubr.bf16.mxu0 %v1941
    %2740 = vmatmul.mubr.bf16.gmra.mrb[0].mxu0 %v1940
    %v2741 = vpop.f32.mrb[0].mxu0
    %v2742 = vadd.f32 %v2629, %v2741
    %v2743 = vpop.f32.mrb[0].mxu0
    %v2744 = vadd.f32 %v2631, %v2743
    %v2745 = vpop.f32.mrb[0].mxu0
    %v2746 = vadd.f32 %v2633, %v2745
    %v2747 = vpop.f32.mrb[0].mxu0
    %v2748 = vadd.f32 %v2635, %v2747
    %2749 = vmatprep.mubr.bf16.mxu0 %v1947
    %2750 = vmatmul.mubr.bf16.gmra.mrb[0].mxu0 %v1946
    %v2751 = vpop.f32.mrb[0].mxu0
    %v2752 = vadd.f32 %v2639, %v2751
    %v2753 = vpop.f32.mrb[0].mxu0
    %v2754 = vadd.f32 %v2641, %v2753
    %v2755 = vpop.f32.mrb[0].mxu0
    %v2756 = vadd.f32 %v2643, %v2755
    %v2757 = vpop.f32.mrb[0].mxu0
    %v2758 = vadd.f32 %v2645, %v2757
    %2759 = vmatprep.mubr.bf16.mxu0 %v1953
    %2760 = vmatmul.mubr.bf16.gmra.mrb[0].mxu0 %v1952
    %v2761 = vpop.f32.mrb[0].mxu0
    %v2762 = vadd.f32 %v2649, %v2761
    %v2763 = vpop.f32.mrb[0].mxu0
    %v2764 = vadd.f32 %v2651, %v2763
    %v2765 = vpop.f32.mrb[0].mxu0
    %v2766 = vadd.f32 %v2653, %v2765
    %v2767 = vpop.f32.mrb[0].mxu0
    %v2768 = vadd.f32 %v2655, %v2767
    %2769 = vdwg.mxu0
    %2770 = vmatprep.subr.bf16.mxu0 %v2417
    %2771 = vmatpush1.bf16.msra.mxu0 %v2416
    %2772 = vmatprep.subr.bf16.mxu0 %v2419
    %2773 = vmatpush1.bf16.msra.mxu0 %v2418
    %2774 = vmatprep.subr.bf16.mxu0 %v2421
    %2775 = vmatpush1.bf16.msra.mxu0 %v2420
    %2776 = vmatprep.subr.bf16.mxu0 %v2423
    %2777 = vmatpush1.bf16.msra.mxu0 %v2422
    %2778 = vmatprep.subr.bf16.mxu0 %v2425
    %2779 = vmatpush1.bf16.msra.mxu0 %v2424
    %2780 = vmatprep.subr.bf16.mxu0 %v2427
    %2781 = vmatpush1.bf16.msra.mxu0 %v2426
    %2782 = vmatprep.subr.bf16.mxu0 %v2429
    %2783 = vmatpush1.bf16.msra.mxu0 %v2428
    %2784 = vmatprep.subr.bf16.mxu0 %v2431
    %2785 = vmatpush1.bf16.msra.mxu0 %v2430
    %2786 = vmatprep.subr.bf16.mxu0 %v2433
    %2787 = vmatpush1.bf16.msra.mxu0 %v2432
    %2788 = vmatprep.subr.bf16.mxu0 %v2435
    %2789 = vmatpush1.bf16.msra.mxu0 %v2434
    %2790 = vmatprep.subr.bf16.mxu0 %v2437
    %2791 = vmatpush1.bf16.msra.mxu0 %v2436
    %2792 = vmatprep.subr.bf16.mxu0 %v2439
    %2793 = vmatpush1.bf16.msra.mxu0 %v2438
    %2794 = vmatprep.subr.bf16.mxu0 %v2441
    %2795 = vmatpush1.bf16.msra.mxu0 %v2440
    %2796 = vmatprep.subr.bf16.mxu0 %v2443
    %2797 = vmatpush1.bf16.msra.mxu0 %v2442
    %2798 = vmatprep.subr.bf16.mxu0 %v2445
    %2799 = vmatpush1.bf16.msra.mxu0 %v2444
    %2800 = vmatprep.subr.bf16.mxu0 %v2447
    %2801 = vmatpush1.bf16.msra.mxu0 %v2446
    %2802 = vmatprep.mubr.bf16.mxu0 %v1913
    %2803 = vmatmul.mubr.bf16.gmra.mrb[0].mxu0 %v1912
    %v2804 = vpop.f32.mrb[0].mxu0
    %v2805 = vadd.f32 %v2692, %v2804
    %v2806 = vpop.f32.mrb[0].mxu0
    %v2807 = vadd.f32 %v2694, %v2806
    %v2808 = vpop.f32.mrb[0].mxu0
    %v2809 = vadd.f32 %v2696, %v2808
    %v2810 = vpop.f32.mrb[0].mxu0
    %v2811 = vadd.f32 %v2698, %v2810
    %2812 = vmatprep.mubr.bf16.mxu0 %v1919
    %2813 = vmatmul.mubr.bf16.gmra.mrb[0].mxu0 %v1918
    %v2814 = vpop.f32.mrb[0].mxu0
    %v2815 = vadd.f32 %v2702, %v2814
    %v2816 = vpop.f32.mrb[0].mxu0
    %v2817 = vadd.f32 %v2704, %v2816
    %v2818 = vpop.f32.mrb[0].mxu0
    %v2819 = vadd.f32 %v2706, %v2818
    %v2820 = vpop.f32.mrb[0].mxu0
    %v2821 = vadd.f32 %v2708, %v2820
    %2822 = vmatprep.mubr.bf16.mxu0 %v1925
    %2823 = vmatmul.mubr.bf16.gmra.mrb[0].mxu0 %v1924
    %v2824 = vpop.f32.mrb[0].mxu0
    %v2825 = vadd.f32 %v2712, %v2824
    %v2826 = vpop.f32.mrb[0].mxu0
    %v2827 = vadd.f32 %v2714, %v2826
    %v2828 = vpop.f32.mrb[0].mxu0
    %v2829 = vadd.f32 %v2716, %v2828
    %v2830 = vpop.f32.mrb[0].mxu0
    %v2831 = vadd.f32 %v2718, %v2830
    %2832 = vmatprep.mubr.bf16.mxu0 %v1931
    %2833 = vmatmul.mubr.bf16.gmra.mrb[0].mxu0 %v1930
    %v2834 = vpop.f32.mrb[0].mxu0
    %v2835 = vadd.f32 %v2722, %v2834
    %v2836 = vpop.f32.mrb[0].mxu0
    %v2837 = vadd.f32 %v2724, %v2836
    %v2838 = vpop.f32.mrb[0].mxu0
    %v2839 = vadd.f32 %v2726, %v2838
    %v2840 = vpop.f32.mrb[0].mxu0
    %v2841 = vadd.f32 %v2728, %v2840
    %2842 = vmatprep.mubr.bf16.mxu0 %v1937
    %2843 = vmatmul.mubr.bf16.gmra.mrb[0].mxu0 %v1936
    %v2844 = vpop.f32.mrb[0].mxu0
    %v2845 = vadd.f32 %v2732, %v2844
    %v2846 = vpop.f32.mrb[0].mxu0
    %v2847 = vadd.f32 %v2734, %v2846
    %v2848 = vpop.f32.mrb[0].mxu0
    %v2849 = vadd.f32 %v2736, %v2848
    %v2850 = vpop.f32.mrb[0].mxu0
    %v2851 = vadd.f32 %v2738, %v2850
    %2852 = vmatprep.mubr.bf16.mxu0 %v1943
    %2853 = vmatmul.mubr.bf16.gmra.mrb[0].mxu0 %v1942
    %v2854 = vpop.f32.mrb[0].mxu0
    %v2855 = vadd.f32 %v2742, %v2854
    %v2856 = vpop.f32.mrb[0].mxu0
    %v2857 = vadd.f32 %v2744, %v2856
    %v2858 = vpop.f32.mrb[0].mxu0
    %v2859 = vadd.f32 %v2746, %v2858
    %v2860 = vpop.f32.mrb[0].mxu0
    %v2861 = vadd.f32 %v2748, %v2860
    %2862 = vmatprep.mubr.bf16.mxu0 %v1949
    %2863 = vmatmul.mubr.bf16.gmra.mrb[0].mxu0 %v1948
    %v2864 = vpop.f32.mrb[0].mxu0
    %v2865 = vadd.f32 %v2752, %v2864
    %v2866 = vpop.f32.mrb[0].mxu0
    %v2867 = vadd.f32 %v2754, %v2866
    %v2868 = vpop.f32.mrb[0].mxu0
    %v2869 = vadd.f32 %v2756, %v2868
    %v2870 = vpop.f32.mrb[0].mxu0
    %v2871 = vadd.f32 %v2758, %v2870
    %2872 = vmatprep.mubr.bf16.mxu0 %v1955
    %2873 = vmatmul.mubr.bf16.gmra.mrb[0].mxu0 %v1954
    %v2874 = vpop.f32.mrb[0].mxu0
    %v2875 = vadd.f32 %v2762, %v2874
    %v2876 = vpop.f32.mrb[0].mxu0
    %v2877 = vadd.f32 %v2764, %v2876
    %v2878 = vpop.f32.mrb[0].mxu0
    %v2879 = vadd.f32 %v2766, %v2878
    %v2880 = vpop.f32.mrb[0].mxu0
    %v2881 = vadd.f32 %v2768, %v2880
    %2882 = vdwg.mxu0
    %v2883 = vmax.f32 %v2805, 0.0
    %v2884 = vmax.f32 %v2807, 0.0
    %v2885 = vmax.f32 %v2809, 0.0
    %v2886 = vmax.f32 %v2811, 0.0
    %v2887 = vmax.f32 %v2815, 0.0
    %v2888 = vmax.f32 %v2817, 0.0
    %v2889 = vmax.f32 %v2819, 0.0
    %v2890 = vmax.f32 %v2821, 0.0
    %v2891 = vmax.f32 %v2825, 0.0
    %v2892 = vmax.f32 %v2827, 0.0
    %v2893 = vmax.f32 %v2829, 0.0
    %v2894 = vmax.f32 %v2831, 0.0
    %v2895 = vmax.f32 %v2835, 0.0
    %v2896 = vmax.f32 %v2837, 0.0
    %v2897 = vmax.f32 %v2839, 0.0
    %v2898 = vmax.f32 %v2841, 0.0
    %v2899 = vmax.f32 %v2845, 0.0
    %v2900 = vmax.f32 %v2847, 0.0
    %v2901 = vmax.f32 %v2849, 0.0
    %v2902 = vmax.f32 %v2851, 0.0
    %v2903 = vmax.f32 %v2855, 0.0
    %v2904 = vmax.f32 %v2857, 0.0
    %v2905 = vmax.f32 %v2859, 0.0
    %v2906 = vmax.f32 %v2861, 0.0
    %v2907 = vmax.f32 %v2865, 0.0
    %v2908 = vmax.f32 %v2867, 0.0
    %v2909 = vmax.f32 %v2869, 0.0
    %v2910 = vmax.f32 %v2871, 0.0
    %v2911 = vmax.f32 %v2875, 0.0
    %v2912 = vmax.f32 %v2877, 0.0
    %v2913 = vmax.f32 %v2879, 0.0
    %v2914 = vmax.f32 %v2881, 0.0
    %2915 = vst [vmem:[#allocation3] sm:$0xff] %v2883
    %2916 = vst [vmem:[#allocation3 + $0x8] sm:$0xff] %v2884
    %2917 = vst [vmem:[#allocation3 + $0x10] sm:$0xff] %v2885
    %2918 = vst [vmem:[#allocation3 + $0x18] sm:$0xff] %v2886
    %2919 = vst [vmem:[#allocation3 + $0x20] sm:$0xff] %v2887
    %2920 = vst [vmem:[#allocation3 + $0x28] sm:$0xff] %v2888
    %2921 = vst [vmem:[#allocation3 + $0x30] sm:$0xff] %v2889
    %2922 = vst [vmem:[#allocation3 + $0x38] sm:$0xff] %v2890
    %2923 = vst [vmem:[#allocation3 + $0x40] sm:$0xff] %v2891
    %2924 = vst [vmem:[#allocation3 + $0x48] sm:$0xff] %v2892
    %2925 = vst [vmem:[#allocation3 + $0x50] sm:$0xff] %v2893
    %2926 = vst [vmem:[#allocation3 + $0x58] sm:$0xff] %v2894
    %2927 = vst [vmem:[#allocation3 + $0x60] sm:$0xff] %v2895
    %2928 = vst [vmem:[#allocation3 + $0x68] sm:$0xff] %v2896
    %2929 = vst [vmem:[#allocation3 + $0x70] sm:$0xff] %v2897
    %2930 = vst [vmem:[#allocation3 + $0x78] sm:$0xff] %v2898
    %2931 = vst [vmem:[#allocation3 + $0x80] sm:$0xff] %v2899
    %2932 = vst [vmem:[#allocation3 + $0x88] sm:$0xff] %v2900
    %2933 = vst [vmem:[#allocation3 + $0x90] sm:$0xff] %v2901
    %2934 = vst [vmem:[#allocation3 + $0x98] sm:$0xff] %v2902
    %2935 = vst [vmem:[#allocation3 + $0xa0] sm:$0xff] %v2903
    %2936 = vst [vmem:[#allocation3 + $0xa8] sm:$0xff] %v2904
    %2937 = vst [vmem:[#allocation3 + $0xb0] sm:$0xff] %v2905
    %2938 = vst [vmem:[#allocation3 + $0xb8] sm:$0xff] %v2906
    %2939 = vst [vmem:[#allocation3 + $0xc0] sm:$0xff] %v2907
    %2940 = vst [vmem:[#allocation3 + $0xc8] sm:$0xff] %v2908
    %2941 = vst [vmem:[#allocation3 + $0xd0] sm:$0xff] %v2909
    %2942 = vst [vmem:[#allocation3 + $0xd8] sm:$0xff] %v2910
    %2943 = vst [vmem:[#allocation3 + $0xe0] sm:$0xff] %v2911
    %2944 = vst [vmem:[#allocation3 + $0xe8] sm:$0xff] %v2912
    %2945 = vst [vmem:[#allocation3 + $0xf0] sm:$0xff] %v2913
    %2946 = vst [vmem:[#allocation3 + $0xf8] sm:$0xff] %v2914
    %v2947 = vld [vmem:[#allocation3] sm:$0xff]
    %v2948 = vld [vmem:[#allocation3 + $0x8] sm:$0xff]
    %v2949 = vld [vmem:[#allocation3 + $0x10] sm:$0xff]
    %v2950 = vld [vmem:[#allocation3 + $0x18] sm:$0xff]
    %v2951 = vld [vmem:[#allocation3 + $0x20] sm:$0xff]
    %v2952 = vld [vmem:[#allocation3 + $0x28] sm:$0xff]
    %v2953 = vld [vmem:[#allocation3 + $0x30] sm:$0xff]
    %v2954 = vld [vmem:[#allocation3 + $0x38] sm:$0xff]
    %v2955 = vld [vmem:[#allocation3 + $0x40] sm:$0xff]
    %v2956 = vld [vmem:[#allocation3 + $0x48] sm:$0xff]
    %v2957 = vld [vmem:[#allocation3 + $0x50] sm:$0xff]
    %v2958 = vld [vmem:[#allocation3 + $0x58] sm:$0xff]
    %v2959 = vld [vmem:[#allocation3 + $0x60] sm:$0xff]
    %v2960 = vld [vmem:[#allocation3 + $0x68] sm:$0xff]
    %v2961 = vld [vmem:[#allocation3 + $0x70] sm:$0xff]
    %v2962 = vld [vmem:[#allocation3 + $0x78] sm:$0xff]
    %v2963 = vld [vmem:[#allocation3 + $0x80] sm:$0xff]
    %v2964 = vld [vmem:[#allocation3 + $0x88] sm:$0xff]
    %v2965 = vld [vmem:[#allocation3 + $0x90] sm:$0xff]
    %v2966 = vld [vmem:[#allocation3 + $0x98] sm:$0xff]
    %v2967 = vld [vmem:[#allocation3 + $0xa0] sm:$0xff]
    %v2968 = vld [vmem:[#allocation3 + $0xa8] sm:$0xff]
    %v2969 = vld [vmem:[#allocation3 + $0xb0] sm:$0xff]
    %v2970 = vld [vmem:[#allocation3 + $0xb8] sm:$0xff]
    %v2971 = vld [vmem:[#allocation3 + $0xc0] sm:$0xff]
    %v2972 = vld [vmem:[#allocation3 + $0xc8] sm:$0xff]
    %v2973 = vld [vmem:[#allocation3 + $0xd0] sm:$0xff]
    %v2974 = vld [vmem:[#allocation3 + $0xd8] sm:$0xff]
    %v2975 = vld [vmem:[#allocation3 + $0xe0] sm:$0xff]
    %v2976 = vld [vmem:[#allocation3 + $0xe8] sm:$0xff]
    %v2977 = vld [vmem:[#allocation3 + $0xf0] sm:$0xff]
    %v2978 = vld [vmem:[#allocation3 + $0xf8] sm:$0xff]
    %v2979 = vld [vmem:[#allocation2] sm:$0xff]
    %v2980 = vld [vmem:[#allocation2 + $0x8] sm:$0xff]
    %v2981 = vld [vmem:[#allocation2 + $0x30] sm:$0xff]
    %v2982 = vld [vmem:[#allocation2 + $0x38] sm:$0xff]
    %v2983 = vld [vmem:[#allocation2 + $0x60] sm:$0xff]
    %v2984 = vld [vmem:[#allocation2 + $0x68] sm:$0xff]
    %v2985 = vld [vmem:[#allocation2 + $0x90] sm:$0xff]
    %v2986 = vld [vmem:[#allocation2 + $0x98] sm:$0xff]
    %v2987 = vld [vmem:[#allocation2 + $0xc0] sm:$0xff]
    %v2988 = vld [vmem:[#allocation2 + $0xc8] sm:$0xff]
    %v2989 = vld [vmem:[#allocation2 + $0xf0] sm:$0xff]
    %v2990 = vld [vmem:[#allocation2 + $0xf8] sm:$0xff]
    %v2991 = vld [vmem:[#allocation2 + $0x120] sm:$0xff]
    %v2992 = vld [vmem:[#allocation2 + $0x128] sm:$0xff]
    %v2993 = vld [vmem:[#allocation2 + $0x150] sm:$0xff]
    %v2994 = vld [vmem:[#allocation2 + $0x158] sm:$0xff]
    %v2995 = vunpack.c.l.bf16 %v2979
    %v2996 = vunpack.c.l.bf16 %v2980
    %v2997 = vunpack.c.h.bf16 %v2979
    %v2998 = vunpack.c.h.bf16 %v2980
    %v2999 = vunpack.c.l.bf16 %v2981
    %v3000 = vunpack.c.l.bf16 %v2982
    %v3001 = vunpack.c.h.bf16 %v2981
    %v3002 = vunpack.c.h.bf16 %v2982
    %v3003 = vunpack.c.l.bf16 %v2983
    %v3004 = vunpack.c.l.bf16 %v2984
    %v3005 = vunpack.c.h.bf16 %v2983
    %v3006 = vunpack.c.h.bf16 %v2984
    %v3007 = vunpack.c.l.bf16 %v2985
    %v3008 = vunpack.c.l.bf16 %v2986
    %v3009 = vunpack.c.h.bf16 %v2985
    %v3010 = vunpack.c.h.bf16 %v2986
    %v3011 = vunpack.c.l.bf16 %v2987
    %v3012 = vunpack.c.l.bf16 %v2988
    %v3013 = vunpack.c.h.bf16 %v2987
    %v3014 = vunpack.c.h.bf16 %v2988
    %v3015 = vunpack.c.l.bf16 %v2989
    %v3016 = vunpack.c.l.bf16 %v2990
    %v3017 = vunpack.c.h.bf16 %v2989
    %v3018 = vunpack.c.h.bf16 %v2990
    %v3019 = vunpack.c.l.bf16 %v2991
    %v3020 = vunpack.c.l.bf16 %v2992
    %v3021 = vunpack.c.h.bf16 %v2991
    %v3022 = vunpack.c.h.bf16 %v2992
    %v3023 = vunpack.c.l.bf16 %v2993
    %v3024 = vunpack.c.l.bf16 %v2994
    %v3025 = vunpack.c.h.bf16 %v2993
    %v3026 = vunpack.c.h.bf16 %v2994
    %v3027 = vadd.f32 %v2947, %v2995
    %v3028 = vadd.f32 %v2948, %v2996
    %v3029 = vadd.f32 %v2949, %v2997
    %v3030 = vadd.f32 %v2950, %v2998
    %v3031 = vadd.f32 %v2951, %v2999
    %v3032 = vadd.f32 %v2952, %v3000
    %v3033 = vadd.f32 %v2953, %v3001
    %v3034 = vadd.f32 %v2954, %v3002
    %v3035 = vadd.f32 %v2955, %v3003
    %v3036 = vadd.f32 %v2956, %v3004
    %v3037 = vadd.f32 %v2957, %v3005
    %v3038 = vadd.f32 %v2958, %v3006
    %v3039 = vadd.f32 %v2959, %v3007
    %v3040 = vadd.f32 %v2960, %v3008
    %v3041 = vadd.f32 %v2961, %v3009
    %v3042 = vadd.f32 %v2962, %v3010
    %v3043 = vadd.f32 %v2963, %v3011
    %v3044 = vadd.f32 %v2964, %v3012
    %v3045 = vadd.f32 %v2965, %v3013
    %v3046 = vadd.f32 %v2966, %v3014
    %v3047 = vadd.f32 %v2967, %v3015
    %v3048 = vadd.f32 %v2968, %v3016
    %v3049 = vadd.f32 %v2969, %v3017
    %v3050 = vadd.f32 %v2970, %v3018
    %v3051 = vadd.f32 %v2971, %v3019
    %v3052 = vadd.f32 %v2972, %v3020
    %v3053 = vadd.f32 %v2973, %v3021
    %v3054 = vadd.f32 %v2974, %v3022
    %v3055 = vadd.f32 %v2975, %v3023
    %v3056 = vadd.f32 %v2976, %v3024
    %v3057 = vadd.f32 %v2977, %v3025
    %v3058 = vadd.f32 %v2978, %v3026
    %v3059 = vpack.c.bf16 %v3029, %v3027
    %v3060 = vpack.c.bf16 %v3030, %v3028
    %v3061 = vpack.c.bf16 %v3033, %v3031
    %v3062 = vpack.c.bf16 %v3034, %v3032
    %v3063 = vpack.c.bf16 %v3037, %v3035
    %v3064 = vpack.c.bf16 %v3038, %v3036
    %v3065 = vpack.c.bf16 %v3041, %v3039
    %v3066 = vpack.c.bf16 %v3042, %v3040
    %v3067 = vpack.c.bf16 %v3045, %v3043
    %v3068 = vpack.c.bf16 %v3046, %v3044
    %v3069 = vpack.c.bf16 %v3049, %v3047
    %v3070 = vpack.c.bf16 %v3050, %v3048
    %v3071 = vpack.c.bf16 %v3053, %v3051
    %v3072 = vpack.c.bf16 %v3054, %v3052
    %v3073 = vpack.c.bf16 %v3057, %v3055
    %v3074 = vpack.c.bf16 %v3058, %v3056
    %v3075 = vld [vmem:[%s5] sm:$0xf]
    %v3076 = vld [vmem:[%s5 + $0x4] sm:$0xf]
    %v3077 = vld [vmem:[%s5 + $0x8] sm:$0xf]
    %v3078 = vld [vmem:[%s5 + $0xc] sm:$0xf]
    %v3079 = vld [vmem:[%s5 + $0x10] sm:$0xf]
    %v3080 = vld [vmem:[%s5 + $0x14] sm:$0xf]
    %v3081 = vld [vmem:[%s5 + $0x18] sm:$0xf]
    %v3082 = vld [vmem:[%s5 + $0x1c] sm:$0xf]
    %v3083 = vld [vmem:[%s5 + $0x20] sm:$0xf]
    %v3084 = vld [vmem:[%s5 + $0x24] sm:$0xf]
    %v3085 = vld [vmem:[%s5 + $0x28] sm:$0xf]
    %v3086 = vld [vmem:[%s5 + $0x2c] sm:$0xf]
    %v3087 = vld [vmem:[%s5 + $0x30] sm:$0xf]
    %v3088 = vld [vmem:[%s5 + $0x34] sm:$0xf]
    %v3089 = vld [vmem:[%s5 + $0x38] sm:$0xf]
    %v3090 = vld [vmem:[%s5 + $0x3c] sm:$0xf]
    %v3091 = vld [vmem:[%s5 + $0x40] sm:$0xf]
    %v3092 = vld [vmem:[%s5 + $0x44] sm:$0xf]
    %v3093 = vld [vmem:[%s5 + $0x48] sm:$0xf]
    %v3094 = vld [vmem:[%s5 + $0x4c] sm:$0xf]
    %v3095 = vld [vmem:[%s5 + $0x50] sm:$0xf]
    %v3096 = vld [vmem:[%s5 + $0x54] sm:$0xf]
    %v3097 = vld [vmem:[%s5 + $0x58] sm:$0xf]
    %v3098 = vld [vmem:[%s5 + $0x5c] sm:$0xf]
    %v3099 = vld [vmem:[%s5 + $0x60] sm:$0xf]
    %v3100 = vld [vmem:[%s5 + $0x64] sm:$0xf]
    %v3101 = vld [vmem:[%s5 + $0x68] sm:$0xf]
    %v3102 = vld [vmem:[%s5 + $0x6c] sm:$0xf]
    %v3103 = vld [vmem:[%s5 + $0x70] sm:$0xf]
    %v3104 = vld [vmem:[%s5 + $0x74] sm:$0xf]
    %v3105 = vld [vmem:[%s5 + $0x78] sm:$0xf]
    %v3106 = vld [vmem:[%s5 + $0x7c] sm:$0xf]
    %v3107 = vld [vmem:[%s8] sm:$0x1]
    %v3109 = vlaneseq
    %v3110 = vshrl.u32 %v3109, 7
    %v3111 = vsub.s32 0, %v3110
    %v3112 = vrot.slane %v3107, %v3111
    %v3146 = vunpack.c.l.b16 %v3075
    %v3147 = vunpack.c.l.b16 %v3076
    %v3148 = vunpack.c.l.b16 %v3077
    %v3149 = vunpack.c.l.b16 %v3078
    %v3150 = vunpack.c.l.b16 %v3079
    %v3151 = vunpack.c.l.b16 %v3080
    %v3152 = vunpack.c.l.b16 %v3081
    %v3153 = vunpack.c.l.b16 %v3082
    %v3154 = vunpack.c.l.b16 %v3083
    %v3155 = vunpack.c.l.b16 %v3084
    %v3156 = vunpack.c.l.b16 %v3085
    %v3157 = vunpack.c.l.b16 %v3086
    %v3158 = vunpack.c.l.b16 %v3087
    %v3159 = vunpack.c.l.b16 %v3088
    %v3160 = vunpack.c.l.b16 %v3089
    %v3161 = vunpack.c.l.b16 %v3090
    %v3162 = vunpack.c.l.b16 %v3091
    %v3163 = vunpack.c.l.b16 %v3092
    %v3164 = vunpack.c.l.b16 %v3093
    %v3165 = vunpack.c.l.b16 %v3094
    %v3166 = vunpack.c.l.b16 %v3095
    %v3167 = vunpack.c.l.b16 %v3096
    %v3168 = vunpack.c.l.b16 %v3097
    %v3169 = vunpack.c.l.b16 %v3098
    %v3170 = vunpack.c.l.b16 %v3099
    %v3171 = vunpack.c.l.b16 %v3100
    %v3172 = vunpack.c.l.b16 %v3101
    %v3173 = vunpack.c.l.b16 %v3102
    %v3174 = vunpack.c.l.b16 %v3103
    %v3175 = vunpack.c.l.b16 %v3104
    %v3176 = vunpack.c.l.b16 %v3105
    %v3177 = vunpack.c.l.b16 %v3106
    %v3178 = vpack.c.b16 %v3147, %v3146
    %v3179 = vpack.c.b16 %v3149, %v3148
    %v3180 = vpack.c.b16 %v3151, %v3150
    %v3181 = vpack.c.b16 %v3153, %v3152
    %v3182 = vpack.c.b16 %v3155, %v3154
    %v3183 = vpack.c.b16 %v3157, %v3156
    %v3184 = vpack.c.b16 %v3159, %v3158
    %v3185 = vpack.c.b16 %v3161, %v3160
    %v3186 = vpack.c.b16 %v3163, %v3162
    %v3187 = vpack.c.b16 %v3165, %v3164
    %v3188 = vpack.c.b16 %v3167, %v3166
    %v3189 = vpack.c.b16 %v3169, %v3168
    %v3190 = vpack.c.b16 %v3171, %v3170
    %v3191 = vpack.c.b16 %v3173, %v3172
    %v3192 = vpack.c.b16 %v3175, %v3174
    %v3193 = vpack.c.b16 %v3177, %v3176
    %3210 = vmatprep.subr.bf16.mxu0 0
    %3211 = vmatpush1.bf16.msra.mxu0 %v3178
    %3212 = vmatprep.subr.bf16.mxu0 0
    %3213 = vmatpush1.bf16.msra.mxu0 %v3179
    %3214 = vmatprep.subr.bf16.mxu0 0
    %3215 = vmatpush1.bf16.msra.mxu0 %v3180
    %3216 = vmatprep.subr.bf16.mxu0 0
    %3217 = vmatpush1.bf16.msra.mxu0 %v3181
    %3218 = vmatprep.subr.bf16.mxu0 0
    %3219 = vmatpush1.bf16.msra.mxu0 %v3182
    %3220 = vmatprep.subr.bf16.mxu0 0
    %3221 = vmatpush1.bf16.msra.mxu0 %v3183
    %3222 = vmatprep.subr.bf16.mxu0 0
    %3223 = vmatpush1.bf16.msra.mxu0 %v3184
    %3224 = vmatprep.subr.bf16.mxu0 0
    %3225 = vmatpush1.bf16.msra.mxu0 %v3185
    %3226 = vmatprep.subr.bf16.mxu0 0
    %3227 = vmatpush1.bf16.msra.mxu0 %v3186
    %3228 = vmatprep.subr.bf16.mxu0 0
    %3229 = vmatpush1.bf16.msra.mxu0 %v3187
    %3230 = vmatprep.subr.bf16.mxu0 0
    %3231 = vmatpush1.bf16.msra.mxu0 %v3188
    %3232 = vmatprep.subr.bf16.mxu0 0
    %3233 = vmatpush1.bf16.msra.mxu0 %v3189
    %3234 = vmatprep.subr.bf16.mxu0 0
    %3235 = vmatpush1.bf16.msra.mxu0 %v3190
    %3236 = vmatprep.subr.bf16.mxu0 0
    %3237 = vmatpush1.bf16.msra.mxu0 %v3191
    %3238 = vmatprep.subr.bf16.mxu0 0
    %3239 = vmatpush1.bf16.msra.mxu0 %v3192
    %3240 = vmatprep.subr.bf16.mxu0 0
    %3241 = vmatpush1.bf16.msra.mxu0 %v3193
    %3242 = vmatprep.mubr.bf16.mxu0 %v3060
    %3243 = vmatmul.mubr.bf16.gmra.mrb[0].mxu0 %v3059
    %v3244 = vpop.f32.mrb[0].mxu0
    %v3245 = vadd.f32 %v3112, %v3244
    %v3246 = vpop.f32.mrb[0].mxu0
    %v3247 = vpop.f32.mrb[0].mxu0
    %v3248 = vadd.f32 %v3112, %v3247
    %v3249 = vpop.f32.mrb[0].mxu0
    %3250 = vmatprep.mubr.bf16.mxu0 %v3062
    %3251 = vmatmul.mubr.bf16.gmra.mrb[0].mxu0 %v3061
    %v3252 = vpop.f32.mrb[0].mxu0
    %v3253 = vadd.f32 %v3112, %v3252
    %v3254 = vpop.f32.mrb[0].mxu0
    %v3255 = vpop.f32.mrb[0].mxu0
    %v3256 = vadd.f32 %v3112, %v3255
    %v3257 = vpop.f32.mrb[0].mxu0
    %3258 = vmatprep.mubr.bf16.mxu0 %v3064
    %3259 = vmatmul.mubr.bf16.gmra.mrb[0].mxu0 %v3063
    %v3260 = vpop.f32.mrb[0].mxu0
    %v3261 = vadd.f32 %v3112, %v3260
    %v3262 = vpop.f32.mrb[0].mxu0
    %v3263 = vpop.f32.mrb[0].mxu0
    %v3264 = vadd.f32 %v3112, %v3263
    %v3265 = vpop.f32.mrb[0].mxu0
    %3266 = vmatprep.mubr.bf16.mxu0 %v3066
    %3267 = vmatmul.mubr.bf16.gmra.mrb[0].mxu0 %v3065
    %v3268 = vpop.f32.mrb[0].mxu0
    %v3269 = vadd.f32 %v3112, %v3268
    %v3270 = vpop.f32.mrb[0].mxu0
    %v3271 = vpop.f32.mrb[0].mxu0
    %v3272 = vadd.f32 %v3112, %v3271
    %v3273 = vpop.f32.mrb[0].mxu0
    %3274 = vmatprep.mubr.bf16.mxu0 %v3068
    %3275 = vmatmul.mubr.bf16.gmra.mrb[0].mxu0 %v3067
    %v3276 = vpop.f32.mrb[0].mxu0
    %v3277 = vadd.f32 %v3112, %v3276
    %v3278 = vpop.f32.mrb[0].mxu0
    %v3279 = vpop.f32.mrb[0].mxu0
    %v3280 = vadd.f32 %v3112, %v3279
    %v3281 = vpop.f32.mrb[0].mxu0
    %3282 = vmatprep.mubr.bf16.mxu0 %v3070
    %3283 = vmatmul.mubr.bf16.gmra.mrb[0].mxu0 %v3069
    %v3284 = vpop.f32.mrb[0].mxu0
    %v3285 = vadd.f32 %v3112, %v3284
    %v3286 = vpop.f32.mrb[0].mxu0
    %v3287 = vpop.f32.mrb[0].mxu0
    %v3288 = vadd.f32 %v3112, %v3287
    %v3289 = vpop.f32.mrb[0].mxu0
    %3290 = vmatprep.mubr.bf16.mxu0 %v3072
    %3291 = vmatmul.mubr.bf16.gmra.mrb[0].mxu0 %v3071
    %v3292 = vpop.f32.mrb[0].mxu0
    %v3293 = vadd.f32 %v3112, %v3292
    %v3294 = vpop.f32.mrb[0].mxu0
    %v3295 = vpop.f32.mrb[0].mxu0
    %v3296 = vadd.f32 %v3112, %v3295
    %v3297 = vpop.f32.mrb[0].mxu0
    %3298 = vmatprep.mubr.bf16.mxu0 %v3074
    %3299 = vmatmul.mubr.bf16.gmra.mrb[0].mxu0 %v3073
    %v3300 = vpop.f32.mrb[0].mxu0
    %v3301 = vadd.f32 %v3112, %v3300
    %v3302 = vpop.f32.mrb[0].mxu0
    %v3303 = vpop.f32.mrb[0].mxu0
    %v3304 = vadd.f32 %v3112, %v3303
    %v3305 = vpop.f32.mrb[0].mxu0
    %3306 = vdwg.mxu0
    %3307 = vst [vmem:[%s11] sm:$0xff] %v3245
    %3308 = vst [vmem:[%s11 + $0x8] sm:$0xff] %v3248
    %3309 = vst [vmem:[%s11 + $0x10] sm:$0xff] %v3253
    %3310 = vst [vmem:[%s11 + $0x18] sm:$0xff] %v3256
    %3311 = vst [vmem:[%s11 + $0x20] sm:$0xff] %v3261
    %3312 = vst [vmem:[%s11 + $0x28] sm:$0xff] %v3264
    %3313 = vst [vmem:[%s11 + $0x30] sm:$0xff] %v3269
    %3314 = vst [vmem:[%s11 + $0x38] sm:$0xff] %v3272
    %3315 = vst [vmem:[%s11 + $0x40] sm:$0xff] %v3277
    %3316 = vst [vmem:[%s11 + $0x48] sm:$0xff] %v3280
    %3317 = vst [vmem:[%s11 + $0x50] sm:$0xff] %v3285
    %3318 = vst [vmem:[%s11 + $0x58] sm:$0xff] %v3288
    %3319 = vst [vmem:[%s11 + $0x60] sm:$0xff] %v3293
    %3320 = vst [vmem:[%s11 + $0x68] sm:$0xff] %v3296
    %3321 = vst [vmem:[%s11 + $0x70] sm:$0xff] %v3301
    %3322 = vst [vmem:[%s11 + $0x78] sm:$0xff] %v3304
    %v3323 = vld [vmem:[#allocation3] sm:$0xff]
    %v3324 = vld [vmem:[#allocation3 + $0x8] sm:$0xff]
    %v3325 = vld [vmem:[#allocation3 + $0x10] sm:$0xff]
    %v3326 = vld [vmem:[#allocation3 + $0x18] sm:$0xff]
    %v3327 = vld [vmem:[#allocation3 + $0x20] sm:$0xff]
    %v3328 = vld [vmem:[#allocation3 + $0x28] sm:$0xff]
    %v3329 = vld [vmem:[#allocation3 + $0x30] sm:$0xff]
    %v3330 = vld [vmem:[#allocation3 + $0x38] sm:$0xff]
    %v3331 = vld [vmem:[#allocation3 + $0x40] sm:$0xff]
    %v3332 = vld [vmem:[#allocation3 + $0x48] sm:$0xff]
    %v3333 = vld [vmem:[#allocation3 + $0x50] sm:$0xff]
    %v3334 = vld [vmem:[#allocation3 + $0x58] sm:$0xff]
    %v3335 = vld [vmem:[#allocation3 + $0x60] sm:$0xff]
    %v3336 = vld [vmem:[#allocation3 + $0x68] sm:$0xff]
    %v3337 = vld [vmem:[#allocation3 + $0x70] sm:$0xff]
    %v3338 = vld [vmem:[#allocation3 + $0x78] sm:$0xff]
    %v3339 = vld [vmem:[#allocation3 + $0x80] sm:$0xff]
    %v3340 = vld [vmem:[#allocation3 + $0x88] sm:$0xff]
    %v3341 = vld [vmem:[#allocation3 + $0x90] sm:$0xff]
    %v3342 = vld [vmem:[#allocation3 + $0x98] sm:$0xff]
    %v3343 = vld [vmem:[#allocation3 + $0xa0] sm:$0xff]
    %v3344 = vld [vmem:[#allocation3 + $0xa8] sm:$0xff]
    %v3345 = vld [vmem:[#allocation3 + $0xb0] sm:$0xff]
    %v3346 = vld [vmem:[#allocation3 + $0xb8] sm:$0xff]
    %v3347 = vld [vmem:[#allocation3 + $0xc0] sm:$0xff]
    %v3348 = vld [vmem:[#allocation3 + $0xc8] sm:$0xff]
    %v3349 = vld [vmem:[#allocation3 + $0xd0] sm:$0xff]
    %v3350 = vld [vmem:[#allocation3 + $0xd8] sm:$0xff]
    %v3351 = vld [vmem:[#allocation3 + $0xe0] sm:$0xff]
    %v3352 = vld [vmem:[#allocation3 + $0xe8] sm:$0xff]
    %v3353 = vld [vmem:[#allocation3 + $0xf0] sm:$0xff]
    %v3354 = vld [vmem:[#allocation3 + $0xf8] sm:$0xff]
    %v3355 = vld [vmem:[#allocation2 + $0x10] sm:$0xff]
    %v3356 = vld [vmem:[#allocation2 + $0x18] sm:$0xff]
    %v3357 = vld [vmem:[#allocation2 + $0x40] sm:$0xff]
    %v3358 = vld [vmem:[#allocation2 + $0x48] sm:$0xff]
    %v3359 = vld [vmem:[#allocation2 + $0x70] sm:$0xff]
    %v3360 = vld [vmem:[#allocation2 + $0x78] sm:$0xff]
    %v3361 = vld [vmem:[#allocation2 + $0xa0] sm:$0xff]
    %v3362 = vld [vmem:[#allocation2 + $0xa8] sm:$0xff]
    %v3363 = vld [vmem:[#allocation2 + $0xd0] sm:$0xff]
    %v3364 = vld [vmem:[#allocation2 + $0xd8] sm:$0xff]
    %v3365 = vld [vmem:[#allocation2 + $0x100] sm:$0xff]
    %v3366 = vld [vmem:[#allocation2 + $0x108] sm:$0xff]
    %v3367 = vld [vmem:[#allocation2 + $0x130] sm:$0xff]
    %v3368 = vld [vmem:[#allocation2 + $0x138] sm:$0xff]
    %v3369 = vld [vmem:[#allocation2 + $0x160] sm:$0xff]
    %v3370 = vld [vmem:[#allocation2 + $0x168] sm:$0xff]
    %v3371 = vunpack.c.l.bf16 %v3355
    %v3372 = vunpack.c.l.bf16 %v3356
    %v3373 = vunpack.c.h.bf16 %v3355
    %v3374 = vunpack.c.h.bf16 %v3356
    %v3375 = vunpack.c.l.bf16 %v3357
    %v3376 = vunpack.c.l.bf16 %v3358
    %v3377 = vunpack.c.h.bf16 %v3357
    %v3378 = vunpack.c.h.bf16 %v3358
    %v3379 = vunpack.c.l.bf16 %v3359
    %v3380 = vunpack.c.l.bf16 %v3360
    %v3381 = vunpack.c.h.bf16 %v3359
    %v3382 = vunpack.c.h.bf16 %v3360
    %v3383 = vunpack.c.l.bf16 %v3361
    %v3384 = vunpack.c.l.bf16 %v3362
    %v3385 = vunpack.c.h.bf16 %v3361
    %v3386 = vunpack.c.h.bf16 %v3362
    %v3387 = vunpack.c.l.bf16 %v3363
    %v3388 = vunpack.c.l.bf16 %v3364
    %v3389 = vunpack.c.h.bf16 %v3363
    %v3390 = vunpack.c.h.bf16 %v3364
    %v3391 = vunpack.c.l.bf16 %v3365
    %v3392 = vunpack.c.l.bf16 %v3366
    %v3393 = vunpack.c.h.bf16 %v3365
    %v3394 = vunpack.c.h.bf16 %v3366
    %v3395 = vunpack.c.l.bf16 %v3367
    %v3396 = vunpack.c.l.bf16 %v3368
    %v3397 = vunpack.c.h.bf16 %v3367
    %v3398 = vunpack.c.h.bf16 %v3368
    %v3399 = vunpack.c.l.bf16 %v3369
    %v3400 = vunpack.c.l.bf16 %v3370
    %v3401 = vunpack.c.h.bf16 %v3369
    %v3402 = vunpack.c.h.bf16 %v3370
    %v3403 = vadd.f32 %v3323, %v3371
    %v3404 = vadd.f32 %v3324, %v3372
    %v3405 = vadd.f32 %v3325, %v3373
    %v3406 = vadd.f32 %v3326, %v3374
    %v3407 = vadd.f32 %v3327, %v3375
    %v3408 = vadd.f32 %v3328, %v3376
    %v3409 = vadd.f32 %v3329, %v3377
    %v3410 = vadd.f32 %v3330, %v3378
    %v3411 = vadd.f32 %v3331, %v3379
    %v3412 = vadd.f32 %v3332, %v3380
    %v3413 = vadd.f32 %v3333, %v3381
    %v3414 = vadd.f32 %v3334, %v3382
    %v3415 = vadd.f32 %v3335, %v3383
    %v3416 = vadd.f32 %v3336, %v3384
    %v3417 = vadd.f32 %v3337, %v3385
    %v3418 = vadd.f32 %v3338, %v3386
    %v3419 = vadd.f32 %v3339, %v3387
    %v3420 = vadd.f32 %v3340, %v3388
    %v3421 = vadd.f32 %v3341, %v3389
    %v3422 = vadd.f32 %v3342, %v3390
    %v3423 = vadd.f32 %v3343, %v3391
    %v3424 = vadd.f32 %v3344, %v3392
    %v3425 = vadd.f32 %v3345, %v3393
    %v3426 = vadd.f32 %v3346, %v3394
    %v3427 = vadd.f32 %v3347, %v3395
    %v3428 = vadd.f32 %v3348, %v3396
    %v3429 = vadd.f32 %v3349, %v3397
    %v3430 = vadd.f32 %v3350, %v3398
    %v3431 = vadd.f32 %v3351, %v3399
    %v3432 = vadd.f32 %v3352, %v3400
    %v3433 = vadd.f32 %v3353, %v3401
    %v3434 = vadd.f32 %v3354, %v3402
    %v3435 = vpack.c.bf16 %v3405, %v3403
    %v3436 = vpack.c.bf16 %v3406, %v3404
    %v3437 = vpack.c.bf16 %v3409, %v3407
    %v3438 = vpack.c.bf16 %v3410, %v3408
    %v3439 = vpack.c.bf16 %v3413, %v3411
    %v3440 = vpack.c.bf16 %v3414, %v3412
    %v3441 = vpack.c.bf16 %v3417, %v3415
    %v3442 = vpack.c.bf16 %v3418, %v3416
    %v3443 = vpack.c.bf16 %v3421, %v3419
    %v3444 = vpack.c.bf16 %v3422, %v3420
    %v3445 = vpack.c.bf16 %v3425, %v3423
    %v3446 = vpack.c.bf16 %v3426, %v3424
    %v3447 = vpack.c.bf16 %v3429, %v3427
    %v3448 = vpack.c.bf16 %v3430, %v3428
    %v3449 = vpack.c.bf16 %v3433, %v3431
    %v3450 = vpack.c.bf16 %v3434, %v3432
    %v3451 = vld [vmem:[%s6] sm:$0xf]
    %v3452 = vld [vmem:[%s6 + $0x4] sm:$0xf]
    %v3453 = vld [vmem:[%s6 + $0x8] sm:$0xf]
    %v3454 = vld [vmem:[%s6 + $0xc] sm:$0xf]
    %v3455 = vld [vmem:[%s6 + $0x10] sm:$0xf]
    %v3456 = vld [vmem:[%s6 + $0x14] sm:$0xf]
    %v3457 = vld [vmem:[%s6 + $0x18] sm:$0xf]
    %v3458 = vld [vmem:[%s6 + $0x1c] sm:$0xf]
    %v3459 = vld [vmem:[%s6 + $0x20] sm:$0xf]
    %v3460 = vld [vmem:[%s6 + $0x24] sm:$0xf]
    %v3461 = vld [vmem:[%s6 + $0x28] sm:$0xf]
    %v3462 = vld [vmem:[%s6 + $0x2c] sm:$0xf]
    %v3463 = vld [vmem:[%s6 + $0x30] sm:$0xf]
    %v3464 = vld [vmem:[%s6 + $0x34] sm:$0xf]
    %v3465 = vld [vmem:[%s6 + $0x38] sm:$0xf]
    %v3466 = vld [vmem:[%s6 + $0x3c] sm:$0xf]
    %v3467 = vld [vmem:[%s6 + $0x40] sm:$0xf]
    %v3468 = vld [vmem:[%s6 + $0x44] sm:$0xf]
    %v3469 = vld [vmem:[%s6 + $0x48] sm:$0xf]
    %v3470 = vld [vmem:[%s6 + $0x4c] sm:$0xf]
    %v3471 = vld [vmem:[%s6 + $0x50] sm:$0xf]
    %v3472 = vld [vmem:[%s6 + $0x54] sm:$0xf]
    %v3473 = vld [vmem:[%s6 + $0x58] sm:$0xf]
    %v3474 = vld [vmem:[%s6 + $0x5c] sm:$0xf]
    %v3475 = vld [vmem:[%s6 + $0x60] sm:$0xf]
    %v3476 = vld [vmem:[%s6 + $0x64] sm:$0xf]
    %v3477 = vld [vmem:[%s6 + $0x68] sm:$0xf]
    %v3478 = vld [vmem:[%s6 + $0x6c] sm:$0xf]
    %v3479 = vld [vmem:[%s6 + $0x70] sm:$0xf]
    %v3480 = vld [vmem:[%s6 + $0x74] sm:$0xf]
    %v3481 = vld [vmem:[%s6 + $0x78] sm:$0xf]
    %v3482 = vld [vmem:[%s6 + $0x7c] sm:$0xf]
    %v3483 = vld [vmem:[%s9] sm:$0x1]
    %v3485 = vlaneseq
    %v3486 = vshrl.u32 %v3485, 7
    %v3487 = vsub.s32 0, %v3486
    %v3488 = vrot.slane %v3483, %v3487
    %v3522 = vunpack.c.l.b16 %v3451
    %v3523 = vunpack.c.l.b16 %v3452
    %v3524 = vunpack.c.l.b16 %v3453
    %v3525 = vunpack.c.l.b16 %v3454
    %v3526 = vunpack.c.l.b16 %v3455
    %v3527 = vunpack.c.l.b16 %v3456
    %v3528 = vunpack.c.l.b16 %v3457
    %v3529 = vunpack.c.l.b16 %v3458
    %v3530 = vunpack.c.l.b16 %v3459
    %v3531 = vunpack.c.l.b16 %v3460
    %v3532 = vunpack.c.l.b16 %v3461
    %v3533 = vunpack.c.l.b16 %v3462
    %v3534 = vunpack.c.l.b16 %v3463
    %v3535 = vunpack.c.l.b16 %v3464
    %v3536 = vunpack.c.l.b16 %v3465
    %v3537 = vunpack.c.l.b16 %v3466
    %v3538 = vunpack.c.l.b16 %v3467
    %v3539 = vunpack.c.l.b16 %v3468
    %v3540 = vunpack.c.l.b16 %v3469
    %v3541 = vunpack.c.l.b16 %v3470
    %v3542 = vunpack.c.l.b16 %v3471
    %v3543 = vunpack.c.l.b16 %v3472
    %v3544 = vunpack.c.l.b16 %v3473
    %v3545 = vunpack.c.l.b16 %v3474
    %v3546 = vunpack.c.l.b16 %v3475
    %v3547 = vunpack.c.l.b16 %v3476
    %v3548 = vunpack.c.l.b16 %v3477
    %v3549 = vunpack.c.l.b16 %v3478
    %v3550 = vunpack.c.l.b16 %v3479
    %v3551 = vunpack.c.l.b16 %v3480
    %v3552 = vunpack.c.l.b16 %v3481
    %v3553 = vunpack.c.l.b16 %v3482
    %v3554 = vpack.c.b16 %v3523, %v3522
    %v3555 = vpack.c.b16 %v3525, %v3524
    %v3556 = vpack.c.b16 %v3527, %v3526
    %v3557 = vpack.c.b16 %v3529, %v3528
    %v3558 = vpack.c.b16 %v3531, %v3530
    %v3559 = vpack.c.b16 %v3533, %v3532
    %v3560 = vpack.c.b16 %v3535, %v3534
    %v3561 = vpack.c.b16 %v3537, %v3536
    %v3562 = vpack.c.b16 %v3539, %v3538
    %v3563 = vpack.c.b16 %v3541, %v3540
    %v3564 = vpack.c.b16 %v3543, %v3542
    %v3565 = vpack.c.b16 %v3545, %v3544
    %v3566 = vpack.c.b16 %v3547, %v3546
    %v3567 = vpack.c.b16 %v3549, %v3548
    %v3568 = vpack.c.b16 %v3551, %v3550
    %v3569 = vpack.c.b16 %v3553, %v3552
    %3586 = vmatprep.subr.bf16.mxu0 0
    %3587 = vmatpush1.bf16.msra.mxu0 %v3554
    %3588 = vmatprep.subr.bf16.mxu0 0
    %3589 = vmatpush1.bf16.msra.mxu0 %v3555
    %3590 = vmatprep.subr.bf16.mxu0 0
    %3591 = vmatpush1.bf16.msra.mxu0 %v3556
    %3592 = vmatprep.subr.bf16.mxu0 0
    %3593 = vmatpush1.bf16.msra.mxu0 %v3557
    %3594 = vmatprep.subr.bf16.mxu0 0
    %3595 = vmatpush1.bf16.msra.mxu0 %v3558
    %3596 = vmatprep.subr.bf16.mxu0 0
    %3597 = vmatpush1.bf16.msra.mxu0 %v3559
    %3598 = vmatprep.subr.bf16.mxu0 0
    %3599 = vmatpush1.bf16.msra.mxu0 %v3560
    %3600 = vmatprep.subr.bf16.mxu0 0
    %3601 = vmatpush1.bf16.msra.mxu0 %v3561
    %3602 = vmatprep.subr.bf16.mxu0 0
    %3603 = vmatpush1.bf16.msra.mxu0 %v3562
    %3604 = vmatprep.subr.bf16.mxu0 0
    %3605 = vmatpush1.bf16.msra.mxu0 %v3563
    %3606 = vmatprep.subr.bf16.mxu0 0
    %3607 = vmatpush1.bf16.msra.mxu0 %v3564
    %3608 = vmatprep.subr.bf16.mxu0 0
    %3609 = vmatpush1.bf16.msra.mxu0 %v3565
    %3610 = vmatprep.subr.bf16.mxu0 0
    %3611 = vmatpush1.bf16.msra.mxu0 %v3566
    %3612 = vmatprep.subr.bf16.mxu0 0
    %3613 = vmatpush1.bf16.msra.mxu0 %v3567
    %3614 = vmatprep.subr.bf16.mxu0 0
    %3615 = vmatpush1.bf16.msra.mxu0 %v3568
    %3616 = vmatprep.subr.bf16.mxu0 0
    %3617 = vmatpush1.bf16.msra.mxu0 %v3569
    %3618 = vmatprep.mubr.bf16.mxu0 %v3436
    %3619 = vmatmul.mubr.bf16.gmra.mrb[0].mxu0 %v3435
    %v3620 = vpop.f32.mrb[0].mxu0
    %v3621 = vadd.f32 %v3488, %v3620
    %v3622 = vpop.f32.mrb[0].mxu0
    %v3623 = vpop.f32.mrb[0].mxu0
    %v3624 = vadd.f32 %v3488, %v3623
    %v3625 = vpop.f32.mrb[0].mxu0
    %3626 = vmatprep.mubr.bf16.mxu0 %v3438
    %3627 = vmatmul.mubr.bf16.gmra.mrb[0].mxu0 %v3437
    %v3628 = vpop.f32.mrb[0].mxu0
    %v3629 = vadd.f32 %v3488, %v3628
    %v3630 = vpop.f32.mrb[0].mxu0
    %v3631 = vpop.f32.mrb[0].mxu0
    %v3632 = vadd.f32 %v3488, %v3631
    %v3633 = vpop.f32.mrb[0].mxu0
    %3634 = vmatprep.mubr.bf16.mxu0 %v3440
    %3635 = vmatmul.mubr.bf16.gmra.mrb[0].mxu0 %v3439
    %v3636 = vpop.f32.mrb[0].mxu0
    %v3637 = vadd.f32 %v3488, %v3636
    %v3638 = vpop.f32.mrb[0].mxu0
    %v3639 = vpop.f32.mrb[0].mxu0
    %v3640 = vadd.f32 %v3488, %v3639
    %v3641 = vpop.f32.mrb[0].mxu0
    %3642 = vmatprep.mubr.bf16.mxu0 %v3442
    %3643 = vmatmul.mubr.bf16.gmra.mrb[0].mxu0 %v3441
    %v3644 = vpop.f32.mrb[0].mxu0
    %v3645 = vadd.f32 %v3488, %v3644
    %v3646 = vpop.f32.mrb[0].mxu0
    %v3647 = vpop.f32.mrb[0].mxu0
    %v3648 = vadd.f32 %v3488, %v3647
    %v3649 = vpop.f32.mrb[0].mxu0
    %3650 = vmatprep.mubr.bf16.mxu0 %v3444
    %3651 = vmatmul.mubr.bf16.gmra.mrb[0].mxu0 %v3443
    %v3652 = vpop.f32.mrb[0].mxu0
    %v3653 = vadd.f32 %v3488, %v3652
    %v3654 = vpop.f32.mrb[0].mxu0
    %v3655 = vpop.f32.mrb[0].mxu0
    %v3656 = vadd.f32 %v3488, %v3655
    %v3657 = vpop.f32.mrb[0].mxu0
    %3658 = vmatprep.mubr.bf16.mxu0 %v3446
    %3659 = vmatmul.mubr.bf16.gmra.mrb[0].mxu0 %v3445
    %v3660 = vpop.f32.mrb[0].mxu0
    %v3661 = vadd.f32 %v3488, %v3660
    %v3662 = vpop.f32.mrb[0].mxu0
    %v3663 = vpop.f32.mrb[0].mxu0
    %v3664 = vadd.f32 %v3488, %v3663
    %v3665 = vpop.f32.mrb[0].mxu0
    %3666 = vmatprep.mubr.bf16.mxu0 %v3448
    %3667 = vmatmul.mubr.bf16.gmra.mrb[0].mxu0 %v3447
    %v3668 = vpop.f32.mrb[0].mxu0
    %v3669 = vadd.f32 %v3488, %v3668
    %v3670 = vpop.f32.mrb[0].mxu0
    %v3671 = vpop.f32.mrb[0].mxu0
    %v3672 = vadd.f32 %v3488, %v3671
    %v3673 = vpop.f32.mrb[0].mxu0
    %3674 = vmatprep.mubr.bf16.mxu0 %v3450
    %3675 = vmatmul.mubr.bf16.gmra.mrb[0].mxu0 %v3449
    %v3676 = vpop.f32.mrb[0].mxu0
    %v3677 = vadd.f32 %v3488, %v3676
    %v3678 = vpop.f32.mrb[0].mxu0
    %v3679 = vpop.f32.mrb[0].mxu0
    %v3680 = vadd.f32 %v3488, %v3679
    %v3681 = vpop.f32.mrb[0].mxu0
    %3682 = vdwg.mxu0
    %3683 = vst [vmem:[%s12] sm:$0xff] %v3621
    %3684 = vst [vmem:[%s12 + $0x8] sm:$0xff] %v3624
    %3685 = vst [vmem:[%s12 + $0x10] sm:$0xff] %v3629
    %3686 = vst [vmem:[%s12 + $0x18] sm:$0xff] %v3632
    %3687 = vst [vmem:[%s12 + $0x20] sm:$0xff] %v3637
    %3688 = vst [vmem:[%s12 + $0x28] sm:$0xff] %v3640
    %3689 = vst [vmem:[%s12 + $0x30] sm:$0xff] %v3645
    %3690 = vst [vmem:[%s12 + $0x38] sm:$0xff] %v3648
    %3691 = vst [vmem:[%s12 + $0x40] sm:$0xff] %v3653
    %3692 = vst [vmem:[%s12 + $0x48] sm:$0xff] %v3656
    %3693 = vst [vmem:[%s12 + $0x50] sm:$0xff] %v3661
    %3694 = vst [vmem:[%s12 + $0x58] sm:$0xff] %v3664
    %3695 = vst [vmem:[%s12 + $0x60] sm:$0xff] %v3669
    %3696 = vst [vmem:[%s12 + $0x68] sm:$0xff] %v3672
    %3697 = vst [vmem:[%s12 + $0x70] sm:$0xff] %v3677
    %3698 = vst [vmem:[%s12 + $0x78] sm:$0xff] %v3680
    %v3699 = vld [vmem:[#allocation3] sm:$0xff]
    %v3700 = vld [vmem:[#allocation3 + $0x8] sm:$0xff]
    %v3701 = vld [vmem:[#allocation3 + $0x10] sm:$0xff]
    %v3702 = vld [vmem:[#allocation3 + $0x18] sm:$0xff]
    %v3703 = vld [vmem:[#allocation3 + $0x20] sm:$0xff]
    %v3704 = vld [vmem:[#allocation3 + $0x28] sm:$0xff]
    %v3705 = vld [vmem:[#allocation3 + $0x30] sm:$0xff]
    %v3706 = vld [vmem:[#allocation3 + $0x38] sm:$0xff]
    %v3707 = vld [vmem:[#allocation3 + $0x40] sm:$0xff]
    %v3708 = vld [vmem:[#allocation3 + $0x48] sm:$0xff]
    %v3709 = vld [vmem:[#allocation3 + $0x50] sm:$0xff]
    %v3710 = vld [vmem:[#allocation3 + $0x58] sm:$0xff]
    %v3711 = vld [vmem:[#allocation3 + $0x60] sm:$0xff]
    %v3712 = vld [vmem:[#allocation3 + $0x68] sm:$0xff]
    %v3713 = vld [vmem:[#allocation3 + $0x70] sm:$0xff]
    %v3714 = vld [vmem:[#allocation3 + $0x78] sm:$0xff]
    %v3715 = vld [vmem:[#allocation3 + $0x80] sm:$0xff]
    %v3716 = vld [vmem:[#allocation3 + $0x88] sm:$0xff]
    %v3717 = vld [vmem:[#allocation3 + $0x90] sm:$0xff]
    %v3718 = vld [vmem:[#allocation3 + $0x98] sm:$0xff]
    %v3719 = vld [vmem:[#allocation3 + $0xa0] sm:$0xff]
    %v3720 = vld [vmem:[#allocation3 + $0xa8] sm:$0xff]
    %v3721 = vld [vmem:[#allocation3 + $0xb0] sm:$0xff]
    %v3722 = vld [vmem:[#allocation3 + $0xb8] sm:$0xff]
    %v3723 = vld [vmem:[#allocation3 + $0xc0] sm:$0xff]
    %v3724 = vld [vmem:[#allocation3 + $0xc8] sm:$0xff]
    %v3725 = vld [vmem:[#allocation3 + $0xd0] sm:$0xff]
    %v3726 = vld [vmem:[#allocation3 + $0xd8] sm:$0xff]
    %v3727 = vld [vmem:[#allocation3 + $0xe0] sm:$0xff]
    %v3728 = vld [vmem:[#allocation3 + $0xe8] sm:$0xff]
    %v3729 = vld [vmem:[#allocation3 + $0xf0] sm:$0xff]
    %v3730 = vld [vmem:[#allocation3 + $0xf8] sm:$0xff]
    %v3731 = vld [vmem:[#allocation2 + $0x20] sm:$0xff]
    %v3732 = vld [vmem:[#allocation2 + $0x28] sm:$0xff]
    %v3733 = vld [vmem:[#allocation2 + $0x50] sm:$0xff]
    %v3734 = vld [vmem:[#allocation2 + $0x58] sm:$0xff]
    %v3735 = vld [vmem:[#allocation2 + $0x80] sm:$0xff]
    %v3736 = vld [vmem:[#allocation2 + $0x88] sm:$0xff]
    %v3737 = vld [vmem:[#allocation2 + $0xb0] sm:$0xff]
    %v3738 = vld [vmem:[#allocation2 + $0xb8] sm:$0xff]
    %v3739 = vld [vmem:[#allocation2 + $0xe0] sm:$0xff]
    %v3740 = vld [vmem:[#allocation2 + $0xe8] sm:$0xff]
    %v3741 = vld [vmem:[#allocation2 + $0x110] sm:$0xff]
    %v3742 = vld [vmem:[#allocation2 + $0x118] sm:$0xff]
    %v3743 = vld [vmem:[#allocation2 + $0x140] sm:$0xff]
    %v3744 = vld [vmem:[#allocation2 + $0x148] sm:$0xff]
    %v3745 = vld [vmem:[#allocation2 + $0x170] sm:$0xff]
    %v3746 = vld [vmem:[#allocation2 + $0x178] sm:$0xff]
    %v3747 = vunpack.c.l.bf16 %v3731
    %v3748 = vunpack.c.l.bf16 %v3732
    %v3749 = vunpack.c.h.bf16 %v3731
    %v3750 = vunpack.c.h.bf16 %v3732
    %v3751 = vunpack.c.l.bf16 %v3733
    %v3752 = vunpack.c.l.bf16 %v3734
    %v3753 = vunpack.c.h.bf16 %v3733
    %v3754 = vunpack.c.h.bf16 %v3734
    %v3755 = vunpack.c.l.bf16 %v3735
    %v3756 = vunpack.c.l.bf16 %v3736
    %v3757 = vunpack.c.h.bf16 %v3735
    %v3758 = vunpack.c.h.bf16 %v3736
    %v3759 = vunpack.c.l.bf16 %v3737
    %v3760 = vunpack.c.l.bf16 %v3738
    %v3761 = vunpack.c.h.bf16 %v3737
    %v3762 = vunpack.c.h.bf16 %v3738
    %v3763 = vunpack.c.l.bf16 %v3739
    %v3764 = vunpack.c.l.bf16 %v3740
    %v3765 = vunpack.c.h.bf16 %v3739
    %v3766 = vunpack.c.h.bf16 %v3740
    %v3767 = vunpack.c.l.bf16 %v3741
    %v3768 = vunpack.c.l.bf16 %v3742
    %v3769 = vunpack.c.h.bf16 %v3741
    %v3770 = vunpack.c.h.bf16 %v3742
    %v3771 = vunpack.c.l.bf16 %v3743
    %v3772 = vunpack.c.l.bf16 %v3744
    %v3773 = vunpack.c.h.bf16 %v3743
    %v3774 = vunpack.c.h.bf16 %v3744
    %v3775 = vunpack.c.l.bf16 %v3745
    %v3776 = vunpack.c.l.bf16 %v3746
    %v3777 = vunpack.c.h.bf16 %v3745
    %v3778 = vunpack.c.h.bf16 %v3746
    %v3779 = vadd.f32 %v3699, %v3747
    %v3780 = vadd.f32 %v3700, %v3748
    %v3781 = vadd.f32 %v3701, %v3749
    %v3782 = vadd.f32 %v3702, %v3750
    %v3783 = vadd.f32 %v3703, %v3751
    %v3784 = vadd.f32 %v3704, %v3752
    %v3785 = vadd.f32 %v3705, %v3753
    %v3786 = vadd.f32 %v3706, %v3754
    %v3787 = vadd.f32 %v3707, %v3755
    %v3788 = vadd.f32 %v3708, %v3756
    %v3789 = vadd.f32 %v3709, %v3757
    %v3790 = vadd.f32 %v3710, %v3758
    %v3791 = vadd.f32 %v3711, %v3759
    %v3792 = vadd.f32 %v3712, %v3760
    %v3793 = vadd.f32 %v3713, %v3761
    %v3794 = vadd.f32 %v3714, %v3762
    %v3795 = vadd.f32 %v3715, %v3763
    %v3796 = vadd.f32 %v3716, %v3764
    %v3797 = vadd.f32 %v3717, %v3765
    %v3798 = vadd.f32 %v3718, %v3766
    %v3799 = vadd.f32 %v3719, %v3767
    %v3800 = vadd.f32 %v3720, %v3768
    %v3801 = vadd.f32 %v3721, %v3769
    %v3802 = vadd.f32 %v3722, %v3770
    %v3803 = vadd.f32 %v3723, %v3771
    %v3804 = vadd.f32 %v3724, %v3772
    %v3805 = vadd.f32 %v3725, %v3773
    %v3806 = vadd.f32 %v3726, %v3774
    %v3807 = vadd.f32 %v3727, %v3775
    %v3808 = vadd.f32 %v3728, %v3776
    %v3809 = vadd.f32 %v3729, %v3777
    %v3810 = vadd.f32 %v3730, %v3778
    %v3811 = vpack.c.bf16 %v3781, %v3779
    %v3812 = vpack.c.bf16 %v3782, %v3780
    %v3813 = vpack.c.bf16 %v3785, %v3783
    %v3814 = vpack.c.bf16 %v3786, %v3784
    %v3815 = vpack.c.bf16 %v3789, %v3787
    %v3816 = vpack.c.bf16 %v3790, %v3788
    %v3817 = vpack.c.bf16 %v3793, %v3791
    %v3818 = vpack.c.bf16 %v3794, %v3792
    %v3819 = vpack.c.bf16 %v3797, %v3795
    %v3820 = vpack.c.bf16 %v3798, %v3796
    %v3821 = vpack.c.bf16 %v3801, %v3799
    %v3822 = vpack.c.bf16 %v3802, %v3800
    %v3823 = vpack.c.bf16 %v3805, %v3803
    %v3824 = vpack.c.bf16 %v3806, %v3804
    %v3825 = vpack.c.bf16 %v3809, %v3807
    %v3826 = vpack.c.bf16 %v3810, %v3808
    %v3827 = vld [vmem:[%s7] sm:$0xf]
    %v3828 = vld [vmem:[%s7 + $0x4] sm:$0xf]
    %v3829 = vld [vmem:[%s7 + $0x8] sm:$0xf]
    %v3830 = vld [vmem:[%s7 + $0xc] sm:$0xf]
    %v3831 = vld [vmem:[%s7 + $0x10] sm:$0xf]
    %v3832 = vld [vmem:[%s7 + $0x14] sm:$0xf]
    %v3833 = vld [vmem:[%s7 + $0x18] sm:$0xf]
    %v3834 = vld [vmem:[%s7 + $0x1c] sm:$0xf]
    %v3835 = vld [vmem:[%s7 + $0x20] sm:$0xf]
    %v3836 = vld [vmem:[%s7 + $0x24] sm:$0xf]
    %v3837 = vld [vmem:[%s7 + $0x28] sm:$0xf]
    %v3838 = vld [vmem:[%s7 + $0x2c] sm:$0xf]
    %v3839 = vld [vmem:[%s7 + $0x30] sm:$0xf]
    %v3840 = vld [vmem:[%s7 + $0x34] sm:$0xf]
    %v3841 = vld [vmem:[%s7 + $0x38] sm:$0xf]
    %v3842 = vld [vmem:[%s7 + $0x3c] sm:$0xf]
    %v3843 = vld [vmem:[%s7 + $0x40] sm:$0xf]
    %v3844 = vld [vmem:[%s7 + $0x44] sm:$0xf]
    %v3845 = vld [vmem:[%s7 + $0x48] sm:$0xf]
    %v3846 = vld [vmem:[%s7 + $0x4c] sm:$0xf]
    %v3847 = vld [vmem:[%s7 + $0x50] sm:$0xf]
    %v3848 = vld [vmem:[%s7 + $0x54] sm:$0xf]
    %v3849 = vld [vmem:[%s7 + $0x58] sm:$0xf]
    %v3850 = vld [vmem:[%s7 + $0x5c] sm:$0xf]
    %v3851 = vld [vmem:[%s7 + $0x60] sm:$0xf]
    %v3852 = vld [vmem:[%s7 + $0x64] sm:$0xf]
    %v3853 = vld [vmem:[%s7 + $0x68] sm:$0xf]
    %v3854 = vld [vmem:[%s7 + $0x6c] sm:$0xf]
    %v3855 = vld [vmem:[%s7 + $0x70] sm:$0xf]
    %v3856 = vld [vmem:[%s7 + $0x74] sm:$0xf]
    %v3857 = vld [vmem:[%s7 + $0x78] sm:$0xf]
    %v3858 = vld [vmem:[%s7 + $0x7c] sm:$0xf]
    %v3859 = vld [vmem:[%s10] sm:$0x1]
    %v3861 = vlaneseq
    %v3862 = vshrl.u32 %v3861, 7
    %v3863 = vsub.s32 0, %v3862
    %v3864 = vrot.slane %v3859, %v3863
    %v3898 = vunpack.c.l.b16 %v3827
    %v3899 = vunpack.c.l.b16 %v3828
    %v3900 = vunpack.c.l.b16 %v3829
    %v3901 = vunpack.c.l.b16 %v3830
    %v3902 = vunpack.c.l.b16 %v3831
    %v3903 = vunpack.c.l.b16 %v3832
    %v3904 = vunpack.c.l.b16 %v3833
    %v3905 = vunpack.c.l.b16 %v3834
    %v3906 = vunpack.c.l.b16 %v3835
    %v3907 = vunpack.c.l.b16 %v3836
    %v3908 = vunpack.c.l.b16 %v3837
    %v3909 = vunpack.c.l.b16 %v3838
    %v3910 = vunpack.c.l.b16 %v3839
    %v3911 = vunpack.c.l.b16 %v3840
    %v3912 = vunpack.c.l.b16 %v3841
    %v3913 = vunpack.c.l.b16 %v3842
    %v3914 = vunpack.c.l.b16 %v3843
    %v3915 = vunpack.c.l.b16 %v3844
    %v3916 = vunpack.c.l.b16 %v3845
    %v3917 = vunpack.c.l.b16 %v3846
    %v3918 = vunpack.c.l.b16 %v3847
    %v3919 = vunpack.c.l.b16 %v3848
    %v3920 = vunpack.c.l.b16 %v3849
    %v3921 = vunpack.c.l.b16 %v3850
    %v3922 = vunpack.c.l.b16 %v3851
    %v3923 = vunpack.c.l.b16 %v3852
    %v3924 = vunpack.c.l.b16 %v3853
    %v3925 = vunpack.c.l.b16 %v3854
    %v3926 = vunpack.c.l.b16 %v3855
    %v3927 = vunpack.c.l.b16 %v3856
    %v3928 = vunpack.c.l.b16 %v3857
    %v3929 = vunpack.c.l.b16 %v3858
    %v3930 = vpack.c.b16 %v3899, %v3898
    %v3931 = vpack.c.b16 %v3901, %v3900
    %v3932 = vpack.c.b16 %v3903, %v3902
    %v3933 = vpack.c.b16 %v3905, %v3904
    %v3934 = vpack.c.b16 %v3907, %v3906
    %v3935 = vpack.c.b16 %v3909, %v3908
    %v3936 = vpack.c.b16 %v3911, %v3910
    %v3937 = vpack.c.b16 %v3913, %v3912
    %v3938 = vpack.c.b16 %v3915, %v3914
    %v3939 = vpack.c.b16 %v3917, %v3916
    %v3940 = vpack.c.b16 %v3919, %v3918
    %v3941 = vpack.c.b16 %v3921, %v3920
    %v3942 = vpack.c.b16 %v3923, %v3922
    %v3943 = vpack.c.b16 %v3925, %v3924
    %v3944 = vpack.c.b16 %v3927, %v3926
    %v3945 = vpack.c.b16 %v3929, %v3928
    %3962 = vmatprep.subr.bf16.mxu0 0
    %3963 = vmatpush1.bf16.msra.mxu0 %v3930
    %3964 = vmatprep.subr.bf16.mxu0 0
    %3965 = vmatpush1.bf16.msra.mxu0 %v3931
    %3966 = vmatprep.subr.bf16.mxu0 0
    %3967 = vmatpush1.bf16.msra.mxu0 %v3932
    %3968 = vmatprep.subr.bf16.mxu0 0
    %3969 = vmatpush1.bf16.msra.mxu0 %v3933
    %3970 = vmatprep.subr.bf16.mxu0 0
    %3971 = vmatpush1.bf16.msra.mxu0 %v3934
    %3972 = vmatprep.subr.bf16.mxu0 0
    %3973 = vmatpush1.bf16.msra.mxu0 %v3935
    %3974 = vmatprep.subr.bf16.mxu0 0
    %3975 = vmatpush1.bf16.msra.mxu0 %v3936
    %3976 = vmatprep.subr.bf16.mxu0 0
    %3977 = vmatpush1.bf16.msra.mxu0 %v3937
    %3978 = vmatprep.subr.bf16.mxu0 0
    %3979 = vmatpush1.bf16.msra.mxu0 %v3938
    %3980 = vmatprep.subr.bf16.mxu0 0
    %3981 = vmatpush1.bf16.msra.mxu0 %v3939
    %3982 = vmatprep.subr.bf16.mxu0 0
    %3983 = vmatpush1.bf16.msra.mxu0 %v3940
    %3984 = vmatprep.subr.bf16.mxu0 0
    %3985 = vmatpush1.bf16.msra.mxu0 %v3941
    %3986 = vmatprep.subr.bf16.mxu0 0
    %3987 = vmatpush1.bf16.msra.mxu0 %v3942
    %3988 = vmatprep.subr.bf16.mxu0 0
    %3989 = vmatpush1.bf16.msra.mxu0 %v3943
    %3990 = vmatprep.subr.bf16.mxu0 0
    %3991 = vmatpush1.bf16.msra.mxu0 %v3944
    %3992 = vmatprep.subr.bf16.mxu0 0
    %3993 = vmatpush1.bf16.msra.mxu0 %v3945
    %3994 = vmatprep.mubr.bf16.mxu0 %v3812
    %3995 = vmatmul.mubr.bf16.gmra.mrb[0].mxu0 %v3811
    %v3996 = vpop.f32.mrb[0].mxu0
    %v3997 = vadd.f32 %v3864, %v3996
    %v3998 = vpop.f32.mrb[0].mxu0
    %v3999 = vpop.f32.mrb[0].mxu0
    %v4000 = vadd.f32 %v3864, %v3999
    %v4001 = vpop.f32.mrb[0].mxu0
    %4002 = vmatprep.mubr.bf16.mxu0 %v3814
    %4003 = vmatmul.mubr.bf16.gmra.mrb[0].mxu0 %v3813
    %v4004 = vpop.f32.mrb[0].mxu0
    %v4005 = vadd.f32 %v3864, %v4004
    %v4006 = vpop.f32.mrb[0].mxu0
    %v4007 = vpop.f32.mrb[0].mxu0
    %v4008 = vadd.f32 %v3864, %v4007
    %v4009 = vpop.f32.mrb[0].mxu0
    %4010 = vmatprep.mubr.bf16.mxu0 %v3816
    %4011 = vmatmul.mubr.bf16.gmra.mrb[0].mxu0 %v3815
    %v4012 = vpop.f32.mrb[0].mxu0
    %v4013 = vadd.f32 %v3864, %v4012
    %v4014 = vpop.f32.mrb[0].mxu0
    %v4015 = vpop.f32.mrb[0].mxu0
    %v4016 = vadd.f32 %v3864, %v4015
    %v4017 = vpop.f32.mrb[0].mxu0
    %4018 = vmatprep.mubr.bf16.mxu0 %v3818
    %4019 = vmatmul.mubr.bf16.gmra.mrb[0].mxu0 %v3817
    %v4020 = vpop.f32.mrb[0].mxu0
    %v4021 = vadd.f32 %v3864, %v4020
    %v4022 = vpop.f32.mrb[0].mxu0
    %v4023 = vpop.f32.mrb[0].mxu0
    %v4024 = vadd.f32 %v3864, %v4023
    %v4025 = vpop.f32.mrb[0].mxu0
    %4026 = vmatprep.mubr.bf16.mxu0 %v3820
    %4027 = vmatmul.mubr.bf16.gmra.mrb[0].mxu0 %v3819
    %v4028 = vpop.f32.mrb[0].mxu0
    %v4029 = vadd.f32 %v3864, %v4028
    %v4030 = vpop.f32.mrb[0].mxu0
    %v4031 = vpop.f32.mrb[0].mxu0
    %v4032 = vadd.f32 %v3864, %v4031
    %v4033 = vpop.f32.mrb[0].mxu0
    %4034 = vmatprep.mubr.bf16.mxu0 %v3822
    %4035 = vmatmul.mubr.bf16.gmra.mrb[0].mxu0 %v3821
    %v4036 = vpop.f32.mrb[0].mxu0
    %v4037 = vadd.f32 %v3864, %v4036
    %v4038 = vpop.f32.mrb[0].mxu0
    %v4039 = vpop.f32.mrb[0].mxu0
    %v4040 = vadd.f32 %v3864, %v4039
    %v4041 = vpop.f32.mrb[0].mxu0
    %4042 = vmatprep.mubr.bf16.mxu0 %v3824
    %4043 = vmatmul.mubr.bf16.gmra.mrb[0].mxu0 %v3823
    %v4044 = vpop.f32.mrb[0].mxu0
    %v4045 = vadd.f32 %v3864, %v4044
    %v4046 = vpop.f32.mrb[0].mxu0
    %v4047 = vpop.f32.mrb[0].mxu0
    %v4048 = vadd.f32 %v3864, %v4047
    %v4049 = vpop.f32.mrb[0].mxu0
    %4050 = vmatprep.mubr.bf16.mxu0 %v3826
    %4051 = vmatmul.mubr.bf16.gmra.mrb[0].mxu0 %v3825
    %v4052 = vpop.f32.mrb[0].mxu0
    %v4053 = vadd.f32 %v3864, %v4052
    %v4054 = vpop.f32.mrb[0].mxu0
    %v4055 = vpop.f32.mrb[0].mxu0
    %v4056 = vadd.f32 %v3864, %v4055
    %v4057 = vpop.f32.mrb[0].mxu0
    %4058 = vdwg.mxu0
    %4059 = vst [vmem:[%s13] sm:$0xff] %v3997
    %4060 = vst [vmem:[%s13 + $0x8] sm:$0xff] %v4000
    %4061 = vst [vmem:[%s13 + $0x10] sm:$0xff] %v4005
    %4062 = vst [vmem:[%s13 + $0x18] sm:$0xff] %v4008
    %4063 = vst [vmem:[%s13 + $0x20] sm:$0xff] %v4013
    %4064 = vst [vmem:[%s13 + $0x28] sm:$0xff] %v4016
    %4065 = vst [vmem:[%s13 + $0x30] sm:$0xff] %v4021
    %4066 = vst [vmem:[%s13 + $0x38] sm:$0xff] %v4024
    %4067 = vst [vmem:[%s13 + $0x40] sm:$0xff] %v4029
    %4068 = vst [vmem:[%s13 + $0x48] sm:$0xff] %v4032
    %4069 = vst [vmem:[%s13 + $0x50] sm:$0xff] %v4037
    %4070 = vst [vmem:[%s13 + $0x58] sm:$0xff] %v4040
    %4071 = vst [vmem:[%s13 + $0x60] sm:$0xff] %v4045
    %4072 = vst [vmem:[%s13 + $0x68] sm:$0xff] %v4048
    %4073 = vst [vmem:[%s13 + $0x70] sm:$0xff] %v4053
    %4074 = vst [vmem:[%s13 + $0x78] sm:$0xff] %v4056
    // Predicated region
    $region54: #{attention_head_forward.1} parent=1 // pred_check
      _
    $region55: #{attention_head_forward.1} parent=1 // pred_check_branch
      %4076 = sbr.rel (0) target = $region57
    $region56: #{attention_head_forward.1} parent=1 // pred_region
      _
    $region57: #{attention_head_forward.1} parent=1 // pred_fallthru
      _
    // Predicated region
    $region58: #{attention_head_forward.1} parent=1 // pred_check
      _
    $region59: #{attention_head_forward.1} parent=1 // pred_check_branch
      %4078 = sbr.rel (0) target = $region61
    $region60: #{attention_head_forward.1} parent=1 // pred_region
      _
    $region61: #{attention_head_forward.1} parent=1 // pred_fallthru
      _
    // Predicated region
    $region62: #{attention_head_forward.1} parent=1 // pred_check
      _
    $region63: #{attention_head_forward.1} parent=1 // pred_check_branch
      %4080 = sbr.rel (0) target = $region65
    $region64: #{attention_head_forward.1} parent=1 // pred_region
      _
    $region65: #{attention_head_forward.1} parent=1 // pred_fallthru
      _
    // Predicated region
    $region66: #{attention_head_forward.1} parent=1 // pred_check
      _
    $region67: #{attention_head_forward.1} parent=1 // pred_check_branch
      %4082 = sbr.rel (0) target = $region69
    $region68: #{attention_head_forward.1} parent=1 // pred_region
      _
    $region69: #{attention_head_forward.1} parent=1 // pred_fallthru
      _
    // Predicated region
    $region70: #{attention_head_forward.1} parent=1 // pred_check
      _
    $region71: #{attention_head_forward.1} parent=1 // pred_check_branch
      %4084 = sbr.rel (0) target = $region73
    $region72: #{attention_head_forward.1} parent=1 // pred_region
      _
    $region73: #{attention_head_forward.1} parent=1 // pred_fallthru
      _
    // Predicated region
    $region74: #{attention_head_forward.1} parent=1 // pred_check
      _
    $region75: #{attention_head_forward.1} parent=1 // pred_check_branch
      %4086 = sbr.rel (0) target = $region77
    $region76: #{attention_head_forward.1} parent=1 // pred_region
      _
    $region77: #{attention_head_forward.1} parent=1 // pred_fallthru
      _
    %4087 = vsyncpa [#allocation5], 1
    %4088 = vsyncpa [#allocation7], 1

</llo_original>
